<compile_context>
chip_gen: v5e
topology: v5e:2x2
jax: 0.10.0
libtpu: 0.0.40
codegen_flags: <defaults>
</compile_context>

<pallas_src>
import numpy as np
import jax
import jax.numpy as jnp
from jax.experimental import pallas as pl
from jax.experimental.pallas import tpu as pltpu

# Deterministic stand-ins for the torch.rand(1) LIF hyper-parameters.
BETA1, TH1, GF1 = 0.6, 0.35, 1.2     # snn.Leaky #1 (beta, threshold, graded_spikes_factor)
TH2, GF2 = 0.40, 0.9                 # snn.Leaky #2 (beta2 never affects the output: mem2 = 0)
BN_EPS = 1e-5


def _sigmoid(v):
    # exp + full-precision reciprocal both issue on the EUP slot (off the VALU);
    # approx=False per review (attention error would otherwise be multiplied in twice).
    return pl.reciprocal(1.0 + jnp.exp(-v), approx=False)


def make_kernel(B, H, W, CIN, C2, COUT):
    N_INV = 1.0 / (B * H * W)
    WC_IN, WC_MID, WC_OUT = W * CIN, W * C2, W * COUT

    def _banded_conv(pad_sc, band_ref, bias):
        # dw3x3 + pw1x1 (+ graded-spike factor) folded host-side into 3 banded bf16
        # (W*Cin, W*Cout) matrices (one per kh).  W zero-padding is folded into the band,
        # so only H needs an explicit pad buffer; spikes are exact {0,1} in bf16.
        acc = None
        for kh in range(3):
            slab = pad_sc[:, kh:kh + H, :].reshape(B * H, -1).astype(jnp.bfloat16)
            d = jnp.dot(slab, band_ref[kh], preferred_element_type=jnp.float32)
            acc = d if acc is None else acc + d
        return acc + bias

    def _bn2d_train(y, bn_w, rsum):
        # BatchNormTT2d[t] (train-mode batch stats, affine weight only, bias=None).
        # Cross-W lane-group reduction is a tiny MXU matmul against a 0/1 matrix; the
        # per-channel scale/shift are re-tiled onto the merged lane axis with one concat.
        s1 = jnp.sum(y, axis=0, keepdims=True)                 # (1, W*C)
        s2 = jnp.sum(y * y, axis=0, keepdims=True)             # (1, W*C)
        sc = jnp.dot(jnp.concatenate([s1, s2], axis=0), rsum,
                     preferred_element_type=jnp.float32) * N_INV          # (2, C)
        m, e2 = sc[0:1], sc[1:2]
        var = jnp.maximum(e2 - m * m, 0.0)
        scale = bn_w * jax.lax.rsqrt(var + BN_EPS)             # (1, C)
        ss = jnp.concatenate([scale, m * scale], axis=0)       # (2, C)
        ss_m = jnp.concatenate([ss] * W, axis=-1)              # (2, W*C) lane-tiled
        return y * ss_m[0:1] - ss_m[1:2]

    def kernel(x_ref, w1b_ref, b1_ref, bn1w_ref, rsmid_ref,
               clw1_ref, clb1_ref, clbnw_ref, clbnb_ref, clw2_ref, clb2_ref,
               spband_ref, spb_ref,
               w2b_ref, b2_ref, bn2w_ref, rsout_ref,
               out_ref,
               mem_sc, pad1_sc, padsp_sc, pad2_sc):
        t = pl.program_id(0)

        # Zero membrane + pad-buffer halos once; interiors are fully rewritten every step.
        @pl.when(t == 0)
        def _init():
            mem_sc[...] = jnp.zeros(mem_sc.shape, jnp.float32)
            pad1_sc[...] = jnp.zeros(pad1_sc.shape, jnp.float32)
            padsp_sc[...] = jnp.zeros(padsp_sc.shape, jnp.float32)
            pad2_sc[...] = jnp.zeros(pad2_sc.shape, jnp.float32)

        x = x_ref[0]                                           # (B, H, W*CIN), lane-dense

        # ---------------- LIF #1 (membrane carried across the sequential T grid) ----------
        mem_prev = mem_sc[...]
        reset = (mem_prev > TH1).astype(jnp.float32)           # heaviside(mem_prev - TH)
        mem_new = BETA1 * mem_prev + x - reset * TH1           # subtract-reset mechanism
        spk = (mem_new > TH1).astype(jnp.float32)              # binary; GF1 folded into band
        mem_sc[...] = mem_new

        # ---------- conv1 (3 banded bf16 MXU matmuls) + SiLU + BNTT2d[t] ----------
        pad1_sc[:, 1:1 + H, :] = spk
        y = _banded_conv(pad1_sc, w1b_ref, b1_ref[...])        # (B*H, W*C2) f32
        y = y * _sigmoid(y)                                    # SiLU
        y = _bn2d_train(y, bn1w_ref[0], rsmid_ref[...])
        y3 = y.reshape(B, H, WC_MID)

        # ---------------------------- channel attention ----------------------------
        ca_sum = jnp.sum(y3, axis=1)                           # (B, W*C2)
        ca_mx = jnp.max(y3, axis=1)                            # (B, W*C2)
        ca_mean = jnp.dot(ca_sum, rsmid_ref[...],
                          preferred_element_type=jnp.float32) * (1.0 / (H * W))   # (B, C2)
        ca_max = ca_mx[:, 0:C2]
        for w in range(1, W):                                  # tiny cross-lane-group max
            ca_max = jnp.maximum(ca_max, ca_mx[:, w * C2:(w + 1) * C2])
        stacked = jnp.concatenate([ca_mean, ca_max], axis=0)   # (2B, C2): both pools batched
        hmlp = jnp.dot(stacked, clw1_ref[...],
                       preferred_element_type=jnp.float32) + clb1_ref[...]
        hmlp = jnp.clip(hmlp, 0.0, 6.0)                        # ReLU6

        def _bn1d(v):   # per-call batch stats (matches two independent Clinear() calls)
            m = jnp.mean(v, axis=0, keepdims=True)
            va = jnp.maximum(jnp.mean(v * v, axis=0, keepdims=True) - m * m, 0.0)
            return (v - m) * jax.lax.rsqrt(va + BN_EPS) * clbnw_ref[...] + clbnb_ref[...]

        hmlp = jnp.concatenate([_bn1d(hmlp[:B]), _bn1d(hmlp[B:])], axis=0)
        o2 = jnp.dot(hmlp, clw2_ref[...],
                     preferred_element_type=jnp.float32) + clb2_ref[...]
        att = _sigmoid(o2[:B] + o2[B:])                        # (B, C2)
        att_m = jnp.concatenate([att] * W, axis=-1)            # (B, W*C2) lane-tiled
        xo = y3 * att_m[:, None, :]

        # -------- spatial attention: 7x7 conv as 7 banded MXU matmuls --------
        # Channel-mean pooling (avg path) and the broadcast of the attention map over the C2
        # channels are folded into the band weight, so xo feeds the matmul directly; the only
        # remaining cross-lane-group work is the per-column channel max.
        mx_cols = [jnp.max(xo[:, :, w * C2:(w + 1) * C2], axis=-1, keepdims=True)
                   for w in range(W)]
        maxmap = jnp.concatenate(mx_cols, axis=-1)             # (B, H, W)
        padsp_sc[:, 3:3 + H, 0:WC_MID] = xo
        padsp_sc[:, 3:3 + H, WC_MID:WC_MID + W] = maxmap
        satt = None
        for kh in range(7):
            slab = padsp_sc[:, kh:kh + H, :].reshape(B * H, WC_MID + W)
            d = jnp.dot(slab, spband_ref[kh], preferred_element_type=jnp.float32)
            satt = d if satt is None else satt + d
        sig = _sigmoid(satt + spb_ref[0, 0])                   # (B*H, W*C2), channel-tiled
        xo = xo * sig.reshape(B, H, WC_MID)

        # ------- LIF #2: mem2 is re-initialised (0) every step in the reference -------
        spk2 = (xo > TH2).astype(jnp.float32)                  # binary; GF2 folded into band

        # ---------- conv2 (banded MXU) + SiLU + BNTT2d[t] + residual (x0 == x) ----------
        pad2_sc[:, 1:1 + H, :] = spk2
        y2 = _banded_conv(pad2_sc, w2b_ref, b2_ref[...])       # (B*H, W*COUT)
        y2 = y2 * _sigmoid(y2)
        y2 = _bn2d_train(y2, bn2w_ref[0], rsout_ref[...])
        out_ref[0] = y2.reshape(B, H, WC_OUT) + x              # residual: in_ch == out_ch

    return kernel


# ----------------------------- host-side weight folding -----------------------------

def _fold_conv_band(dw_w, dw_b, pw_w, pw_b, W, gf):
    """Fold depthwise 3x3 + pointwise 1x1 (+ graded-spike factor) into 3 banded
    (W*Cin, W*Cout) matrices over the merged (W, C) lane axis (one per kh).
    W zero-padding is encoded as zero bands; the bias is lane-tiled to (1, W*Cout)."""
    dw_w = np.asarray(dw_w, np.float32).reshape(3, 3, -1)          # (kh, kw, Cin)
    pw_w = np.asarray(pw_w, np.float32)                            # (Cin, Cout)
    cin, cout = pw_w.shape
    fold = dw_w[:, :, :, None] * pw_w[None, None] * np.float32(gf)  # (3,3,Cin,Cout)
    band = np.zeros((3, W * cin, W * cout), np.float32)
    for kh in range(3):
        for wout in range(W):
            for kw in range(3):
                win = wout + kw - 1
                if 0 <= win < W:
                    band[kh, win * cin:(win + 1) * cin,
                         wout * cout:(wout + 1) * cout] = fold[kh, kw]
    bias = np.asarray(dw_b, np.float32) @ pw_w + np.asarray(pw_b, np.float32)   # (1, Cout)
    return jnp.asarray(band, jnp.bfloat16), jnp.asarray(np.tile(bias, (1, W)), jnp.float32)


def _fold_spatial_band(sp_w, W, C2):
    """7x7 Conv2d(2->1) over (avg, max) maps as 7 banded (W*C2 + W, W*C2) f32 matrices.
    Rows 0..W*C2-1 act on xo directly with weight sp_w[0]/C2 (channel-mean folded in);
    rows W*C2.. act on the per-column channel-max map; the broadcast of the attention
    value over the C2 output channels is folded in as repeated columns."""
    sp_w = np.asarray(sp_w, np.float32)                            # (2, 7, 7)
    band = np.zeros((7, W * C2 + W, W * C2), np.float32)
    for kh in range(7):
        for wout in range(W):
            for kw in range(7):
                win = wout + kw - 3
                if 0 <= win < W:
                    band[kh, win * C2:(win + 1) * C2,
                         wout * C2:(wout + 1) * C2] = sp_w[0, kh, kw] / C2
                    band[kh, W * C2 + win,
                         wout * C2:(wout + 1) * C2] = sp_w[1, kh, kw]
    return jnp.asarray(band, jnp.float32)


def tcfa_forward(x, params):
    """x: (B, T, C, H, W) float32 (PyTorch layout).  Returns the same layout/shape."""
    B, T, CIN, H, W = x.shape
    C2 = params["pw1_w"].shape[1]
    C4 = params["cl_w1"].shape[1]
    COUT = params["pw2_w"].shape[1]
    assert CIN == COUT, "test config uses in_channels == out_channels (residual is None)"
    WC_IN, WC_MID, WC_OUT = W * CIN, W * C2, W * COUT

    # channels-last + merged (W, C) lane axis: (T, B, H, W*C) -- lane-dense everywhere.
    x_t = jnp.transpose(x, (1, 0, 3, 4, 2)).reshape(T, B, H, WC_IN).astype(jnp.float32)

    w1band, b1m = _fold_conv_band(params["dw1_w"], params["dw1_b"],
                                  params["pw1_w"], params["pw1_b"], W, GF1)
    w2band, b2m = _fold_conv_band(params["dw2_w"], params["dw2_b"],
                                  params["pw2_w"], params["pw2_b"], W, GF2)
    spband = _fold_spatial_band(params["sp_w"], W, C2)
    # 0/1 matrices that reduce the merged (W, C) lane axis back to per-channel values
    # (BN statistics, channel-attention mean) via a tiny MXU matmul.
    rsum_mid = jnp.asarray(np.tile(np.eye(C2, dtype=np.float32), (W, 1)))    # (W*C2, C2)
    rsum_out = jnp.asarray(np.tile(np.eye(COUT, dtype=np.float32), (W, 1)))  # (W*COUT, COUT)

    def full(shape):
        return pl.BlockSpec(shape, lambda t, _n=len(shape): (0,) * _n)

    smem = pl.BlockSpec(memory_space=pltpu.MemorySpace.SMEM)

    grid_spec = pltpu.PrefetchScalarGridSpec(
        num_scalar_prefetch=0,
        grid=(T,),
        in_specs=[
            pl.BlockSpec((1, B, H, WC_IN), lambda t: (t, 0, 0, 0)),   # x
            full((3, WC_IN, WC_MID)), full((1, WC_MID)),              # conv1 band / bias
            pl.BlockSpec((1, 1, C2), lambda t: (t, 0, 0)),            # BNTT[t] weight
            full((WC_MID, C2)),                                       # lane-group sum matrix
            full((C2, C4)), full((1, C4)), full((1, C4)), full((1, C4)),
            full((C4, C2)), full((1, C2)),                            # Clinear MLP
            full((7, WC_MID + W, WC_MID)), smem,                      # spatial band / bias
            full((3, WC_MID, WC_OUT)), full((1, WC_OUT)),             # conv2 band / bias
            pl.BlockSpec((1, 1, COUT), lambda t: (t, 0, 0)),          # BNTT2[t] weight
            full((WC_OUT, COUT)),                                     # lane-group sum matrix
        ],
        out_specs=pl.BlockSpec((1, B, H, WC_OUT), lambda t: (t, 0, 0, 0)),
        scratch_shapes=[
            pltpu.VMEM((B, H, WC_IN), jnp.float32),            # LIF membrane (carried over t)
            pltpu.VMEM((B, H + 2, WC_IN), jnp.float32),        # H-pad buffer, conv1 spikes
            pltpu.VMEM((B, H + 6, WC_MID + W), jnp.float32),   # H-pad buffer, spatial maps
            pltpu.VMEM((B, H + 2, WC_MID), jnp.float32),       # H-pad buffer, conv2 spikes
        ],
    )

    conv_flops = 2 * B * H * 3 * (WC_IN * WC_MID + WC_MID * WC_OUT)
    sp_flops = 2 * B * H * 7 * (WC_MID + W) * WC_MID
    cost = pl.CostEstimate(
        flops=int(T * (conv_flops + sp_flops)),
        transcendentals=int(T * B * H * (3 * WC_MID + WC_OUT)),
        bytes_accessed=int(4 * 2 * T * B * H * WC_IN
                           + 2 * (w1band.size + w2band.size) + 4 * spband.size),
    )

    out = pl.pallas_call(
        make_kernel(B, H, W, CIN, C2, COUT),
        grid_spec=grid_spec,
        out_shape=jax.ShapeDtypeStruct((T, B, H, WC_OUT), jnp.float32),
        compiler_params=pltpu.CompilerParams(dimension_semantics=("arbitrary",)),
        cost_estimate=cost,
    )(x_t, w1band, b1m, params["bn1_w"], rsum_mid,
      params["cl_w1"], params["cl_b1"], params["cl_bnw"], params["cl_bnb"],
      params["cl_w2"], params["cl_b2"],
      spband, params["sp_b"],
      w2band, b2m, params["bn2_w"], rsum_out)

    out = out.reshape(T, B, H, W, COUT)
    return jnp.transpose(out, (1, 0, 4, 2, 3))                 # back to (B, T, C, H, W)


def init_params(key, CIN, COUT, T):
    """Deterministic synthetic parameters (shapes follow the module __init__)."""
    C2, C4 = COUT // 2, COUT // 4
    ks = jax.random.split(key, 16)
    r = lambda k, shape, s=0.2: jax.random.normal(k, shape, jnp.float32) * s
    return dict(
        dw1_w=r(ks[0], (9, CIN)),           # depthwise Conv2d(CIN,CIN,3,groups=CIN).weight
        dw1_b=r(ks[1], (1, CIN), 0.05),
        pw1_w=r(ks[2], (CIN, C2)),          # pointwise Conv2d(CIN,C2,1).weight (transposed)
        pw1_b=r(ks[3], (1, C2), 0.05),
        bn1_w=1.0 + r(ks[4], (T, 1, C2), 0.1),      # snn.BatchNormTT2d(C2, T) weights (bias=None)
        cl_w1=r(ks[5], (C2, C4)),           # Clinear: Linear(C2,C4)
        cl_b1=r(ks[6], (1, C4), 0.05),
        cl_bnw=1.0 + r(ks[7], (1, C4), 0.1),        # Clinear: BatchNorm1d(C4) weight / bias
        cl_bnb=r(ks[8], (1, C4), 0.05),
        cl_w2=r(ks[9], (C4, C2)),           # Clinear: Linear(C4,C2)
        cl_b2=r(ks[10], (1, C2), 0.05),
        sp_w=r(ks[11], (2, 7, 7)),          # spatial Conv2d(2,1,7,padding=3).weight
        sp_b=r(ks[12], (1, 1), 0.05),
        dw2_w=r(ks[13], (9, C2)),           # conv2 depthwise
        dw2_b=r(ks[14], (1, C2), 0.05),
        pw2_w=r(ks[15], (C2, COUT)),        # conv2 pointwise
        pw2_b=jnp.zeros((1, COUT), jnp.float32),
        bn2_w=jnp.ones((T, 1, COUT), jnp.float32),  # snn.BatchNormTT2d(COUT, T) weights
    )


if __name__ == "__main__":
    B, T, CIN, H, W = 2, 4, 16, 16, 16
    COUT = CIN    # in_channels == out_channels  ->  residual branch is None (x0 = x)

    key = jax.random.PRNGKey(0)
    kx, kp = jax.random.split(key)
    x = jax.random.normal(kx, (B, T, CIN, H, W), jnp.float32)
    params = init_params(kp, CIN, COUT, T)

    out = tcfa_forward(x, params)
    out = jax.block_until_ready(out)
    assert out.shape == (B, T, COUT, H, W), out.shape
    assert bool(jnp.isfinite(out).all())
    print("KERNEL_OK")
</pallas_src>

<mosaic_0001>
module attributes {stable_mosaic.version = 11 : i64} {
  func.func @kernel(%arg0: i32, %arg1: memref<1x2x16x256xf32, #tpu.memory_space<vmem>>, %arg2: memref<3x256x128xbf16, #tpu.memory_space<vmem>>, %arg3: memref<1x128xf32, #tpu.memory_space<vmem>>, %arg4: memref<1x1x8xf32, #tpu.memory_space<vmem>>, %arg5: memref<128x8xf32, #tpu.memory_space<vmem>>, %arg6: memref<8x4xf32, #tpu.memory_space<vmem>>, %arg7: memref<1x4xf32, #tpu.memory_space<vmem>>, %arg8: memref<1x4xf32, #tpu.memory_space<vmem>>, %arg9: memref<1x4xf32, #tpu.memory_space<vmem>>, %arg10: memref<4x8xf32, #tpu.memory_space<vmem>>, %arg11: memref<1x8xf32, #tpu.memory_space<vmem>>, %arg12: memref<7x144x128xf32, #tpu.memory_space<vmem>>, %arg13: memref<1x1xf32, #tpu.memory_space<smem>>, %arg14: memref<3x128x256xbf16, #tpu.memory_space<vmem>>, %arg15: memref<1x256xf32, #tpu.memory_space<vmem>>, %arg16: memref<1x1x16xf32, #tpu.memory_space<vmem>>, %arg17: memref<256x16xf32, #tpu.memory_space<vmem>>, %arg18: memref<1x2x16x256xf32, #tpu.memory_space<vmem>>, %arg19: memref<2x16x256xf32, #tpu.memory_space<vmem>>, %arg20: memref<2x18x256xf32, #tpu.memory_space<vmem>>, %arg21: memref<2x22x144xf32, #tpu.memory_space<vmem>>, %arg22: memref<2x18x128xf32, #tpu.memory_space<vmem>>) attributes {dimension_semantics = [#tpu.dimension_semantics<arbitrary>], iteration_bounds = array<i64: 4>, scalar_prefetch = 0 : i64, scratch_operands = 4 : i64, tpu.core_type = #tpu.core_type<tc>, window_params = [{transform_indices = @transform_0, window_bounds = array<i64: 1, 2, 16, 256>}, {pipeline_mode = #tpu.pipeline_mode<synchronous>, transform_indices = @transform_1, window_bounds = array<i64: 3, 256, 128>}, {pipeline_mode = #tpu.pipeline_mode<synchronous>, transform_indices = @transform_2, window_bounds = array<i64: 1, 128>}, {transform_indices = @transform_3, window_bounds = array<i64: 1, 1, 8>}, {pipeline_mode = #tpu.pipeline_mode<synchronous>, transform_indices = @transform_4, window_bounds = array<i64: 128, 8>}, {pipeline_mode = #tpu.pipeline_mode<synchronous>, transform_indices = @transform_5, window_bounds = array<i64: 8, 4>}, {pipeline_mode = #tpu.pipeline_mode<synchronous>, transform_indices = @transform_6, window_bounds = array<i64: 1, 4>}, {pipeline_mode = #tpu.pipeline_mode<synchronous>, transform_indices = @transform_7, window_bounds = array<i64: 1, 4>}, {pipeline_mode = #tpu.pipeline_mode<synchronous>, transform_indices = @transform_8, window_bounds = array<i64: 1, 4>}, {pipeline_mode = #tpu.pipeline_mode<synchronous>, transform_indices = @transform_9, window_bounds = array<i64: 4, 8>}, {pipeline_mode = #tpu.pipeline_mode<synchronous>, transform_indices = @transform_10, window_bounds = array<i64: 1, 8>}, {pipeline_mode = #tpu.pipeline_mode<synchronous>, transform_indices = @transform_11, window_bounds = array<i64: 7, 144, 128>}, {transform_indices = @transform_12, window_bounds = array<i64: 1, 1>}, {pipeline_mode = #tpu.pipeline_mode<synchronous>, transform_indices = @transform_13, window_bounds = array<i64: 3, 128, 256>}, {pipeline_mode = #tpu.pipeline_mode<synchronous>, transform_indices = @transform_14, window_bounds = array<i64: 1, 256>}, {transform_indices = @transform_15, window_bounds = array<i64: 1, 1, 16>}, {pipeline_mode = #tpu.pipeline_mode<synchronous>, transform_indices = @transform_16, window_bounds = array<i64: 256, 16>}, {transform_indices = @transform_17, window_bounds = array<i64: 1, 2, 16, 256>}]} {
    %c0_i32 = arith.constant 0 : i32
    %0 = arith.cmpi eq, %arg0, %c0_i32 : i32
    %1 = arith.extui %0 : i1 to i32
    %c0_i32_0 = arith.constant 0 : i32
    %2 = arith.cmpi ne, %1, %c0_i32_0 : i32
    scf.if %2 {
      %cst_204 = arith.constant 0.000000e+00 : f32
      %378 = vector.broadcast %cst_204 : f32 to vector<2x16x256xf32>
      %c0_205 = arith.constant 0 : index
      %c0_206 = arith.constant 0 : index
      %c0_207 = arith.constant 0 : index
      %379 = vector.load %arg19[%c0_205, %c0_206, %c0_207] : memref<2x16x256xf32, #tpu.memory_space<vmem>>, vector<2x16x256xf32>
      tpu.vector_store %arg19[%c0_205, %c0_206, %c0_207], %378 {strides = array<i32>} : memref<2x16x256xf32, #tpu.memory_space<vmem>>, vector<2x16x256xf32>,
      %cst_208 = arith.constant 0.000000e+00 : f32
      %380 = vector.broadcast %cst_208 : f32 to vector<2x18x256xf32>
      %c0_209 = arith.constant 0 : index
      %c0_210 = arith.constant 0 : index
      %c0_211 = arith.constant 0 : index
      %381 = vector.load %arg20[%c0_209, %c0_210, %c0_211] : memref<2x18x256xf32, #tpu.memory_space<vmem>>, vector<2x18x256xf32>
      tpu.vector_store %arg20[%c0_209, %c0_210, %c0_211], %380 {strides = array<i32>} : memref<2x18x256xf32, #tpu.memory_space<vmem>>, vector<2x18x256xf32>,
      %cst_212 = arith.constant 0.000000e+00 : f32
      %382 = vector.broadcast %cst_212 : f32 to vector<2x22x144xf32>
      %c0_213 = arith.constant 0 : index
      %c0_214 = arith.constant 0 : index
      %c0_215 = arith.constant 0 : index
      %383 = vector.load %arg21[%c0_213, %c0_214, %c0_215] : memref<2x22x144xf32, #tpu.memory_space<vmem>>, vector<2x22x144xf32>
      tpu.vector_store %arg21[%c0_213, %c0_214, %c0_215], %382 {strides = array<i32>} : memref<2x22x144xf32, #tpu.memory_space<vmem>>, vector<2x22x144xf32>,
      %cst_216 = arith.constant 0.000000e+00 : f32
      %384 = vector.broadcast %cst_216 : f32 to vector<2x18x128xf32>
      %c0_217 = arith.constant 0 : index
      %c0_218 = arith.constant 0 : index
      %c0_219 = arith.constant 0 : index
      %385 = vector.load %arg22[%c0_217, %c0_218, %c0_219] : memref<2x18x128xf32, #tpu.memory_space<vmem>>, vector<2x18x128xf32>
      tpu.vector_store %arg22[%c0_217, %c0_218, %c0_219], %384 {strides = array<i32>} : memref<2x18x128xf32, #tpu.memory_space<vmem>>, vector<2x18x128xf32>,
    } else {
    }
    %c0 = arith.constant 0 : index
    %c0_1 = arith.constant 0 : index
    %c0_2 = arith.constant 0 : index
    %c0_3 = arith.constant 0 : index
    %3 = vector.load %arg1[%c0, %c0_1, %c0_2, %c0_3] : memref<1x2x16x256xf32, #tpu.memory_space<vmem>>, vector<1x2x16x256xf32>
    %4 = vector.shape_cast %3 : vector<1x2x16x256xf32> to vector<2x16x256xf32>
    %c0_4 = arith.constant 0 : index
    %c0_5 = arith.constant 0 : index
    %c0_6 = arith.constant 0 : index
    %5 = vector.load %arg19[%c0_4, %c0_5, %c0_6] : memref<2x16x256xf32, #tpu.memory_space<vmem>>, vector<2x16x256xf32>
    %cst = arith.constant 3.500000e-01 : f32
    %6 = vector.broadcast %cst : f32 to vector<2x16x256xf32>
    %7 = arith.cmpf ogt, %5, %6 : vector<2x16x256xf32>
    %8 = arith.extui %7 : vector<2x16x256xi1> to vector<2x16x256xi32>
    %9 = arith.sitofp %8 : vector<2x16x256xi32> to vector<2x16x256xf32>
    %cst_7 = arith.constant 6.000000e-01 : f32
    %10 = vector.broadcast %cst_7 : f32 to vector<2x16x256xf32>
    %11 = arith.mulf %10, %5 : vector<2x16x256xf32>
    %12 = arith.addf %11, %4 : vector<2x16x256xf32>
    %cst_8 = arith.constant 3.500000e-01 : f32
    %13 = vector.broadcast %cst_8 : f32 to vector<2x16x256xf32>
    %14 = arith.mulf %9, %13 : vector<2x16x256xf32>
    %15 = arith.subf %12, %14 : vector<2x16x256xf32>
    %cst_9 = arith.constant 3.500000e-01 : f32
    %16 = vector.broadcast %cst_9 : f32 to vector<2x16x256xf32>
    %17 = arith.cmpf ogt, %15, %16 : vector<2x16x256xf32>
    %18 = arith.extui %17 : vector<2x16x256xi1> to vector<2x16x256xi32>
    %19 = arith.sitofp %18 : vector<2x16x256xi32> to vector<2x16x256xf32>
    %c0_10 = arith.constant 0 : index
    %c0_11 = arith.constant 0 : index
    %c0_12 = arith.constant 0 : index
    %20 = vector.load %arg19[%c0_10, %c0_11, %c0_12] : memref<2x16x256xf32, #tpu.memory_space<vmem>>, vector<2x16x256xf32>
    tpu.vector_store %arg19[%c0_10, %c0_11, %c0_12], %15 {strides = array<i32>} : memref<2x16x256xf32, #tpu.memory_space<vmem>>, vector<2x16x256xf32>,
    %c0_13 = arith.constant 0 : index
    %c1 = arith.constant 1 : index
    %c0_14 = arith.constant 0 : index
    %21 = vector.load %arg20[%c0_13, %c1, %c0_14] : memref<2x18x256xf32, #tpu.memory_space<vmem>>, vector<2x16x256xf32>
    tpu.vector_store %arg20[%c0_13, %c1, %c0_14], %19 {strides = array<i32>} : memref<2x18x256xf32, #tpu.memory_space<vmem>>, vector<2x16x256xf32>,
    %c0_15 = arith.constant 0 : index
    %c0_16 = arith.constant 0 : index
    %22 = vector.load %arg3[%c0_15, %c0_16] : memref<1x128xf32, #tpu.memory_space<vmem>>, vector<1x128xf32>
    %c0_17 = arith.constant 0 : index
    %c0_18 = arith.constant 0 : index
    %c0_19 = arith.constant 0 : index
    %23 = vector.load %arg20[%c0_17, %c0_18, %c0_19] : memref<2x18x256xf32, #tpu.memory_space<vmem>>, vector<2x16x256xf32>
    %24 = vector.shape_cast %23 : vector<2x16x256xf32> to vector<32x256xf32>
    %25 = arith.truncf %24 : vector<32x256xf32> to vector<32x256xbf16>
    %c0_20 = arith.constant 0 : index
    %c0_21 = arith.constant 0 : index
    %c0_22 = arith.constant 0 : index
    %26 = vector.load %arg2[%c0_20, %c0_21, %c0_22] : memref<3x256x128xbf16, #tpu.memory_space<vmem>>, vector<1x256x128xbf16>
    %27 = vector.shape_cast %26 : vector<1x256x128xbf16> to vector<256x128xbf16>
    %cst_23 = arith.constant dense<0.000000e+00> : vector<32x128xf32>
    %28 = tpu.matmul %25, %27, %cst_23 {dimension_numbers = #tpu.dot_dimension_numbers<[1], [0], [0], [1], [0, 0, 1, 1], [], []>} : vector<32x256xbf16>, vector<256x128xbf16>, vector<32x128xf32> -> vector<32x128xf32>
    %c0_24 = arith.constant 0 : index
    %c1_25 = arith.constant 1 : index
    %c0_26 = arith.constant 0 : index
    %29 = vector.load %arg20[%c0_24, %c1_25, %c0_26] : memref<2x18x256xf32, #tpu.memory_space<vmem>>, vector<2x16x256xf32>
    %30 = vector.shape_cast %29 : vector<2x16x256xf32> to vector<32x256xf32>
    %31 = arith.truncf %30 : vector<32x256xf32> to vector<32x256xbf16>
    %c1_27 = arith.constant 1 : index
    %c0_28 = arith.constant 0 : index
    %c0_29 = arith.constant 0 : index
    %32 = vector.load %arg2[%c1_27, %c0_28, %c0_29] : memref<3x256x128xbf16, #tpu.memory_space<vmem>>, vector<1x256x128xbf16>
    %33 = vector.shape_cast %32 : vector<1x256x128xbf16> to vector<256x128xbf16>
    %cst_30 = arith.constant dense<0.000000e+00> : vector<32x128xf32>
    %34 = tpu.matmul %31, %33, %cst_30 {dimension_numbers = #tpu.dot_dimension_numbers<[1], [0], [0], [1], [0, 0, 1, 1], [], []>} : vector<32x256xbf16>, vector<256x128xbf16>, vector<32x128xf32> -> vector<32x128xf32>
    %35 = arith.addf %28, %34 : vector<32x128xf32>
    %c0_31 = arith.constant 0 : index
    %c2 = arith.constant 2 : index
    %c0_32 = arith.constant 0 : index
    %36 = vector.load %arg20[%c0_31, %c2, %c0_32] : memref<2x18x256xf32, #tpu.memory_space<vmem>>, vector<2x16x256xf32>
    %37 = vector.shape_cast %36 : vector<2x16x256xf32> to vector<32x256xf32>
    %38 = arith.truncf %37 : vector<32x256xf32> to vector<32x256xbf16>
    %c2_33 = arith.constant 2 : index
    %c0_34 = arith.constant 0 : index
    %c0_35 = arith.constant 0 : index
    %39 = vector.load %arg2[%c2_33, %c0_34, %c0_35] : memref<3x256x128xbf16, #tpu.memory_space<vmem>>, vector<1x256x128xbf16>
    %40 = vector.shape_cast %39 : vector<1x256x128xbf16> to vector<256x128xbf16>
    %cst_36 = arith.constant dense<0.000000e+00> : vector<32x128xf32>
    %41 = tpu.matmul %38, %40, %cst_36 {dimension_numbers = #tpu.dot_dimension_numbers<[1], [0], [0], [1], [0, 0, 1, 1], [], []>} : vector<32x256xbf16>, vector<256x128xbf16>, vector<32x128xf32> -> vector<32x128xf32>
    %42 = arith.addf %35, %41 : vector<32x128xf32>
    %43 = vector.broadcast %22 : vector<1x128xf32> to vector<32x128xf32>
    %44 = arith.addf %42, %43 : vector<32x128xf32>
    %cst_37 = arith.constant 0.000000e+00 : f32
    %45 = vector.broadcast %cst_37 : f32 to vector<32x128xf32>
    %46 = arith.subf %45, %44 : vector<32x128xf32>
    %47 = math.exp %46 : vector<32x128xf32>
    %cst_38 = arith.constant 1.000000e+00 : f32
    %48 = vector.broadcast %cst_38 : f32 to vector<32x128xf32>
    %49 = arith.addf %48, %47 : vector<32x128xf32>
    %50 = tpu.reciprocal %49 : vector<32x128xf32> -> vector<32x128xf32>
    %51 = arith.mulf %44, %50 : vector<32x128xf32>
    %c0_39 = arith.constant 0 : index
    %c0_40 = arith.constant 0 : index
    %c0_41 = arith.constant 0 : index
    %52 = vector.load %arg4[%c0_39, %c0_40, %c0_41] : memref<1x1x8xf32, #tpu.memory_space<vmem>>, vector<1x1x8xf32>
    %53 = vector.shape_cast %52 : vector<1x1x8xf32> to vector<1x8xf32>
    %c0_42 = arith.constant 0 : index
    %c0_43 = arith.constant 0 : index
    %54 = vector.load %arg5[%c0_42, %c0_43] : memref<128x8xf32, #tpu.memory_space<vmem>>, vector<128x8xf32>
    %cst_44 = arith.constant dense<0.000000e+00> : vector<128xf32>
    %55 = vector.multi_reduction <add>, %51, %cst_44 [0] : vector<32x128xf32> to vector<128xf32>
    %56 = vector.shape_cast %55 : vector<128xf32> to vector<1x128xf32>
    %57 = arith.mulf %51, %51 : vector<32x128xf32>
    %cst_45 = arith.constant dense<0.000000e+00> : vector<128xf32>
    %58 = vector.multi_reduction <add>, %57, %cst_45 [0] : vector<32x128xf32> to vector<128xf32>
    %59 = vector.shape_cast %58 : vector<128xf32> to vector<1x128xf32>
    %60 = tpu.concatenate %56, %59 in 0 : vector<1x128xf32>, vector<1x128xf32> -> vector<2x128xf32>
    %cst_46 = arith.constant dense<0.000000e+00> : vector<2x8xf32>
    %61 = tpu.matmul %60, %54, %cst_46 {dimension_numbers = #tpu.dot_dimension_numbers<[1], [0], [0], [1], [0, 0, 1, 1], [], []>} : vector<2x128xf32>, vector<128x8xf32>, vector<2x8xf32> -> vector<2x8xf32>
    %cst_47 = arith.constant 0.001953125 : f32
    %62 = vector.broadcast %cst_47 : f32 to vector<2x8xf32>
    %63 = arith.mulf %61, %62 : vector<2x8xf32>
    %64 = vector.extract_strided_slice %63 {offsets = [0, 0], sizes = [1, 8], strides = [1, 1]} : vector<2x8xf32> to vector<1x8xf32>
    %65 = vector.extract_strided_slice %63 {offsets = [1, 0], sizes = [1, 8], strides = [1, 1]} : vector<2x8xf32> to vector<1x8xf32>
    %66 = arith.mulf %64, %64 : vector<1x8xf32>
    %67 = arith.subf %65, %66 : vector<1x8xf32>
    %cst_48 = arith.constant 0.000000e+00 : f32
    %68 = vector.broadcast %cst_48 : f32 to vector<1x8xf32>
    %69 = arith.maximumf %67, %68 : vector<1x8xf32>
    %cst_49 = arith.constant 9.99999974E-6 : f32
    %70 = vector.broadcast %cst_49 : f32 to vector<1x8xf32>
    %71 = arith.addf %69, %70 : vector<1x8xf32>
    %72 = math.rsqrt %71 : vector<1x8xf32>
    %73 = arith.mulf %53, %72 : vector<1x8xf32>
    %74 = arith.mulf %64, %73 : vector<1x8xf32>
    %75 = tpu.concatenate %73, %74 in 0 : vector<1x8xf32>, vector<1x8xf32> -> vector<2x8xf32>
    %76 = tpu.concatenate %75, %75, %75, %75, %75, %75, %75, %75, %75, %75, %75, %75, %75, %75, %75, %75 in 1 : vector<2x8xf32>, vector<2x8xf32>, vector<2x8xf32>, vector<2x8xf32>, vector<2x8xf32>, vector<2x8xf32>, vector<2x8xf32>, vector<2x8xf32>, vector<2x8xf32>, vector<2x8xf32>, vector<2x8xf32>, vector<2x8xf32>, vector<2x8xf32>, vector<2x8xf32>, vector<2x8xf32>, vector<2x8xf32> -> vector<2x128xf32>
    %77 = vector.extract_strided_slice %76 {offsets = [0, 0], sizes = [1, 128], strides = [1, 1]} : vector<2x128xf32> to vector<1x128xf32>
    %78 = vector.broadcast %77 : vector<1x128xf32> to vector<32x128xf32>
    %79 = arith.mulf %51, %78 : vector<32x128xf32>
    %80 = vector.extract_strided_slice %76 {offsets = [1, 0], sizes = [1, 128], strides = [1, 1]} : vector<2x128xf32> to vector<1x128xf32>
    %81 = vector.broadcast %80 : vector<1x128xf32> to vector<32x128xf32>
    %82 = arith.subf %79, %81 : vector<32x128xf32>
    %83 = vector.shape_cast %82 : vector<32x128xf32> to vector<2x16x128xf32>
    %cst_50 = arith.constant dense<0.000000e+00> : vector<2x128xf32>
    %84 = vector.multi_reduction <add>, %83, %cst_50 [1] : vector<2x16x128xf32> to vector<2x128xf32>
    %cst_51 = arith.constant dense<0xFF800000> : vector<2x128xf32>
    %85 = vector.multi_reduction <maximumf>, %83, %cst_51 [1] : vector<2x16x128xf32> to vector<2x128xf32>
    %c0_52 = arith.constant 0 : index
    %c0_53 = arith.constant 0 : index
    %86 = vector.load %arg5[%c0_52, %c0_53] : memref<128x8xf32, #tpu.memory_space<vmem>>, vector<128x8xf32>
    %cst_54 = arith.constant dense<0.000000e+00> : vector<2x8xf32>
    %87 = tpu.matmul %84, %86, %cst_54 {dimension_numbers = #tpu.dot_dimension_numbers<[1], [0], [0], [1], [0, 0, 1, 1], [], []>} : vector<2x128xf32>, vector<128x8xf32>, vector<2x8xf32> -> vector<2x8xf32>
    %cst_55 = arith.constant 3.906250e-03 : f32
    %88 = vector.broadcast %cst_55 : f32 to vector<2x8xf32>
    %89 = arith.mulf %87, %88 : vector<2x8xf32>
    %90 = vector.extract_strided_slice %85 {offsets = [0, 0], sizes = [2, 8], strides = [1, 1]} : vector<2x128xf32> to vector<2x8xf32>
    %91 = vector.extract_strided_slice %85 {offsets = [0, 8], sizes = [2, 8], strides = [1, 1]} : vector<2x128xf32> to vector<2x8xf32>
    %92 = arith.maximumf %90, %91 : vector<2x8xf32>
    %93 = vector.extract_strided_slice %85 {offsets = [0, 16], sizes = [2, 8], strides = [1, 1]} : vector<2x128xf32> to vector<2x8xf32>
    %94 = arith.maximumf %92, %93 : vector<2x8xf32>
    %95 = vector.extract_strided_slice %85 {offsets = [0, 24], sizes = [2, 8], strides = [1, 1]} : vector<2x128xf32> to vector<2x8xf32>
    %96 = arith.maximumf %94, %95 : vector<2x8xf32>
    %97 = vector.extract_strided_slice %85 {offsets = [0, 32], sizes = [2, 8], strides = [1, 1]} : vector<2x128xf32> to vector<2x8xf32>
    %98 = arith.maximumf %96, %97 : vector<2x8xf32>
    %99 = vector.extract_strided_slice %85 {offsets = [0, 40], sizes = [2, 8], strides = [1, 1]} : vector<2x128xf32> to vector<2x8xf32>
    %100 = arith.maximumf %98, %99 : vector<2x8xf32>
    %101 = vector.extract_strided_slice %85 {offsets = [0, 48], sizes = [2, 8], strides = [1, 1]} : vector<2x128xf32> to vector<2x8xf32>
    %102 = arith.maximumf %100, %101 : vector<2x8xf32>
    %103 = vector.extract_strided_slice %85 {offsets = [0, 56], sizes = [2, 8], strides = [1, 1]} : vector<2x128xf32> to vector<2x8xf32>
    %104 = arith.maximumf %102, %103 : vector<2x8xf32>
    %105 = vector.extract_strided_slice %85 {offsets = [0, 64], sizes = [2, 8], strides = [1, 1]} : vector<2x128xf32> to vector<2x8xf32>
    %106 = arith.maximumf %104, %105 : vector<2x8xf32>
    %107 = vector.extract_strided_slice %85 {offsets = [0, 72], sizes = [2, 8], strides = [1, 1]} : vector<2x128xf32> to vector<2x8xf32>
    %108 = arith.maximumf %106, %107 : vector<2x8xf32>
    %109 = vector.extract_strided_slice %85 {offsets = [0, 80], sizes = [2, 8], strides = [1, 1]} : vector<2x128xf32> to vector<2x8xf32>
    %110 = arith.maximumf %108, %109 : vector<2x8xf32>
    %111 = vector.extract_strided_slice %85 {offsets = [0, 88], sizes = [2, 8], strides = [1, 1]} : vector<2x128xf32> to vector<2x8xf32>
    %112 = arith.maximumf %110, %111 : vector<2x8xf32>
    %113 = vector.extract_strided_slice %85 {offsets = [0, 96], sizes = [2, 8], strides = [1, 1]} : vector<2x128xf32> to vector<2x8xf32>
    %114 = arith.maximumf %112, %113 : vector<2x8xf32>
    %115 = vector.extract_strided_slice %85 {offsets = [0, 104], sizes = [2, 8], strides = [1, 1]} : vector<2x128xf32> to vector<2x8xf32>
    %116 = arith.maximumf %114, %115 : vector<2x8xf32>
    %117 = vector.extract_strided_slice %85 {offsets = [0, 112], sizes = [2, 8], strides = [1, 1]} : vector<2x128xf32> to vector<2x8xf32>
    %118 = arith.maximumf %116, %117 : vector<2x8xf32>
    %119 = vector.extract_strided_slice %85 {offsets = [0, 120], sizes = [2, 8], strides = [1, 1]} : vector<2x128xf32> to vector<2x8xf32>
    %120 = arith.maximumf %118, %119 : vector<2x8xf32>
    %121 = tpu.concatenate %89, %120 in 0 : vector<2x8xf32>, vector<2x8xf32> -> vector<4x8xf32>
    %c0_56 = arith.constant 0 : index
    %c0_57 = arith.constant 0 : index
    %122 = vector.load %arg6[%c0_56, %c0_57] : memref<8x4xf32, #tpu.memory_space<vmem>>, vector<8x4xf32>
    %cst_58 = arith.constant dense<0.000000e+00> : vector<4x4xf32>
    %123 = tpu.matmul %121, %122, %cst_58 {dimension_numbers = #tpu.dot_dimension_numbers<[1], [0], [0], [1], [0, 0, 1, 1], [], []>} : vector<4x8xf32>, vector<8x4xf32>, vector<4x4xf32> -> vector<4x4xf32>
    %c0_59 = arith.constant 0 : index
    %c0_60 = arith.constant 0 : index
    %124 = vector.load %arg7[%c0_59, %c0_60] : memref<1x4xf32, #tpu.memory_space<vmem>>, vector<1x4xf32>
    %125 = vector.broadcast %124 : vector<1x4xf32> to vector<4x4xf32>
    %126 = arith.addf %123, %125 : vector<4x4xf32>
    %cst_61 = arith.constant 0.000000e+00 : f32
    %cst_62 = arith.constant 6.000000e+00 : f32
    %127 = vector.broadcast %cst_61 : f32 to vector<4x4xf32>
    %128 = arith.maximumf %127, %126 : vector<4x4xf32>
    %129 = vector.broadcast %cst_62 : f32 to vector<4x4xf32>
    %130 = arith.minimumf %129, %128 : vector<4x4xf32>
    %131 = vector.extract_strided_slice %130 {offsets = [0, 0], sizes = [2, 4], strides = [1, 1]} : vector<4x4xf32> to vector<2x4xf32>
    %cst_63 = arith.constant dense<0.000000e+00> : vector<4xf32>
    %132 = vector.multi_reduction <add>, %131, %cst_63 [0] : vector<2x4xf32> to vector<4xf32>
    %133 = vector.shape_cast %132 : vector<4xf32> to vector<1x4xf32>
    %cst_64 = arith.constant 2.000000e+00 : f32
    %134 = vector.broadcast %cst_64 : f32 to vector<1x4xf32>
    %135 = arith.divf %133, %134 : vector<1x4xf32>
    %136 = arith.mulf %131, %131 : vector<2x4xf32>
    %cst_65 = arith.constant dense<0.000000e+00> : vector<4xf32>
    %137 = vector.multi_reduction <add>, %136, %cst_65 [0] : vector<2x4xf32> to vector<4xf32>
    %138 = vector.shape_cast %137 : vector<4xf32> to vector<1x4xf32>
    %cst_66 = arith.constant 2.000000e+00 : f32
    %139 = vector.broadcast %cst_66 : f32 to vector<1x4xf32>
    %140 = arith.divf %138, %139 : vector<1x4xf32>
    %141 = arith.mulf %135, %135 : vector<1x4xf32>
    %142 = arith.subf %140, %141 : vector<1x4xf32>
    %cst_67 = arith.constant 0.000000e+00 : f32
    %143 = vector.broadcast %cst_67 : f32 to vector<1x4xf32>
    %144 = arith.maximumf %142, %143 : vector<1x4xf32>
    %145 = vector.broadcast %135 : vector<1x4xf32> to vector<2x4xf32>
    %146 = arith.subf %131, %145 : vector<2x4xf32>
    %cst_68 = arith.constant 9.99999974E-6 : f32
    %147 = vector.broadcast %cst_68 : f32 to vector<1x4xf32>
    %148 = arith.addf %144, %147 : vector<1x4xf32>
    %149 = math.rsqrt %148 : vector<1x4xf32>
    %150 = vector.broadcast %149 : vector<1x4xf32> to vector<2x4xf32>
    %151 = arith.mulf %146, %150 : vector<2x4xf32>
    %c0_69 = arith.constant 0 : index
    %c0_70 = arith.constant 0 : index
    %152 = vector.load %arg8[%c0_69, %c0_70] : memref<1x4xf32, #tpu.memory_space<vmem>>, vector<1x4xf32>
    %153 = vector.broadcast %152 : vector<1x4xf32> to vector<2x4xf32>
    %154 = arith.mulf %151, %153 : vector<2x4xf32>
    %c0_71 = arith.constant 0 : index
    %c0_72 = arith.constant 0 : index
    %155 = vector.load %arg9[%c0_71, %c0_72] : memref<1x4xf32, #tpu.memory_space<vmem>>, vector<1x4xf32>
    %156 = vector.broadcast %155 : vector<1x4xf32> to vector<2x4xf32>
    %157 = arith.addf %154, %156 : vector<2x4xf32>
    %158 = vector.extract_strided_slice %130 {offsets = [2, 0], sizes = [2, 4], strides = [1, 1]} : vector<4x4xf32> to vector<2x4xf32>
    %cst_73 = arith.constant dense<0.000000e+00> : vector<4xf32>
    %159 = vector.multi_reduction <add>, %158, %cst_73 [0] : vector<2x4xf32> to vector<4xf32>
    %160 = vector.shape_cast %159 : vector<4xf32> to vector<1x4xf32>
    %cst_74 = arith.constant 2.000000e+00 : f32
    %161 = vector.broadcast %cst_74 : f32 to vector<1x4xf32>
    %162 = arith.divf %160, %161 : vector<1x4xf32>
    %163 = arith.mulf %158, %158 : vector<2x4xf32>
    %cst_75 = arith.constant dense<0.000000e+00> : vector<4xf32>
    %164 = vector.multi_reduction <add>, %163, %cst_75 [0] : vector<2x4xf32> to vector<4xf32>
    %165 = vector.shape_cast %164 : vector<4xf32> to vector<1x4xf32>
    %cst_76 = arith.constant 2.000000e+00 : f32
    %166 = vector.broadcast %cst_76 : f32 to vector<1x4xf32>
    %167 = arith.divf %165, %166 : vector<1x4xf32>
    %168 = arith.mulf %162, %162 : vector<1x4xf32>
    %169 = arith.subf %167, %168 : vector<1x4xf32>
    %cst_77 = arith.constant 0.000000e+00 : f32
    %170 = vector.broadcast %cst_77 : f32 to vector<1x4xf32>
    %171 = arith.maximumf %169, %170 : vector<1x4xf32>
    %172 = vector.broadcast %162 : vector<1x4xf32> to vector<2x4xf32>
    %173 = arith.subf %158, %172 : vector<2x4xf32>
    %cst_78 = arith.constant 9.99999974E-6 : f32
    %174 = vector.broadcast %cst_78 : f32 to vector<1x4xf32>
    %175 = arith.addf %171, %174 : vector<1x4xf32>
    %176 = math.rsqrt %175 : vector<1x4xf32>
    %177 = vector.broadcast %176 : vector<1x4xf32> to vector<2x4xf32>
    %178 = arith.mulf %173, %177 : vector<2x4xf32>
    %c0_79 = arith.constant 0 : index
    %c0_80 = arith.constant 0 : index
    %179 = vector.load %arg8[%c0_79, %c0_80] : memref<1x4xf32, #tpu.memory_space<vmem>>, vector<1x4xf32>
    %180 = vector.broadcast %179 : vector<1x4xf32> to vector<2x4xf32>
    %181 = arith.mulf %178, %180 : vector<2x4xf32>
    %c0_81 = arith.constant 0 : index
    %c0_82 = arith.constant 0 : index
    %182 = vector.load %arg9[%c0_81, %c0_82] : memref<1x4xf32, #tpu.memory_space<vmem>>, vector<1x4xf32>
    %183 = vector.broadcast %182 : vector<1x4xf32> to vector<2x4xf32>
    %184 = arith.addf %181, %183 : vector<2x4xf32>
    %185 = tpu.concatenate %157, %184 in 0 : vector<2x4xf32>, vector<2x4xf32> -> vector<4x4xf32>
    %c0_83 = arith.constant 0 : index
    %c0_84 = arith.constant 0 : index
    %186 = vector.load %arg10[%c0_83, %c0_84] : memref<4x8xf32, #tpu.memory_space<vmem>>, vector<4x8xf32>
    %cst_85 = arith.constant dense<0.000000e+00> : vector<4x8xf32>
    %187 = tpu.matmul %185, %186, %cst_85 {dimension_numbers = #tpu.dot_dimension_numbers<[1], [0], [0], [1], [0, 0, 1, 1], [], []>} : vector<4x4xf32>, vector<4x8xf32>, vector<4x8xf32> -> vector<4x8xf32>
    %c0_86 = arith.constant 0 : index
    %c0_87 = arith.constant 0 : index
    %188 = vector.load %arg11[%c0_86, %c0_87] : memref<1x8xf32, #tpu.memory_space<vmem>>, vector<1x8xf32>
    %189 = vector.broadcast %188 : vector<1x8xf32> to vector<4x8xf32>
    %190 = arith.addf %187, %189 : vector<4x8xf32>
    %191 = vector.extract_strided_slice %190 {offsets = [0, 0], sizes = [2, 8], strides = [1, 1]} : vector<4x8xf32> to vector<2x8xf32>
    %192 = vector.extract_strided_slice %190 {offsets = [2, 0], sizes = [2, 8], strides = [1, 1]} : vector<4x8xf32> to vector<2x8xf32>
    %193 = arith.addf %191, %192 : vector<2x8xf32>
    %cst_88 = arith.constant 0.000000e+00 : f32
    %194 = vector.broadcast %cst_88 : f32 to vector<2x8xf32>
    %195 = arith.subf %194, %193 : vector<2x8xf32>
    %196 = math.exp %195 : vector<2x8xf32>
    %cst_89 = arith.constant 1.000000e+00 : f32
    %197 = vector.broadcast %cst_89 : f32 to vector<2x8xf32>
    %198 = arith.addf %197, %196 : vector<2x8xf32>
    %199 = tpu.reciprocal %198 : vector<2x8xf32> -> vector<2x8xf32>
    %200 = tpu.concatenate %199, %199, %199, %199, %199, %199, %199, %199, %199, %199, %199, %199, %199, %199, %199, %199 in 1 : vector<2x8xf32>, vector<2x8xf32>, vector<2x8xf32>, vector<2x8xf32>, vector<2x8xf32>, vector<2x8xf32>, vector<2x8xf32>, vector<2x8xf32>, vector<2x8xf32>, vector<2x8xf32>, vector<2x8xf32>, vector<2x8xf32>, vector<2x8xf32>, vector<2x8xf32>, vector<2x8xf32>, vector<2x8xf32> -> vector<2x128xf32>
    %201 = vector.shape_cast %200 : vector<2x128xf32> to vector<2x1x128xf32>
    %202 = vector.broadcast %201 : vector<2x1x128xf32> to vector<2x16x128xf32>
    %203 = arith.mulf %83, %202 : vector<2x16x128xf32>
    %204 = vector.extract_strided_slice %203 {offsets = [0, 0, 0], sizes = [2, 16, 8], strides = [1, 1, 1]} : vector<2x16x128xf32> to vector<2x16x8xf32>
    %cst_90 = arith.constant dense<0xFF800000> : vector<2x16xf32>
    %205 = vector.multi_reduction <maximumf>, %204, %cst_90 [2] : vector<2x16x8xf32> to vector<2x16xf32>
    %206 = vector.shape_cast %205 : vector<2x16xf32> to vector<2x16x1xf32>
    %207 = vector.extract_strided_slice %203 {offsets = [0, 0, 8], sizes = [2, 16, 8], strides = [1, 1, 1]} : vector<2x16x128xf32> to vector<2x16x8xf32>
    %cst_91 = arith.constant dense<0xFF800000> : vector<2x16xf32>
    %208 = vector.multi_reduction <maximumf>, %207, %cst_91 [2] : vector<2x16x8xf32> to vector<2x16xf32>
    %209 = vector.shape_cast %208 : vector<2x16xf32> to vector<2x16x1xf32>
    %210 = vector.extract_strided_slice %203 {offsets = [0, 0, 16], sizes = [2, 16, 8], strides = [1, 1, 1]} : vector<2x16x128xf32> to vector<2x16x8xf32>
    %cst_92 = arith.constant dense<0xFF800000> : vector<2x16xf32>
    %211 = vector.multi_reduction <maximumf>, %210, %cst_92 [2] : vector<2x16x8xf32> to vector<2x16xf32>
    %212 = vector.shape_cast %211 : vector<2x16xf32> to vector<2x16x1xf32>
    %213 = vector.extract_strided_slice %203 {offsets = [0, 0, 24], sizes = [2, 16, 8], strides = [1, 1, 1]} : vector<2x16x128xf32> to vector<2x16x8xf32>
    %cst_93 = arith.constant dense<0xFF800000> : vector<2x16xf32>
    %214 = vector.multi_reduction <maximumf>, %213, %cst_93 [2] : vector<2x16x8xf32> to vector<2x16xf32>
    %215 = vector.shape_cast %214 : vector<2x16xf32> to vector<2x16x1xf32>
    %216 = vector.extract_strided_slice %203 {offsets = [0, 0, 32], sizes = [2, 16, 8], strides = [1, 1, 1]} : vector<2x16x128xf32> to vector<2x16x8xf32>
    %cst_94 = arith.constant dense<0xFF800000> : vector<2x16xf32>
    %217 = vector.multi_reduction <maximumf>, %216, %cst_94 [2] : vector<2x16x8xf32> to vector<2x16xf32>
    %218 = vector.shape_cast %217 : vector<2x16xf32> to vector<2x16x1xf32>
    %219 = vector.extract_strided_slice %203 {offsets = [0, 0, 40], sizes = [2, 16, 8], strides = [1, 1, 1]} : vector<2x16x128xf32> to vector<2x16x8xf32>
    %cst_95 = arith.constant dense<0xFF800000> : vector<2x16xf32>
    %220 = vector.multi_reduction <maximumf>, %219, %cst_95 [2] : vector<2x16x8xf32> to vector<2x16xf32>
    %221 = vector.shape_cast %220 : vector<2x16xf32> to vector<2x16x1xf32>
    %222 = vector.extract_strided_slice %203 {offsets = [0, 0, 48], sizes = [2, 16, 8], strides = [1, 1, 1]} : vector<2x16x128xf32> to vector<2x16x8xf32>
    %cst_96 = arith.constant dense<0xFF800000> : vector<2x16xf32>
    %223 = vector.multi_reduction <maximumf>, %222, %cst_96 [2] : vector<2x16x8xf32> to vector<2x16xf32>
    %224 = vector.shape_cast %223 : vector<2x16xf32> to vector<2x16x1xf32>
    %225 = vector.extract_strided_slice %203 {offsets = [0, 0, 56], sizes = [2, 16, 8], strides = [1, 1, 1]} : vector<2x16x128xf32> to vector<2x16x8xf32>
    %cst_97 = arith.constant dense<0xFF800000> : vector<2x16xf32>
    %226 = vector.multi_reduction <maximumf>, %225, %cst_97 [2] : vector<2x16x8xf32> to vector<2x16xf32>
    %227 = vector.shape_cast %226 : vector<2x16xf32> to vector<2x16x1xf32>
    %228 = vector.extract_strided_slice %203 {offsets = [0, 0, 64], sizes = [2, 16, 8], strides = [1, 1, 1]} : vector<2x16x128xf32> to vector<2x16x8xf32>
    %cst_98 = arith.constant dense<0xFF800000> : vector<2x16xf32>
    %229 = vector.multi_reduction <maximumf>, %228, %cst_98 [2] : vector<2x16x8xf32> to vector<2x16xf32>
    %230 = vector.shape_cast %229 : vector<2x16xf32> to vector<2x16x1xf32>
    %231 = vector.extract_strided_slice %203 {offsets = [0, 0, 72], sizes = [2, 16, 8], strides = [1, 1, 1]} : vector<2x16x128xf32> to vector<2x16x8xf32>
    %cst_99 = arith.constant dense<0xFF800000> : vector<2x16xf32>
    %232 = vector.multi_reduction <maximumf>, %231, %cst_99 [2] : vector<2x16x8xf32> to vector<2x16xf32>
    %233 = vector.shape_cast %232 : vector<2x16xf32> to vector<2x16x1xf32>
    %234 = vector.extract_strided_slice %203 {offsets = [0, 0, 80], sizes = [2, 16, 8], strides = [1, 1, 1]} : vector<2x16x128xf32> to vector<2x16x8xf32>
    %cst_100 = arith.constant dense<0xFF800000> : vector<2x16xf32>
    %235 = vector.multi_reduction <maximumf>, %234, %cst_100 [2] : vector<2x16x8xf32> to vector<2x16xf32>
    %236 = vector.shape_cast %235 : vector<2x16xf32> to vector<2x16x1xf32>
    %237 = vector.extract_strided_slice %203 {offsets = [0, 0, 88], sizes = [2, 16, 8], strides = [1, 1, 1]} : vector<2x16x128xf32> to vector<2x16x8xf32>
    %cst_101 = arith.constant dense<0xFF800000> : vector<2x16xf32>
    %238 = vector.multi_reduction <maximumf>, %237, %cst_101 [2] : vector<2x16x8xf32> to vector<2x16xf32>
    %239 = vector.shape_cast %238 : vector<2x16xf32> to vector<2x16x1xf32>
    %240 = vector.extract_strided_slice %203 {offsets = [0, 0, 96], sizes = [2, 16, 8], strides = [1, 1, 1]} : vector<2x16x128xf32> to vector<2x16x8xf32>
    %cst_102 = arith.constant dense<0xFF800000> : vector<2x16xf32>
    %241 = vector.multi_reduction <maximumf>, %240, %cst_102 [2] : vector<2x16x8xf32> to vector<2x16xf32>
    %242 = vector.shape_cast %241 : vector<2x16xf32> to vector<2x16x1xf32>
    %243 = vector.extract_strided_slice %203 {offsets = [0, 0, 104], sizes = [2, 16, 8], strides = [1, 1, 1]} : vector<2x16x128xf32> to vector<2x16x8xf32>
    %cst_103 = arith.constant dense<0xFF800000> : vector<2x16xf32>
    %244 = vector.multi_reduction <maximumf>, %243, %cst_103 [2] : vector<2x16x8xf32> to vector<2x16xf32>
    %245 = vector.shape_cast %244 : vector<2x16xf32> to vector<2x16x1xf32>
    %246 = vector.extract_strided_slice %203 {offsets = [0, 0, 112], sizes = [2, 16, 8], strides = [1, 1, 1]} : vector<2x16x128xf32> to vector<2x16x8xf32>
    %cst_104 = arith.constant dense<0xFF800000> : vector<2x16xf32>
    %247 = vector.multi_reduction <maximumf>, %246, %cst_104 [2] : vector<2x16x8xf32> to vector<2x16xf32>
    %248 = vector.shape_cast %247 : vector<2x16xf32> to vector<2x16x1xf32>
    %249 = vector.extract_strided_slice %203 {offsets = [0, 0, 120], sizes = [2, 16, 8], strides = [1, 1, 1]} : vector<2x16x128xf32> to vector<2x16x8xf32>
    %cst_105 = arith.constant dense<0xFF800000> : vector<2x16xf32>
    %250 = vector.multi_reduction <maximumf>, %249, %cst_105 [2] : vector<2x16x8xf32> to vector<2x16xf32>
    %251 = vector.shape_cast %250 : vector<2x16xf32> to vector<2x16x1xf32>
    %252 = tpu.concatenate %206, %209, %212, %215, %218, %221, %224, %227, %230, %233, %236, %239, %242, %245, %248, %251 in 2 : vector<2x16x1xf32>, vector<2x16x1xf32>, vector<2x16x1xf32>, vector<2x16x1xf32>, vector<2x16x1xf32>, vector<2x16x1xf32>, vector<2x16x1xf32>, vector<2x16x1xf32>, vector<2x16x1xf32>, vector<2x16x1xf32>, vector<2x16x1xf32>, vector<2x16x1xf32>, vector<2x16x1xf32>, vector<2x16x1xf32>, vector<2x16x1xf32>, vector<2x16x1xf32> -> vector<2x16x16xf32>
    %c0_106 = arith.constant 0 : index
    %c3 = arith.constant 3 : index
    %c0_107 = arith.constant 0 : index
    %253 = vector.load %arg21[%c0_106, %c3, %c0_107] : memref<2x22x144xf32, #tpu.memory_space<vmem>>, vector<2x16x128xf32>
    tpu.vector_store %arg21[%c0_106, %c3, %c0_107], %203 {strides = array<i32>} : memref<2x22x144xf32, #tpu.memory_space<vmem>>, vector<2x16x128xf32>,
    %c0_108 = arith.constant 0 : index
    %c3_109 = arith.constant 3 : index
    %c128 = arith.constant 128 : index
    %254 = vector.load %arg21[%c0_108, %c3_109, %c128] : memref<2x22x144xf32, #tpu.memory_space<vmem>>, vector<2x16x16xf32>
    tpu.vector_store %arg21[%c0_108, %c3_109, %c128], %252 {strides = array<i32>} : memref<2x22x144xf32, #tpu.memory_space<vmem>>, vector<2x16x16xf32>,
    %c0_110 = arith.constant 0 : index
    %c0_111 = arith.constant 0 : index
    %c0_112 = arith.constant 0 : index
    %255 = vector.load %arg21[%c0_110, %c0_111, %c0_112] : memref<2x22x144xf32, #tpu.memory_space<vmem>>, vector<2x16x144xf32>
    %256 = vector.shape_cast %255 : vector<2x16x144xf32> to vector<32x144xf32>
    %c0_113 = arith.constant 0 : index
    %c0_114 = arith.constant 0 : index
    %c0_115 = arith.constant 0 : index
    %257 = vector.load %arg12[%c0_113, %c0_114, %c0_115] : memref<7x144x128xf32, #tpu.memory_space<vmem>>, vector<1x144x128xf32>
    %258 = vector.shape_cast %257 : vector<1x144x128xf32> to vector<144x128xf32>
    %cst_116 = arith.constant dense<0.000000e+00> : vector<32x128xf32>
    %259 = tpu.matmul %256, %258, %cst_116 {dimension_numbers = #tpu.dot_dimension_numbers<[1], [0], [0], [1], [0, 0, 1, 1], [], []>} : vector<32x144xf32>, vector<144x128xf32>, vector<32x128xf32> -> vector<32x128xf32>
    %c0_117 = arith.constant 0 : index
    %c1_118 = arith.constant 1 : index
    %c0_119 = arith.constant 0 : index
    %260 = vector.load %arg21[%c0_117, %c1_118, %c0_119] : memref<2x22x144xf32, #tpu.memory_space<vmem>>, vector<2x16x144xf32>
    %261 = vector.shape_cast %260 : vector<2x16x144xf32> to vector<32x144xf32>
    %c1_120 = arith.constant 1 : index
    %c0_121 = arith.constant 0 : index
    %c0_122 = arith.constant 0 : index
    %262 = vector.load %arg12[%c1_120, %c0_121, %c0_122] : memref<7x144x128xf32, #tpu.memory_space<vmem>>, vector<1x144x128xf32>
    %263 = vector.shape_cast %262 : vector<1x144x128xf32> to vector<144x128xf32>
    %cst_123 = arith.constant dense<0.000000e+00> : vector<32x128xf32>
    %264 = tpu.matmul %261, %263, %cst_123 {dimension_numbers = #tpu.dot_dimension_numbers<[1], [0], [0], [1], [0, 0, 1, 1], [], []>} : vector<32x144xf32>, vector<144x128xf32>, vector<32x128xf32> -> vector<32x128xf32>
    %265 = arith.addf %259, %264 : vector<32x128xf32>
    %c0_124 = arith.constant 0 : index
    %c2_125 = arith.constant 2 : index
    %c0_126 = arith.constant 0 : index
    %266 = vector.load %arg21[%c0_124, %c2_125, %c0_126] : memref<2x22x144xf32, #tpu.memory_space<vmem>>, vector<2x16x144xf32>
    %267 = vector.shape_cast %266 : vector<2x16x144xf32> to vector<32x144xf32>
    %c2_127 = arith.constant 2 : index
    %c0_128 = arith.constant 0 : index
    %c0_129 = arith.constant 0 : index
    %268 = vector.load %arg12[%c2_127, %c0_128, %c0_129] : memref<7x144x128xf32, #tpu.memory_space<vmem>>, vector<1x144x128xf32>
    %269 = vector.shape_cast %268 : vector<1x144x128xf32> to vector<144x128xf32>
    %cst_130 = arith.constant dense<0.000000e+00> : vector<32x128xf32>
    %270 = tpu.matmul %267, %269, %cst_130 {dimension_numbers = #tpu.dot_dimension_numbers<[1], [0], [0], [1], [0, 0, 1, 1], [], []>} : vector<32x144xf32>, vector<144x128xf32>, vector<32x128xf32> -> vector<32x128xf32>
    %271 = arith.addf %265, %270 : vector<32x128xf32>
    %c0_131 = arith.constant 0 : index
    %c3_132 = arith.constant 3 : index
    %c0_133 = arith.constant 0 : index
    %272 = vector.load %arg21[%c0_131, %c3_132, %c0_133] : memref<2x22x144xf32, #tpu.memory_space<vmem>>, vector<2x16x144xf32>
    %273 = vector.shape_cast %272 : vector<2x16x144xf32> to vector<32x144xf32>
    %c3_134 = arith.constant 3 : index
    %c0_135 = arith.constant 0 : index
    %c0_136 = arith.constant 0 : index
    %274 = vector.load %arg12[%c3_134, %c0_135, %c0_136] : memref<7x144x128xf32, #tpu.memory_space<vmem>>, vector<1x144x128xf32>
    %275 = vector.shape_cast %274 : vector<1x144x128xf32> to vector<144x128xf32>
    %cst_137 = arith.constant dense<0.000000e+00> : vector<32x128xf32>
    %276 = tpu.matmul %273, %275, %cst_137 {dimension_numbers = #tpu.dot_dimension_numbers<[1], [0], [0], [1], [0, 0, 1, 1], [], []>} : vector<32x144xf32>, vector<144x128xf32>, vector<32x128xf32> -> vector<32x128xf32>
    %277 = arith.addf %271, %276 : vector<32x128xf32>
    %c0_138 = arith.constant 0 : index
    %c4 = arith.constant 4 : index
    %c0_139 = arith.constant 0 : index
    %278 = vector.load %arg21[%c0_138, %c4, %c0_139] : memref<2x22x144xf32, #tpu.memory_space<vmem>>, vector<2x16x144xf32>
    %279 = vector.shape_cast %278 : vector<2x16x144xf32> to vector<32x144xf32>
    %c4_140 = arith.constant 4 : index
    %c0_141 = arith.constant 0 : index
    %c0_142 = arith.constant 0 : index
    %280 = vector.load %arg12[%c4_140, %c0_141, %c0_142] : memref<7x144x128xf32, #tpu.memory_space<vmem>>, vector<1x144x128xf32>
    %281 = vector.shape_cast %280 : vector<1x144x128xf32> to vector<144x128xf32>
    %cst_143 = arith.constant dense<0.000000e+00> : vector<32x128xf32>
    %282 = tpu.matmul %279, %281, %cst_143 {dimension_numbers = #tpu.dot_dimension_numbers<[1], [0], [0], [1], [0, 0, 1, 1], [], []>} : vector<32x144xf32>, vector<144x128xf32>, vector<32x128xf32> -> vector<32x128xf32>
    %283 = arith.addf %277, %282 : vector<32x128xf32>
    %c0_144 = arith.constant 0 : index
    %c5 = arith.constant 5 : index
    %c0_145 = arith.constant 0 : index
    %284 = vector.load %arg21[%c0_144, %c5, %c0_145] : memref<2x22x144xf32, #tpu.memory_space<vmem>>, vector<2x16x144xf32>
    %285 = vector.shape_cast %284 : vector<2x16x144xf32> to vector<32x144xf32>
    %c5_146 = arith.constant 5 : index
    %c0_147 = arith.constant 0 : index
    %c0_148 = arith.constant 0 : index
    %286 = vector.load %arg12[%c5_146, %c0_147, %c0_148] : memref<7x144x128xf32, #tpu.memory_space<vmem>>, vector<1x144x128xf32>
    %287 = vector.shape_cast %286 : vector<1x144x128xf32> to vector<144x128xf32>
    %cst_149 = arith.constant dense<0.000000e+00> : vector<32x128xf32>
    %288 = tpu.matmul %285, %287, %cst_149 {dimension_numbers = #tpu.dot_dimension_numbers<[1], [0], [0], [1], [0, 0, 1, 1], [], []>} : vector<32x144xf32>, vector<144x128xf32>, vector<32x128xf32> -> vector<32x128xf32>
    %289 = arith.addf %283, %288 : vector<32x128xf32>
    %c0_150 = arith.constant 0 : index
    %c6 = arith.constant 6 : index
    %c0_151 = arith.constant 0 : index
    %290 = vector.load %arg21[%c0_150, %c6, %c0_151] : memref<2x22x144xf32, #tpu.memory_space<vmem>>, vector<2x16x144xf32>
    %291 = vector.shape_cast %290 : vector<2x16x144xf32> to vector<32x144xf32>
    %c6_152 = arith.constant 6 : index
    %c0_153 = arith.constant 0 : index
    %c0_154 = arith.constant 0 : index
    %292 = vector.load %arg12[%c6_152, %c0_153, %c0_154] : memref<7x144x128xf32, #tpu.memory_space<vmem>>, vector<1x144x128xf32>
    %293 = vector.shape_cast %292 : vector<1x144x128xf32> to vector<144x128xf32>
    %cst_155 = arith.constant dense<0.000000e+00> : vector<32x128xf32>
    %294 = tpu.matmul %291, %293, %cst_155 {dimension_numbers = #tpu.dot_dimension_numbers<[1], [0], [0], [1], [0, 0, 1, 1], [], []>} : vector<32x144xf32>, vector<144x128xf32>, vector<32x128xf32> -> vector<32x128xf32>
    %295 = arith.addf %289, %294 : vector<32x128xf32>
    %c0_156 = arith.constant 0 : index
    %c0_157 = arith.constant 0 : index
    %296 = memref.load %arg13[%c0_156, %c0_157] : memref<1x1xf32, #tpu.memory_space<smem>>
    %297 = vector.broadcast %296 : f32 to vector<32x128xf32>
    %298 = arith.addf %295, %297 : vector<32x128xf32>
    %cst_158 = arith.constant 0.000000e+00 : f32
    %299 = vector.broadcast %cst_158 : f32 to vector<32x128xf32>
    %300 = arith.subf %299, %298 : vector<32x128xf32>
    %301 = math.exp %300 : vector<32x128xf32>
    %cst_159 = arith.constant 1.000000e+00 : f32
    %302 = vector.broadcast %cst_159 : f32 to vector<32x128xf32>
    %303 = arith.addf %302, %301 : vector<32x128xf32>
    %304 = tpu.reciprocal %303 : vector<32x128xf32> -> vector<32x128xf32>
    %305 = vector.shape_cast %304 : vector<32x128xf32> to vector<2x16x128xf32>
    %306 = arith.mulf %203, %305 : vector<2x16x128xf32>
    %cst_160 = arith.constant 4.000000e-01 : f32
    %307 = vector.broadcast %cst_160 : f32 to vector<2x16x128xf32>
    %308 = arith.cmpf ogt, %306, %307 : vector<2x16x128xf32>
    %309 = arith.extui %308 : vector<2x16x128xi1> to vector<2x16x128xi32>
    %310 = arith.sitofp %309 : vector<2x16x128xi32> to vector<2x16x128xf32>
    %c0_161 = arith.constant 0 : index
    %c1_162 = arith.constant 1 : index
    %c0_163 = arith.constant 0 : index
    %311 = vector.load %arg22[%c0_161, %c1_162, %c0_163] : memref<2x18x128xf32, #tpu.memory_space<vmem>>, vector<2x16x128xf32>
    tpu.vector_store %arg22[%c0_161, %c1_162, %c0_163], %310 {strides = array<i32>} : memref<2x18x128xf32, #tpu.memory_space<vmem>>, vector<2x16x128xf32>,
    %c0_164 = arith.constant 0 : index
    %c0_165 = arith.constant 0 : index
    %312 = vector.load %arg15[%c0_164, %c0_165] : memref<1x256xf32, #tpu.memory_space<vmem>>, vector<1x256xf32>
    %c0_166 = arith.constant 0 : index
    %c0_167 = arith.constant 0 : index
    %c0_168 = arith.constant 0 : index
    %313 = vector.load %arg22[%c0_166, %c0_167, %c0_168] : memref<2x18x128xf32, #tpu.memory_space<vmem>>, vector<2x16x128xf32>
    %314 = vector.shape_cast %313 : vector<2x16x128xf32> to vector<32x128xf32>
    %315 = arith.truncf %314 : vector<32x128xf32> to vector<32x128xbf16>
    %c0_169 = arith.constant 0 : index
    %c0_170 = arith.constant 0 : index
    %c0_171 = arith.constant 0 : index
    %316 = vector.load %arg14[%c0_169, %c0_170, %c0_171] : memref<3x128x256xbf16, #tpu.memory_space<vmem>>, vector<1x128x256xbf16>
    %317 = vector.shape_cast %316 : vector<1x128x256xbf16> to vector<128x256xbf16>
    %cst_172 = arith.constant dense<0.000000e+00> : vector<32x256xf32>
    %318 = tpu.matmul %315, %317, %cst_172 {dimension_numbers = #tpu.dot_dimension_numbers<[1], [0], [0], [1], [0, 0, 1, 1], [], []>} : vector<32x128xbf16>, vector<128x256xbf16>, vector<32x256xf32> -> vector<32x256xf32>
    %c0_173 = arith.constant 0 : index
    %c1_174 = arith.constant 1 : index
    %c0_175 = arith.constant 0 : index
    %319 = vector.load %arg22[%c0_173, %c1_174, %c0_175] : memref<2x18x128xf32, #tpu.memory_space<vmem>>, vector<2x16x128xf32>
    %320 = vector.shape_cast %319 : vector<2x16x128xf32> to vector<32x128xf32>
    %321 = arith.truncf %320 : vector<32x128xf32> to vector<32x128xbf16>
    %c1_176 = arith.constant 1 : index
    %c0_177 = arith.constant 0 : index
    %c0_178 = arith.constant 0 : index
    %322 = vector.load %arg14[%c1_176, %c0_177, %c0_178] : memref<3x128x256xbf16, #tpu.memory_space<vmem>>, vector<1x128x256xbf16>
    %323 = vector.shape_cast %322 : vector<1x128x256xbf16> to vector<128x256xbf16>
    %cst_179 = arith.constant dense<0.000000e+00> : vector<32x256xf32>
    %324 = tpu.matmul %321, %323, %cst_179 {dimension_numbers = #tpu.dot_dimension_numbers<[1], [0], [0], [1], [0, 0, 1, 1], [], []>} : vector<32x128xbf16>, vector<128x256xbf16>, vector<32x256xf32> -> vector<32x256xf32>
    %325 = arith.addf %318, %324 : vector<32x256xf32>
    %c0_180 = arith.constant 0 : index
    %c2_181 = arith.constant 2 : index
    %c0_182 = arith.constant 0 : index
    %326 = vector.load %arg22[%c0_180, %c2_181, %c0_182] : memref<2x18x128xf32, #tpu.memory_space<vmem>>, vector<2x16x128xf32>
    %327 = vector.shape_cast %326 : vector<2x16x128xf32> to vector<32x128xf32>
    %328 = arith.truncf %327 : vector<32x128xf32> to vector<32x128xbf16>
    %c2_183 = arith.constant 2 : index
    %c0_184 = arith.constant 0 : index
    %c0_185 = arith.constant 0 : index
    %329 = vector.load %arg14[%c2_183, %c0_184, %c0_185] : memref<3x128x256xbf16, #tpu.memory_space<vmem>>, vector<1x128x256xbf16>
    %330 = vector.shape_cast %329 : vector<1x128x256xbf16> to vector<128x256xbf16>
    %cst_186 = arith.constant dense<0.000000e+00> : vector<32x256xf32>
    %331 = tpu.matmul %328, %330, %cst_186 {dimension_numbers = #tpu.dot_dimension_numbers<[1], [0], [0], [1], [0, 0, 1, 1], [], []>} : vector<32x128xbf16>, vector<128x256xbf16>, vector<32x256xf32> -> vector<32x256xf32>
    %332 = arith.addf %325, %331 : vector<32x256xf32>
    %333 = vector.broadcast %312 : vector<1x256xf32> to vector<32x256xf32>
    %334 = arith.addf %332, %333 : vector<32x256xf32>
    %cst_187 = arith.constant 0.000000e+00 : f32
    %335 = vector.broadcast %cst_187 : f32 to vector<32x256xf32>
    %336 = arith.subf %335, %334 : vector<32x256xf32>
    %337 = math.exp %336 : vector<32x256xf32>
    %cst_188 = arith.constant 1.000000e+00 : f32
    %338 = vector.broadcast %cst_188 : f32 to vector<32x256xf32>
    %339 = arith.addf %338, %337 : vector<32x256xf32>
    %340 = tpu.reciprocal %339 : vector<32x256xf32> -> vector<32x256xf32>
    %341 = arith.mulf %334, %340 : vector<32x256xf32>
    %c0_189 = arith.constant 0 : index
    %c0_190 = arith.constant 0 : index
    %c0_191 = arith.constant 0 : index
    %342 = vector.load %arg16[%c0_189, %c0_190, %c0_191] : memref<1x1x16xf32, #tpu.memory_space<vmem>>, vector<1x1x16xf32>
    %343 = vector.shape_cast %342 : vector<1x1x16xf32> to vector<1x16xf32>
    %c0_192 = arith.constant 0 : index
    %c0_193 = arith.constant 0 : index
    %344 = vector.load %arg17[%c0_192, %c0_193] : memref<256x16xf32, #tpu.memory_space<vmem>>, vector<256x16xf32>
    %cst_194 = arith.constant dense<0.000000e+00> : vector<256xf32>
    %345 = vector.multi_reduction <add>, %341, %cst_194 [0] : vector<32x256xf32> to vector<256xf32>
    %346 = vector.shape_cast %345 : vector<256xf32> to vector<1x256xf32>
    %347 = arith.mulf %341, %341 : vector<32x256xf32>
    %cst_195 = arith.constant dense<0.000000e+00> : vector<256xf32>
    %348 = vector.multi_reduction <add>, %347, %cst_195 [0] : vector<32x256xf32> to vector<256xf32>
    %349 = vector.shape_cast %348 : vector<256xf32> to vector<1x256xf32>
    %350 = tpu.concatenate %346, %349 in 0 : vector<1x256xf32>, vector<1x256xf32> -> vector<2x256xf32>
    %cst_196 = arith.constant dense<0.000000e+00> : vector<2x16xf32>
    %351 = tpu.matmul %350, %344, %cst_196 {dimension_numbers = #tpu.dot_dimension_numbers<[1], [0], [0], [1], [0, 0, 1, 1], [], []>} : vector<2x256xf32>, vector<256x16xf32>, vector<2x16xf32> -> vector<2x16xf32>
    %cst_197 = arith.constant 0.001953125 : f32
    %352 = vector.broadcast %cst_197 : f32 to vector<2x16xf32>
    %353 = arith.mulf %351, %352 : vector<2x16xf32>
    %354 = vector.extract_strided_slice %353 {offsets = [0, 0], sizes = [1, 16], strides = [1, 1]} : vector<2x16xf32> to vector<1x16xf32>
    %355 = vector.extract_strided_slice %353 {offsets = [1, 0], sizes = [1, 16], strides = [1, 1]} : vector<2x16xf32> to vector<1x16xf32>
    %356 = arith.mulf %354, %354 : vector<1x16xf32>
    %357 = arith.subf %355, %356 : vector<1x16xf32>
    %cst_198 = arith.constant 0.000000e+00 : f32
    %358 = vector.broadcast %cst_198 : f32 to vector<1x16xf32>
    %359 = arith.maximumf %357, %358 : vector<1x16xf32>
    %cst_199 = arith.constant 9.99999974E-6 : f32
    %360 = vector.broadcast %cst_199 : f32 to vector<1x16xf32>
    %361 = arith.addf %359, %360 : vector<1x16xf32>
    %362 = math.rsqrt %361 : vector<1x16xf32>
    %363 = arith.mulf %343, %362 : vector<1x16xf32>
    %364 = arith.mulf %354, %363 : vector<1x16xf32>
    %365 = tpu.concatenate %363, %364 in 0 : vector<1x16xf32>, vector<1x16xf32> -> vector<2x16xf32>
    %366 = tpu.concatenate %365, %365, %365, %365, %365, %365, %365, %365, %365, %365, %365, %365, %365, %365, %365, %365 in 1 : vector<2x16xf32>, vector<2x16xf32>, vector<2x16xf32>, vector<2x16xf32>, vector<2x16xf32>, vector<2x16xf32>, vector<2x16xf32>, vector<2x16xf32>, vector<2x16xf32>, vector<2x16xf32>, vector<2x16xf32>, vector<2x16xf32>, vector<2x16xf32>, vector<2x16xf32>, vector<2x16xf32>, vector<2x16xf32> -> vector<2x256xf32>
    %367 = vector.extract_strided_slice %366 {offsets = [0, 0], sizes = [1, 256], strides = [1, 1]} : vector<2x256xf32> to vector<1x256xf32>
    %368 = vector.broadcast %367 : vector<1x256xf32> to vector<32x256xf32>
    %369 = arith.mulf %341, %368 : vector<32x256xf32>
    %370 = vector.extract_strided_slice %366 {offsets = [1, 0], sizes = [1, 256], strides = [1, 1]} : vector<2x256xf32> to vector<1x256xf32>
    %371 = vector.broadcast %370 : vector<1x256xf32> to vector<32x256xf32>
    %372 = arith.subf %369, %371 : vector<32x256xf32>
    %373 = vector.shape_cast %372 : vector<32x256xf32> to vector<2x16x256xf32>
    %374 = arith.addf %373, %4 : vector<2x16x256xf32>
    %c0_200 = arith.constant 0 : index
    %c0_201 = arith.constant 0 : index
    %c0_202 = arith.constant 0 : index
    %c0_203 = arith.constant 0 : index
    %375 = vector.load %arg18[%c0_200, %c0_201, %c0_202, %c0_203] : memref<1x2x16x256xf32, #tpu.memory_space<vmem>>, vector<1x2x16x256xf32>
    %376 = vector.shape_cast %375 : vector<1x2x16x256xf32> to vector<2x16x256xf32>
    %377 = vector.shape_cast %374 : vector<2x16x256xf32> to vector<1x2x16x256xf32>
    tpu.vector_store %arg18[%c0_200, %c0_201, %c0_202, %c0_203], %377 {strides = array<i32>} : memref<1x2x16x256xf32, #tpu.memory_space<vmem>>, vector<1x2x16x256xf32>,
    return
  }
  func.func @transform_0(%arg0: i32) -> (i32, i32, i32, i32) {
    %c0_i32 = arith.constant 0 : i32
    %c0_i32_0 = arith.constant 0 : i32
    %c0_i32_1 = arith.constant 0 : i32
    %c0_i32_2 = arith.constant 0 : i32
    return %arg0, %c0_i32, %c0_i32_0, %c0_i32_1 : i32, i32, i32, i32
  }
  func.func @transform_1(%arg0: i32) -> (i32, i32, i32) {
    %c0_i32 = arith.constant 0 : i32
    %c0_i32_0 = arith.constant 0 : i32
    %c0_i32_1 = arith.constant 0 : i32
    %c0_i32_2 = arith.constant 0 : i32
    return %c0_i32, %c0_i32_0, %c0_i32_1 : i32, i32, i32
  }
  func.func @transform_2(%arg0: i32) -> (i32, i32) {
    %c0_i32 = arith.constant 0 : i32
    %c0_i32_0 = arith.constant 0 : i32
    %c0_i32_1 = arith.constant 0 : i32
    return %c0_i32, %c0_i32_0 : i32, i32
  }
  func.func @transform_3(%arg0: i32) -> (i32, i32, i32) {
    %c0_i32 = arith.constant 0 : i32
    %c0_i32_0 = arith.constant 0 : i32
    %c0_i32_1 = arith.constant 0 : i32
    return %arg0, %c0_i32, %c0_i32_0 : i32, i32, i32
  }
  func.func @transform_4(%arg0: i32) -> (i32, i32) {
    %c0_i32 = arith.constant 0 : i32
    %c0_i32_0 = arith.constant 0 : i32
    %c0_i32_1 = arith.constant 0 : i32
    return %c0_i32, %c0_i32_0 : i32, i32
  }
  func.func @transform_5(%arg0: i32) -> (i32, i32) {
    %c0_i32 = arith.constant 0 : i32
    %c0_i32_0 = arith.constant 0 : i32
    %c0_i32_1 = arith.constant 0 : i32
    return %c0_i32, %c0_i32_0 : i32, i32
  }
  func.func @transform_6(%arg0: i32) -> (i32, i32) {
    %c0_i32 = arith.constant 0 : i32
    %c0_i32_0 = arith.constant 0 : i32
    %c0_i32_1 = arith.constant 0 : i32
    return %c0_i32, %c0_i32_0 : i32, i32
  }
  func.func @transform_7(%arg0: i32) -> (i32, i32) {
    %c0_i32 = arith.constant 0 : i32
    %c0_i32_0 = arith.constant 0 : i32
    %c0_i32_1 = arith.constant 0 : i32
    return %c0_i32, %c0_i32_0 : i32, i32
  }
  func.func @transform_8(%arg0: i32) -> (i32, i32) {
    %c0_i32 = arith.constant 0 : i32
    %c0_i32_0 = arith.constant 0 : i32
    %c0_i32_1 = arith.constant 0 : i32
    return %c0_i32, %c0_i32_0 : i32, i32
  }
  func.func @transform_9(%arg0: i32) -> (i32, i32) {
    %c0_i32 = arith.constant 0 : i32
    %c0_i32_0 = arith.constant 0 : i32
    %c0_i32_1 = arith.constant 0 : i32
    return %c0_i32, %c0_i32_0 : i32, i32
  }
  func.func @transform_10(%arg0: i32) -> (i32, i32) {
    %c0_i32 = arith.constant 0 : i32
    %c0_i32_0 = arith.constant 0 : i32
    %c0_i32_1 = arith.constant 0 : i32
    return %c0_i32, %c0_i32_0 : i32, i32
  }
  func.func @transform_11(%arg0: i32) -> (i32, i32, i32) {
    %c0_i32 = arith.constant 0 : i32
    %c0_i32_0 = arith.constant 0 : i32
    %c0_i32_1 = arith.constant 0 : i32
    %c0_i32_2 = arith.constant 0 : i32
    return %c0_i32, %c0_i32_0, %c0_i32_1 : i32, i32, i32
  }
  func.func @transform_12(%arg0: i32) -> (i32, i32) {
    %c0_i32 = arith.constant 0 : i32
    %c0_i32_0 = arith.constant 0 : i32
    %c0_i32_1 = arith.constant 0 : i32
    return %c0_i32, %c0_i32_0 : i32, i32
  }
  func.func @transform_13(%arg0: i32) -> (i32, i32, i32) {
    %c0_i32 = arith.constant 0 : i32
    %c0_i32_0 = arith.constant 0 : i32
    %c0_i32_1 = arith.constant 0 : i32
    %c0_i32_2 = arith.constant 0 : i32
    return %c0_i32, %c0_i32_0, %c0_i32_1 : i32, i32, i32
  }
  func.func @transform_14(%arg0: i32) -> (i32, i32) {
    %c0_i32 = arith.constant 0 : i32
    %c0_i32_0 = arith.constant 0 : i32
    %c0_i32_1 = arith.constant 0 : i32
    return %c0_i32, %c0_i32_0 : i32, i32
  }
  func.func @transform_15(%arg0: i32) -> (i32, i32, i32) {
    %c0_i32 = arith.constant 0 : i32
    %c0_i32_0 = arith.constant 0 : i32
    %c0_i32_1 = arith.constant 0 : i32
    return %arg0, %c0_i32, %c0_i32_0 : i32, i32, i32
  }
  func.func @transform_16(%arg0: i32) -> (i32, i32) {
    %c0_i32 = arith.constant 0 : i32
    %c0_i32_0 = arith.constant 0 : i32
    %c0_i32_1 = arith.constant 0 : i32
    return %c0_i32, %c0_i32_0 : i32, i32
  }
  func.func @transform_17(%arg0: i32) -> (i32, i32, i32, i32) {
    %c0_i32 = arith.constant 0 : i32
    %c0_i32_0 = arith.constant 0 : i32
    %c0_i32_1 = arith.constant 0 : i32
    %c0_i32_2 = arith.constant 0 : i32
    return %arg0, %c0_i32, %c0_i32_0, %c0_i32_1 : i32, i32, i32, i32
  }
}

</mosaic_0001>

<llo_original>
// kernel: tpu_custom_call.1
$region0: #{tpu_custom_call.1}
  #allocation0 [shape = 'u32[]', space=smem, size = 0x4, offset = 0x4, fixed_abs, tag = 'smem constant byte address 0x4 - core index']
  #allocation1 [shape = 'u32[72,128]{1,0:T(1,128)}', space=vmem, size = 0x9000, scoped, tag = 'internal scratch']
  #allocation2 [shape = 'f32[2,16,256]{2,1,0:T(8,128)}', space=vmem, size = 0x8000, scoped, tag = 'scratch operand']
  #allocation3 [shape = 'f32[2,18,256]{2,1,0:T(8,128)}', space=vmem, size = 0xc000, scoped, tag = 'scratch operand']
  #allocation4 [shape = 'f32[2,22,144]{2,1,0:T(8,128)}', space=vmem, size = 0xc000, scoped, tag = 'scratch operand']
  #allocation5 [shape = 'f32[2,18,128]{2,1,0:T(8,128)}', space=vmem, size = 0x6000, scoped, tag = 'scratch operand']
  #allocation6 [shape = 'f32[1,1]{1,0:T(1,128)S(6)}', space=smem, size = 0x200, scoped, tag = 'scoped memory for tpu_custom_call.1']
  %s0 = inlined_call_operand.hbm [shape: f32[4,2,16,256], index: 0, kind: input, shape index: {}]
  %s1 = inlined_call_operand.vmem [shape: bf16[3,256,128], index: 1, kind: input, shape index: {}]
  %s2 = inlined_call_operand.hbm [shape: f32[1,128], index: 2, kind: input, shape index: {}]
  %s3 = inlined_call_operand.vmem [shape: f32[4,1,8], index: 3, kind: input, shape index: {}]
  %s4 = inlined_call_operand.vmem [shape: f32[128,8], index: 4, kind: input, shape index: {}]
  %s5 = inlined_call_operand.vmem [shape: f32[8,4], index: 5, kind: input, shape index: {}]
  %s6 = inlined_call_operand.hbm [shape: f32[1,4], index: 6, kind: input, shape index: {}]
  %s7 = inlined_call_operand.hbm [shape: f32[1,4], index: 7, kind: input, shape index: {}]
  %s8 = inlined_call_operand.vmem [shape: f32[1,4], index: 8, kind: input, shape index: {}]
  %s9 = inlined_call_operand.vmem [shape: f32[4,8], index: 9, kind: input, shape index: {}]
  %s10 = inlined_call_operand.vmem [shape: f32[1,8], index: 10, kind: input, shape index: {}]
  %s11 = inlined_call_operand.hbm [shape: f32[7,144,128], index: 11, kind: input, shape index: {}]
  %s12 = inlined_call_operand.<no memory space> [shape: f32[1,1], index: 12, kind: input, shape index: {}]
  %s13 = inlined_call_operand.hbm [shape: bf16[3,128,256], index: 13, kind: input, shape index: {}]
  %s14 = inlined_call_operand.vmem [shape: f32[1,256], index: 14, kind: input, shape index: {}]
  %s15 = inlined_call_operand.vmem [shape: f32[4,1,16], index: 15, kind: input, shape index: {}]
  %s16 = inlined_call_operand.vmem [shape: f32[256,16], index: 16, kind: input, shape index: {}]
  %s17 = inlined_call_operand.hbm [shape: f32[4,2,16,256], index: 17, kind: output, shape index: {}]
  %s18 = sld [smem:[#allocation0]]
  $region129: #{tpu_custom_call.1} parent=0
    _
  %s20 = ssub.s32 1, %s18
  %s21 = scalar_select 0, %s20, %s18
  %22 = sst [smem:[#allocation6]] %s12
  $region1: #{tpu_custom_call.1} parent=0
    #allocation7 [shape = 'u8[65536]{0}', space=vmem, size = 0x10000, scoped, tag = 'input window, operand 0']
    #allocation8 [shape = 's32[2]{0}', space=sflag, size = 0x8, scoped, tag = 'scoped memory for tpu_custom_call.1']
    #allocation9 [shape = 's32[2]{0}', space=sflag, size = 0x8, scoped, tag = 'scoped memory for tpu_custom_call.1']
    #allocation10 [shape = 'u8[512]{0}', space=vmem, size = 0x400, scoped, tag = 'input window, operand 2, single buffered']
    #allocation11 [shape = 's32[1]{0}', space=sflag, size = 0x4, scoped, tag = 'scoped memory for tpu_custom_call.1']
    #allocation12 [shape = 'u8[512]{0}', space=vmem, size = 0x400, scoped, tag = 'input window, operand 6, single buffered']
    #allocation13 [shape = 'u8[512]{0}', space=vmem, size = 0x400, scoped, tag = 'input window, operand 7, single buffered']
    #allocation14 [shape = 's32[1]{0}', space=sflag, size = 0x4, scoped, tag = 'scoped memory for tpu_custom_call.1']
    #allocation15 [shape = 'u8[516096]{0}', space=vmem, size = 0x7e000, scoped, tag = 'input window, operand 11, single buffered']
    #allocation16 [shape = 'u8[196608]{0}', space=vmem, size = 0x30000, scoped, tag = 'input window, operand 13, single buffered']
    #allocation17 [shape = 's32[1]{0}', space=sflag, size = 0x4, scoped, tag = 'scoped memory for tpu_custom_call.1']
    #allocation18 [shape = 'u8[65536]{0}', space=vmem, size = 0x10000, scoped, tag = 'output window, operand 0']
    %23 = vsyncpa [#allocation8], 0
    %s24 = scalar_lea.sflag [#allocation8], 1
    %25 = vsyncpa %s24, 0
    %26 = vsyncpa [#allocation11], 0
    %27 = vsyncpa [#allocation14], 0
    %28 = vsyncpa [#allocation17], 0
    %29 = vsyncpa [#allocation9], 0
    %s30 = scalar_lea.sflag [#allocation9], 1
    %31 = vsyncpa %s30, 0
    loop: start=0, step=1, limit=6
    $region2: #{tpu_custom_call.1} parent=1 // loop_pre_header
      _
    $region3: #{tpu_custom_call.1} parent=1 // loop_header
      %s33 = sphi 0, %s37
      %p34 = scmp.ge.s32.totalorder %s33, 6
      %s43 = sphi 0, %s45
      %s46 = sphi 0, %s43
      %s47 = sphi 0, %s46
      %s63 = sphi 0, %s47
      %s67 = sphi 0, %s67
      %s69 = sphi 0, %s67
      %s70 = sphi 0, %s69
      %s84 = sphi 0, %s70
      %s88 = sphi 0, %s88
      %s90 = sphi 0, %s88
      %s91 = sphi 0, %s90
      %s105 = sphi 0, %s91
      %s111 = sphi 0, %s113
      %s114 = sphi 0, %s111
      %s115 = sphi 0, %s114
      %s131 = sphi 0, %s115
      %s135 = sphi 0, %s135
      %s137 = sphi 0, %s135
      %s138 = sphi 0, %s137
      %s152 = sphi 0, %s138
      %s156 = sphi 0, %s156
      %s158 = sphi 0, %s156
      %s159 = sphi 0, %s158
      %s173 = sphi 0, %s159
      %s177 = sphi 0, %s177
      %s179 = sphi 0, %s177
      %s180 = sphi 0, %s179
      %s194 = sphi 0, %s180
      %s198 = sphi 0, %s198
      %s200 = sphi 0, %s198
      %s201 = sphi 0, %s200
      %s215 = sphi 0, %s201
      %s219 = sphi 0, %s219
      %s221 = sphi 0, %s219
      %s222 = sphi 0, %s221
      %s236 = sphi 0, %s222
      %s240 = sphi 0, %s240
      %s242 = sphi 0, %s240
      %s243 = sphi 0, %s242
      %s257 = sphi 0, %s243
      %s261 = sphi 0, %s261
      %s263 = sphi 0, %s261
      %s264 = sphi 0, %s263
      %s278 = sphi 0, %s264
      %s282 = sphi 0, %s282
      %s284 = sphi 0, %s282
      %s285 = sphi 0, %s284
      %s299 = sphi 0, %s285
      %s303 = sphi 0, %s303
      %s305 = sphi 0, %s303
      %s306 = sphi 0, %s305
      %s320 = sphi 0, %s306
      %s324 = sphi 0, %s324
      %s326 = sphi 0, %s324
      %s327 = sphi 0, %s326
      %s341 = sphi 0, %s327
      %s345 = sphi 0, %s345
      %s347 = sphi 0, %s345
      %s348 = sphi 0, %s347
      %s362 = sphi 0, %s348
      %s368 = sphi 0, %s370
      %s371 = sphi 0, %s368
      %s372 = sphi 0, %s371
      %s388 = sphi 0, %s372
      %s392 = sphi 0, %s392
      %s394 = sphi 0, %s392
      %s395 = sphi 0, %s394
      %s409 = sphi 0, %s395
      %s415 = sphi 0, %s417
      %s418 = sphi 0, %s415
      %s419 = sphi 0, %s418
      %s435 = sphi 0, %s419
    $region4: #{tpu_custom_call.1} parent=1 // loop_header_branch
      %36 = sbr.rel (%p34) target = $region8
    $region5: #{tpu_custom_call.1} parent=1 // loop_body
      %s38 = ssub.s32 %s33, 1
      %s39 = ssub.s32 %s33, 2
      %s40 = sadd.s32 %s33, 1
      %s41 = ssub.s32 %s33, %s40
      %p42 = scmp.eq.s32.totalorder %s41, 0
      %s44 = sadd.s32 %s43, 1
      %s45 = scalar_select %p42, %s43, %s44
      %p48 = pneg %p42
      %p49 = scmp.eq.s32.totalorder %s33, 3
      %p50 = por %p48, %p49
      %p51 = scmp.ne.s32.totalorder %s43, %s46
      %p52 = scmp.eq.s32.totalorder %s33, 0
      %p53 = por %p51, %p52
      %p54 = scmp.ne.s32.totalorder %s43, %s46
      %p55 = scmp.eq.s32.totalorder %s38, 3
      %p56 = por %p54, %p55
      %p57 = scmp.ne.s32.totalorder %s46, %s47
      %p58 = scmp.eq.s32.totalorder %s38, 0
      %p59 = por %p57, %p58
      %p60 = scmp.ne.s32.totalorder %s46, %s47
      %p61 = scmp.eq.s32.totalorder %s39, 3
      %p62 = por %p60, %p61
      %p64 = scmp.ne.s32.totalorder %s47, %s63
      %p65 = scmp.eq.s32.totalorder %s39, 0
      %p66 = por %p64, %p65
      %s68 = sadd.s32 %s67, 1
      %p71 = scmp.eq.s32.totalorder %s33, 3
      %p72 = scmp.ne.s32.totalorder %s67, %s69
      %p73 = scmp.eq.s32.totalorder %s33, 0
      %p74 = por %p72, %p73
      %p75 = scmp.ne.s32.totalorder %s67, %s69
      %p76 = scmp.eq.s32.totalorder %s38, 3
      %p77 = por %p75, %p76
      %p78 = scmp.ne.s32.totalorder %s69, %s70
      %p79 = scmp.eq.s32.totalorder %s38, 0
      %p80 = por %p78, %p79
      %p81 = scmp.ne.s32.totalorder %s69, %s70
      %p82 = scmp.eq.s32.totalorder %s39, 3
      %p83 = por %p81, %p82
      %p85 = scmp.ne.s32.totalorder %s70, %s84
      %p86 = scmp.eq.s32.totalorder %s39, 0
      %p87 = por %p85, %p86
      %s89 = sadd.s32 %s88, 1
      %p92 = scmp.eq.s32.totalorder %s33, 3
      %p93 = scmp.ne.s32.totalorder %s88, %s90
      %p94 = scmp.eq.s32.totalorder %s33, 0
      %p95 = por %p93, %p94
      %p96 = scmp.ne.s32.totalorder %s88, %s90
      %p97 = scmp.eq.s32.totalorder %s38, 3
      %p98 = por %p96, %p97
      %p99 = scmp.ne.s32.totalorder %s90, %s91
      %p100 = scmp.eq.s32.totalorder %s38, 0
      %p101 = por %p99, %p100
      %p102 = scmp.ne.s32.totalorder %s90, %s91
      %p103 = scmp.eq.s32.totalorder %s39, 3
      %p104 = por %p102, %p103
      %p106 = scmp.ne.s32.totalorder %s91, %s105
      %p107 = scmp.eq.s32.totalorder %s39, 0
      %p108 = por %p106, %p107
      %s109 = ssub.s32 %s33, %s40
      %p110 = scmp.eq.s32.totalorder %s109, 0
      %s112 = sadd.s32 %s111, 1
      %s113 = scalar_select %p110, %s111, %s112
      %p116 = pneg %p110
      %p117 = scmp.eq.s32.totalorder %s33, 3
      %p118 = por %p116, %p117
      %p119 = scmp.ne.s32.totalorder %s111, %s114
      %p120 = scmp.eq.s32.totalorder %s33, 0
      %p121 = por %p119, %p120
      %p122 = scmp.ne.s32.totalorder %s111, %s114
      %p123 = scmp.eq.s32.totalorder %s38, 3
      %p124 = por %p122, %p123
      %p125 = scmp.ne.s32.totalorder %s114, %s115
      %p126 = scmp.eq.s32.totalorder %s38, 0
      %p127 = por %p125, %p126
      %p128 = scmp.ne.s32.totalorder %s114, %s115
      %p129 = scmp.eq.s32.totalorder %s39, 3
      %p130 = por %p128, %p129
      %p132 = scmp.ne.s32.totalorder %s115, %s131
      %p133 = scmp.eq.s32.totalorder %s39, 0
      %p134 = por %p132, %p133
      %s136 = sadd.s32 %s135, 1
      %p139 = scmp.eq.s32.totalorder %s33, 3
      %p140 = scmp.ne.s32.totalorder %s135, %s137
      %p141 = scmp.eq.s32.totalorder %s33, 0
      %p142 = por %p140, %p141
      %p143 = scmp.ne.s32.totalorder %s135, %s137
      %p144 = scmp.eq.s32.totalorder %s38, 3
      %p145 = por %p143, %p144
      %p146 = scmp.ne.s32.totalorder %s137, %s138
      %p147 = scmp.eq.s32.totalorder %s38, 0
      %p148 = por %p146, %p147
      %p149 = scmp.ne.s32.totalorder %s137, %s138
      %p150 = scmp.eq.s32.totalorder %s39, 3
      %p151 = por %p149, %p150
      %p153 = scmp.ne.s32.totalorder %s138, %s152
      %p154 = scmp.eq.s32.totalorder %s39, 0
      %p155 = por %p153, %p154
      %s157 = sadd.s32 %s156, 1
      %p160 = scmp.eq.s32.totalorder %s33, 3
      %p161 = scmp.ne.s32.totalorder %s156, %s158
      %p162 = scmp.eq.s32.totalorder %s33, 0
      %p163 = por %p161, %p162
      %p164 = scmp.ne.s32.totalorder %s156, %s158
      %p165 = scmp.eq.s32.totalorder %s38, 3
      %p166 = por %p164, %p165
      %p167 = scmp.ne.s32.totalorder %s158, %s159
      %p168 = scmp.eq.s32.totalorder %s38, 0
      %p169 = por %p167, %p168
      %p170 = scmp.ne.s32.totalorder %s158, %s159
      %p171 = scmp.eq.s32.totalorder %s39, 3
      %p172 = por %p170, %p171
      %p174 = scmp.ne.s32.totalorder %s159, %s173
      %p175 = scmp.eq.s32.totalorder %s39, 0
      %p176 = por %p174, %p175
      %s178 = sadd.s32 %s177, 1
      %p181 = scmp.eq.s32.totalorder %s33, 3
      %p182 = scmp.ne.s32.totalorder %s177, %s179
      %p183 = scmp.eq.s32.totalorder %s33, 0
      %p184 = por %p182, %p183
      %p185 = scmp.ne.s32.totalorder %s177, %s179
      %p186 = scmp.eq.s32.totalorder %s38, 3
      %p187 = por %p185, %p186
      %p188 = scmp.ne.s32.totalorder %s179, %s180
      %p189 = scmp.eq.s32.totalorder %s38, 0
      %p190 = por %p188, %p189
      %p191 = scmp.ne.s32.totalorder %s179, %s180
      %p192 = scmp.eq.s32.totalorder %s39, 3
      %p193 = por %p191, %p192
      %p195 = scmp.ne.s32.totalorder %s180, %s194
      %p196 = scmp.eq.s32.totalorder %s39, 0
      %p197 = por %p195, %p196
      %s199 = sadd.s32 %s198, 1
      %p202 = scmp.eq.s32.totalorder %s33, 3
      %p203 = scmp.ne.s32.totalorder %s198, %s200
      %p204 = scmp.eq.s32.totalorder %s33, 0
      %p205 = por %p203, %p204
      %p206 = scmp.ne.s32.totalorder %s198, %s200
      %p207 = scmp.eq.s32.totalorder %s38, 3
      %p208 = por %p206, %p207
      %p209 = scmp.ne.s32.totalorder %s200, %s201
      %p210 = scmp.eq.s32.totalorder %s38, 0
      %p211 = por %p209, %p210
      %p212 = scmp.ne.s32.totalorder %s200, %s201
      %p213 = scmp.eq.s32.totalorder %s39, 3
      %p214 = por %p212, %p213
      %p216 = scmp.ne.s32.totalorder %s201, %s215
      %p217 = scmp.eq.s32.totalorder %s39, 0
      %p218 = por %p216, %p217
      %s220 = sadd.s32 %s219, 1
      %p223 = scmp.eq.s32.totalorder %s33, 3
      %p224 = scmp.ne.s32.totalorder %s219, %s221
      %p225 = scmp.eq.s32.totalorder %s33, 0
      %p226 = por %p224, %p225
      %p227 = scmp.ne.s32.totalorder %s219, %s221
      %p228 = scmp.eq.s32.totalorder %s38, 3
      %p229 = por %p227, %p228
      %p230 = scmp.ne.s32.totalorder %s221, %s222
      %p231 = scmp.eq.s32.totalorder %s38, 0
      %p232 = por %p230, %p231
      %p233 = scmp.ne.s32.totalorder %s221, %s222
      %p234 = scmp.eq.s32.totalorder %s39, 3
      %p235 = por %p233, %p234
      %p237 = scmp.ne.s32.totalorder %s222, %s236
      %p238 = scmp.eq.s32.totalorder %s39, 0
      %p239 = por %p237, %p238
      %s241 = sadd.s32 %s240, 1
      %p244 = scmp.eq.s32.totalorder %s33, 3
      %p245 = scmp.ne.s32.totalorder %s240, %s242
      %p246 = scmp.eq.s32.totalorder %s33, 0
      %p247 = por %p245, %p246
      %p248 = scmp.ne.s32.totalorder %s240, %s242
      %p249 = scmp.eq.s32.totalorder %s38, 3
      %p250 = por %p248, %p249
      %p251 = scmp.ne.s32.totalorder %s242, %s243
      %p252 = scmp.eq.s32.totalorder %s38, 0
      %p253 = por %p251, %p252
      %p254 = scmp.ne.s32.totalorder %s242, %s243
      %p255 = scmp.eq.s32.totalorder %s39, 3
      %p256 = por %p254, %p255
      %p258 = scmp.ne.s32.totalorder %s243, %s257
      %p259 = scmp.eq.s32.totalorder %s39, 0
      %p260 = por %p258, %p259
      %s262 = sadd.s32 %s261, 1
      %p265 = scmp.eq.s32.totalorder %s33, 3
      %p266 = scmp.ne.s32.totalorder %s261, %s263
      %p267 = scmp.eq.s32.totalorder %s33, 0
      %p268 = por %p266, %p267
      %p269 = scmp.ne.s32.totalorder %s261, %s263
      %p270 = scmp.eq.s32.totalorder %s38, 3
      %p271 = por %p269, %p270
      %p272 = scmp.ne.s32.totalorder %s263, %s264
      %p273 = scmp.eq.s32.totalorder %s38, 0
      %p274 = por %p272, %p273
      %p275 = scmp.ne.s32.totalorder %s263, %s264
      %p276 = scmp.eq.s32.totalorder %s39, 3
      %p277 = por %p275, %p276
      %p279 = scmp.ne.s32.totalorder %s264, %s278
      %p280 = scmp.eq.s32.totalorder %s39, 0
      %p281 = por %p279, %p280
      %s283 = sadd.s32 %s282, 1
      %p286 = scmp.eq.s32.totalorder %s33, 3
      %p287 = scmp.ne.s32.totalorder %s282, %s284
      %p288 = scmp.eq.s32.totalorder %s33, 0
      %p289 = por %p287, %p288
      %p290 = scmp.ne.s32.totalorder %s282, %s284
      %p291 = scmp.eq.s32.totalorder %s38, 3
      %p292 = por %p290, %p291
      %p293 = scmp.ne.s32.totalorder %s284, %s285
      %p294 = scmp.eq.s32.totalorder %s38, 0
      %p295 = por %p293, %p294
      %p296 = scmp.ne.s32.totalorder %s284, %s285
      %p297 = scmp.eq.s32.totalorder %s39, 3
      %p298 = por %p296, %p297
      %p300 = scmp.ne.s32.totalorder %s285, %s299
      %p301 = scmp.eq.s32.totalorder %s39, 0
      %p302 = por %p300, %p301
      %s304 = sadd.s32 %s303, 1
      %p307 = scmp.eq.s32.totalorder %s33, 3
      %p308 = scmp.ne.s32.totalorder %s303, %s305
      %p309 = scmp.eq.s32.totalorder %s33, 0
      %p310 = por %p308, %p309
      %p311 = scmp.ne.s32.totalorder %s303, %s305
      %p312 = scmp.eq.s32.totalorder %s38, 3
      %p313 = por %p311, %p312
      %p314 = scmp.ne.s32.totalorder %s305, %s306
      %p315 = scmp.eq.s32.totalorder %s38, 0
      %p316 = por %p314, %p315
      %p317 = scmp.ne.s32.totalorder %s305, %s306
      %p318 = scmp.eq.s32.totalorder %s39, 3
      %p319 = por %p317, %p318
      %p321 = scmp.ne.s32.totalorder %s306, %s320
      %p322 = scmp.eq.s32.totalorder %s39, 0
      %p323 = por %p321, %p322
      %s325 = sadd.s32 %s324, 1
      %p328 = scmp.eq.s32.totalorder %s33, 3
      %p329 = scmp.ne.s32.totalorder %s324, %s326
      %p330 = scmp.eq.s32.totalorder %s33, 0
      %p331 = por %p329, %p330
      %p332 = scmp.ne.s32.totalorder %s324, %s326
      %p333 = scmp.eq.s32.totalorder %s38, 3
      %p334 = por %p332, %p333
      %p335 = scmp.ne.s32.totalorder %s326, %s327
      %p336 = scmp.eq.s32.totalorder %s38, 0
      %p337 = por %p335, %p336
      %p338 = scmp.ne.s32.totalorder %s326, %s327
      %p339 = scmp.eq.s32.totalorder %s39, 3
      %p340 = por %p338, %p339
      %p342 = scmp.ne.s32.totalorder %s327, %s341
      %p343 = scmp.eq.s32.totalorder %s39, 0
      %p344 = por %p342, %p343
      %s346 = sadd.s32 %s345, 1
      %p349 = scmp.eq.s32.totalorder %s33, 3
      %p350 = scmp.ne.s32.totalorder %s345, %s347
      %p351 = scmp.eq.s32.totalorder %s33, 0
      %p352 = por %p350, %p351
      %p353 = scmp.ne.s32.totalorder %s345, %s347
      %p354 = scmp.eq.s32.totalorder %s38, 3
      %p355 = por %p353, %p354
      %p356 = scmp.ne.s32.totalorder %s347, %s348
      %p357 = scmp.eq.s32.totalorder %s38, 0
      %p358 = por %p356, %p357
      %p359 = scmp.ne.s32.totalorder %s347, %s348
      %p360 = scmp.eq.s32.totalorder %s39, 3
      %p361 = por %p359, %p360
      %p363 = scmp.ne.s32.totalorder %s348, %s362
      %p364 = scmp.eq.s32.totalorder %s39, 0
      %p365 = por %p363, %p364
      %s366 = ssub.s32 %s33, %s40
      %p367 = scmp.eq.s32.totalorder %s366, 0
      %s369 = sadd.s32 %s368, 1
      %s370 = scalar_select %p367, %s368, %s369
      %p373 = pneg %p367
      %p374 = scmp.eq.s32.totalorder %s33, 3
      %p375 = por %p373, %p374
      %p376 = scmp.ne.s32.totalorder %s368, %s371
      %p377 = scmp.eq.s32.totalorder %s33, 0
      %p378 = por %p376, %p377
      %p379 = scmp.ne.s32.totalorder %s368, %s371
      %p380 = scmp.eq.s32.totalorder %s38, 3
      %p381 = por %p379, %p380
      %p382 = scmp.ne.s32.totalorder %s371, %s372
      %p383 = scmp.eq.s32.totalorder %s38, 0
      %p384 = por %p382, %p383
      %p385 = scmp.ne.s32.totalorder %s371, %s372
      %p386 = scmp.eq.s32.totalorder %s39, 3
      %p387 = por %p385, %p386
      %p389 = scmp.ne.s32.totalorder %s372, %s388
      %p390 = scmp.eq.s32.totalorder %s39, 0
      %p391 = por %p389, %p390
      %s393 = sadd.s32 %s392, 1
      %p396 = scmp.eq.s32.totalorder %s33, 3
      %p397 = scmp.ne.s32.totalorder %s392, %s394
      %p398 = scmp.eq.s32.totalorder %s33, 0
      %p399 = por %p397, %p398
      %p400 = scmp.ne.s32.totalorder %s392, %s394
      %p401 = scmp.eq.s32.totalorder %s38, 3
      %p402 = por %p400, %p401
      %p403 = scmp.ne.s32.totalorder %s394, %s395
      %p404 = scmp.eq.s32.totalorder %s38, 0
      %p405 = por %p403, %p404
      %p406 = scmp.ne.s32.totalorder %s394, %s395
      %p407 = scmp.eq.s32.totalorder %s39, 3
      %p408 = por %p406, %p407
      %p410 = scmp.ne.s32.totalorder %s395, %s409
      %p411 = scmp.eq.s32.totalorder %s39, 0
      %p412 = por %p410, %p411
      %s413 = ssub.s32 %s33, %s40
      %p414 = scmp.eq.s32.totalorder %s413, 0
      %s416 = sadd.s32 %s415, 1
      %s417 = scalar_select %p414, %s415, %s416
      %p420 = pneg %p414
      %p421 = scmp.eq.s32.totalorder %s33, 3
      %p422 = por %p420, %p421
      %p423 = scmp.ne.s32.totalorder %s415, %s418
      %p424 = scmp.eq.s32.totalorder %s33, 0
      %p425 = por %p423, %p424
      %p426 = scmp.ne.s32.totalorder %s415, %s418
      %p427 = scmp.eq.s32.totalorder %s38, 3
      %p428 = por %p426, %p427
      %p429 = scmp.ne.s32.totalorder %s418, %s419
      %p430 = scmp.eq.s32.totalorder %s38, 0
      %p431 = por %p429, %p430
      %p432 = scmp.ne.s32.totalorder %s418, %s419
      %p433 = scmp.eq.s32.totalorder %s39, 3
      %p434 = por %p432, %p433
      %p436 = scmp.ne.s32.totalorder %s419, %s435
      %p437 = scmp.eq.s32.totalorder %s39, 0
      %p438 = por %p436, %p437
      %p439 = scmp.le.s32.totalorder 1, %s33
      %p440 = scmp.lt.s32.totalorder %s33, 5
      %p441 = pnand %p439, %p440
      %p442 = pneg %p441
      // Predicated region
      $region9: #{tpu_custom_call.1} parent=5 // pred_check
        _
      $region10: #{tpu_custom_call.1} parent=5 // pred_check_branch
        %444 = sbr.rel (%p441) target = $region12
      $region11: #{tpu_custom_call.1} parent=5 // pred_region
        %s445 = ssub.s32 %s33, 1
        // Predicated region
        $region13: #{tpu_custom_call.1} parent=11 // pred_check
          %p446 = pneg %p80
        $region14: #{tpu_custom_call.1} parent=11 // pred_check_branch
          %448 = sbr.rel (%p446) target = $region16
        $region15: #{tpu_custom_call.1} parent=11 // pred_region
          _
        $region16: #{tpu_custom_call.1} parent=11 // pred_fallthru
          _
        // Predicated region
        $region17: #{tpu_custom_call.1} parent=11 // pred_check
          %p449 = pneg %p101
        $region18: #{tpu_custom_call.1} parent=11 // pred_check_branch
          %451 = sbr.rel (%p449) target = $region20
        $region19: #{tpu_custom_call.1} parent=11 // pred_region
          %453 = vsyncadd [#allocation11], 0
          %s455 = sshll.u32 %s2, 4
          %s456 = int_to_ptr.hbm [resolvable:$true] %s455
          %s457 = sshll.u32 [#allocation10], 4
          %s458 = int_to_ptr.vmem [resolvable:$true] %s457
          %460 = dma.hbm_to_vmem [thread:$0]  %s456, 16, %s458, [#allocation11]
        $region20: #{tpu_custom_call.1} parent=11 // pred_fallthru
          _
        // Predicated region
        $region21: #{tpu_custom_call.1} parent=11 // pred_check
          %p461 = pneg %p148
        $region22: #{tpu_custom_call.1} parent=11 // pred_check_branch
          %463 = sbr.rel (%p461) target = $region24
        $region23: #{tpu_custom_call.1} parent=11 // pred_region
          _
        $region24: #{tpu_custom_call.1} parent=11 // pred_fallthru
          _
        // Predicated region
        $region25: #{tpu_custom_call.1} parent=11 // pred_check
          %p464 = pneg %p169
        $region26: #{tpu_custom_call.1} parent=11 // pred_check_branch
          %466 = sbr.rel (%p464) target = $region28
        $region27: #{tpu_custom_call.1} parent=11 // pred_region
          _
        $region28: #{tpu_custom_call.1} parent=11 // pred_fallthru
          _
        // Predicated region
        $region29: #{tpu_custom_call.1} parent=11 // pred_check
          %p467 = pneg %p190
        $region30: #{tpu_custom_call.1} parent=11 // pred_check_branch
          %469 = sbr.rel (%p467) target = $region32
        $region31: #{tpu_custom_call.1} parent=11 // pred_region
          %471 = vsyncadd [#allocation11], 0
          %s473 = sshll.u32 %s6, 4
          %s474 = int_to_ptr.hbm [resolvable:$true] %s473
          %s475 = sshll.u32 [#allocation12], 4
          %s476 = int_to_ptr.vmem [resolvable:$true] %s475
          %478 = dma.hbm_to_vmem [thread:$0]  %s474, 16, %s476, [#allocation11]
        $region32: #{tpu_custom_call.1} parent=11 // pred_fallthru
          _
        // Predicated region
        $region33: #{tpu_custom_call.1} parent=11 // pred_check
          %p479 = pneg %p211
        $region34: #{tpu_custom_call.1} parent=11 // pred_check_branch
          %481 = sbr.rel (%p479) target = $region36
        $region35: #{tpu_custom_call.1} parent=11 // pred_region
          %483 = vsyncadd [#allocation14], 0
          %s485 = sshll.u32 %s7, 4
          %s486 = int_to_ptr.hbm [resolvable:$true] %s485
          %s487 = sshll.u32 [#allocation13], 4
          %s488 = int_to_ptr.vmem [resolvable:$true] %s487
          %490 = dma.hbm_to_vmem [thread:$0]  %s486, 16, %s488, [#allocation14]
        $region36: #{tpu_custom_call.1} parent=11 // pred_fallthru
          _
        // Predicated region
        $region37: #{tpu_custom_call.1} parent=11 // pred_check
          %p491 = pneg %p232
        $region38: #{tpu_custom_call.1} parent=11 // pred_check_branch
          %493 = sbr.rel (%p491) target = $region40
        $region39: #{tpu_custom_call.1} parent=11 // pred_region
          _
        $region40: #{tpu_custom_call.1} parent=11 // pred_fallthru
          _
        // Predicated region
        $region41: #{tpu_custom_call.1} parent=11 // pred_check
          %p494 = pneg %p253
        $region42: #{tpu_custom_call.1} parent=11 // pred_check_branch
          %496 = sbr.rel (%p494) target = $region44
        $region43: #{tpu_custom_call.1} parent=11 // pred_region
          _
        $region44: #{tpu_custom_call.1} parent=11 // pred_fallthru
          _
        // Predicated region
        $region45: #{tpu_custom_call.1} parent=11 // pred_check
          %p497 = pneg %p274
        $region46: #{tpu_custom_call.1} parent=11 // pred_check_branch
          %499 = sbr.rel (%p497) target = $region48
        $region47: #{tpu_custom_call.1} parent=11 // pred_region
          _
        $region48: #{tpu_custom_call.1} parent=11 // pred_fallthru
          _
        // Predicated region
        $region49: #{tpu_custom_call.1} parent=11 // pred_check
          %p500 = pneg %p295
        $region50: #{tpu_custom_call.1} parent=11 // pred_check_branch
          %502 = sbr.rel (%p500) target = $region52
        $region51: #{tpu_custom_call.1} parent=11 // pred_region
          %504 = vsyncadd [#allocation14], 0
          %s505 = sshll.u32 %s11, 4
          %s506 = int_to_ptr.hbm [resolvable:$true] %s505
          %s507 = sshll.u32 [#allocation15], 4
          %s508 = int_to_ptr.vmem [resolvable:$true] %s507
          %513 = dma.hbm_to_vmem [thread:$0]  %s506, 16128, %s508, [#allocation14], 128, 128, 8
        $region52: #{tpu_custom_call.1} parent=11 // pred_fallthru
          _
        // Predicated region
        $region53: #{tpu_custom_call.1} parent=11 // pred_check
          %p514 = pneg %p316
        $region54: #{tpu_custom_call.1} parent=11 // pred_check_branch
          %516 = sbr.rel (%p514) target = $region56
        $region55: #{tpu_custom_call.1} parent=11 // pred_region
          _
        $region56: #{tpu_custom_call.1} parent=11 // pred_fallthru
          _
        // Predicated region
        $region57: #{tpu_custom_call.1} parent=11 // pred_check
          %p517 = pneg %p337
        $region58: #{tpu_custom_call.1} parent=11 // pred_check_branch
          %519 = sbr.rel (%p517) target = $region60
        $region59: #{tpu_custom_call.1} parent=11 // pred_region
          %521 = vsyncadd [#allocation17], 0
          %s522 = sshll.u32 %s13, 4
          %s523 = int_to_ptr.hbm [resolvable:$true] %s522
          %s524 = sshll.u32 [#allocation16], 4
          %s525 = int_to_ptr.vmem [resolvable:$true] %s524
          %530 = dma.hbm_to_vmem [thread:$0]  %s523, 6144, %s525, [#allocation17], 128, 128, 8
        $region60: #{tpu_custom_call.1} parent=11 // pred_fallthru
          _
        // Predicated region
        $region61: #{tpu_custom_call.1} parent=11 // pred_check
          %p531 = pneg %p358
        $region62: #{tpu_custom_call.1} parent=11 // pred_check_branch
          %533 = sbr.rel (%p531) target = $region64
        $region63: #{tpu_custom_call.1} parent=11 // pred_region
          _
        $region64: #{tpu_custom_call.1} parent=11 // pred_fallthru
          _
        // Predicated region
        $region65: #{tpu_custom_call.1} parent=11 // pred_check
          %p534 = pneg %p405
        $region66: #{tpu_custom_call.1} parent=11 // pred_check_branch
          %536 = sbr.rel (%p534) target = $region68
        $region67: #{tpu_custom_call.1} parent=11 // pred_region
          _
        $region68: #{tpu_custom_call.1} parent=11 // pred_fallthru
          _
      $region12: #{tpu_custom_call.1} parent=5 // pred_fallthru
        _
      %p537 = scmp.lt.s32.totalorder %s33, 4
      // Predicated region
      $region69: #{tpu_custom_call.1} parent=5 // pred_check
        %p538 = pneg %p537
      $region70: #{tpu_custom_call.1} parent=5 // pred_check_branch
        %540 = sbr.rel (%p538) target = $region72
      $region71: #{tpu_custom_call.1} parent=5 // pred_region
        // Predicated region
        $region73: #{tpu_custom_call.1} parent=71 // pred_check
          %p541 = pneg %p53
        $region74: #{tpu_custom_call.1} parent=71 // pred_check_branch
          %543 = sbr.rel (%p541) target = $region76
        $region75: #{tpu_custom_call.1} parent=71 // pred_region
          %s544 = sand.u32 %s43, 1
          %s545 = scalar_lea.sflag [#allocation8], %s544
          %s546 = sand.u32 %s43, 1
          %s547 = smul.addr %s546, 64
          %s548 = scalar_lea.vmem [#allocation7], %s547
          %550 = vsyncadd %s545, 0
          %s551 = smul.addr %s33, 8
          %s552 = smul.addr %s551, 8
          %s553 = scalar_lea.hbm %s0, %s552
          %s554 = sshll.u32 %s553, 4
          %s555 = int_to_ptr.hbm [resolvable:$true] %s554
          %s556 = sshll.u32 %s548, 4
          %s557 = int_to_ptr.vmem [resolvable:$true] %s556
          %562 = dma.hbm_to_vmem [thread:$0]  %s555, 1024, %s557, %s545, 256, 256, 16
        $region76: #{tpu_custom_call.1} parent=71 // pred_fallthru
          _
        // Predicated region
        $region77: #{tpu_custom_call.1} parent=71 // pred_check
          %p563 = pneg %p121
        $region78: #{tpu_custom_call.1} parent=71 // pred_check_branch
          %565 = sbr.rel (%p563) target = $region80
        $region79: #{tpu_custom_call.1} parent=71 // pred_region
          %p566 = scmp.lt.s32.totalorder %s33, 3
          %s567 = scalar_select %p566, %s33, 3
          %s568 = scalar_lea.vmem %s3, %s567
        $region80: #{tpu_custom_call.1} parent=71 // pred_fallthru
          _
        // Predicated region
        $region81: #{tpu_custom_call.1} parent=71 // pred_check
          %p569 = pneg %p378
        $region82: #{tpu_custom_call.1} parent=71 // pred_check_branch
          %571 = sbr.rel (%p569) target = $region84
        $region83: #{tpu_custom_call.1} parent=71 // pred_region
          %p572 = scmp.lt.s32.totalorder %s33, 3
          %s573 = scalar_select %p572, %s33, 3
          %s574 = scalar_lea.vmem %s15, %s573
        $region84: #{tpu_custom_call.1} parent=71 // pred_fallthru
          _
      $region72: #{tpu_custom_call.1} parent=5 // pred_fallthru
        _
      %p575 = scmp.le.s32.totalorder 1, %s33
      %p576 = scmp.lt.s32.totalorder %s33, 5
      %p577 = pnand %p575, %p576
      %p578 = pneg %p577
      // Predicated region
      $region85: #{tpu_custom_call.1} parent=5 // pred_check
        _
      $region86: #{tpu_custom_call.1} parent=5 // pred_check_branch
        %580 = sbr.rel (%p577) target = $region88
      $region87: #{tpu_custom_call.1} parent=5 // pred_region
        %s581 = ssub.s32 %s33, 1
        %s582 = sand.u32 %s46, 1
        %s583 = scalar_lea.sflag [#allocation8], %s582
        %s584 = sand.u32 %s46, 1
        %s585 = smul.addr %s584, 64
        %s586 = scalar_lea.vmem [#allocation7], %s585
        // Predicated region
        $region89: #{tpu_custom_call.1} parent=87 // pred_check
          %p587 = pneg %p59
        $region90: #{tpu_custom_call.1} parent=87 // pred_check_branch
          %589 = sbr.rel (%p587) target = $region92
        $region91: #{tpu_custom_call.1} parent=87 // pred_region
          %591 = dma.done %s583, 1024
        $region92: #{tpu_custom_call.1} parent=87 // pred_fallthru
          _
        // Predicated region
        $region93: #{tpu_custom_call.1} parent=87 // pred_check
          %p592 = pneg %p101
        $region94: #{tpu_custom_call.1} parent=87 // pred_check_branch
          %594 = sbr.rel (%p592) target = $region96
        $region95: #{tpu_custom_call.1} parent=87 // pred_region
          %596 = dma.done [#allocation11], 16
        $region96: #{tpu_custom_call.1} parent=87 // pred_fallthru
          _
        // Predicated region
        $region97: #{tpu_custom_call.1} parent=87 // pred_check
          %p597 = pneg %p190
        $region98: #{tpu_custom_call.1} parent=87 // pred_check_branch
          %599 = sbr.rel (%p597) target = $region100
        $region99: #{tpu_custom_call.1} parent=87 // pred_region
          %601 = dma.done [#allocation11], 16
        $region100: #{tpu_custom_call.1} parent=87 // pred_fallthru
          _
        // Predicated region
        $region101: #{tpu_custom_call.1} parent=87 // pred_check
          %p602 = pneg %p211
        $region102: #{tpu_custom_call.1} parent=87 // pred_check_branch
          %604 = sbr.rel (%p602) target = $region104
        $region103: #{tpu_custom_call.1} parent=87 // pred_region
          %606 = dma.done [#allocation14], 16
        $region104: #{tpu_custom_call.1} parent=87 // pred_fallthru
          _
        // Predicated region
        $region105: #{tpu_custom_call.1} parent=87 // pred_check
          %p607 = pneg %p295
        $region106: #{tpu_custom_call.1} parent=87 // pred_check_branch
          %609 = sbr.rel (%p607) target = $region108
        $region107: #{tpu_custom_call.1} parent=87 // pred_region
          %611 = dma.done [#allocation14], 16128
        $region108: #{tpu_custom_call.1} parent=87 // pred_fallthru
          _
        // Predicated region
        $region109: #{tpu_custom_call.1} parent=87 // pred_check
          %p612 = pneg %p337
        $region110: #{tpu_custom_call.1} parent=87 // pred_check_branch
          %614 = sbr.rel (%p612) target = $region112
        $region111: #{tpu_custom_call.1} parent=87 // pred_region
          %616 = dma.done [#allocation17], 6144
        $region112: #{tpu_custom_call.1} parent=87 // pred_fallthru
          _
        %s617 = sand.u32 %s46, 1
        %s618 = scalar_lea.sflag [#allocation8], %s617
        %s619 = sand.u32 %s46, 1
        %s620 = smul.addr %s619, 64
        %s621 = scalar_lea.vmem [#allocation7], %s620
        %p622 = pneg %p59
        %p623 = pneg %p56
        %p624 = pneg %p80
        %p625 = pneg %p77
        %p626 = pneg %p101
        %p627 = pneg %p98
        %p628 = scmp.lt.s32.totalorder %s38, 3
        %s629 = scalar_select %p628, %s38, 3
        %s630 = scalar_lea.vmem %s3, %s629
        %p631 = pneg %p127
        %p632 = pneg %p124
        %p633 = pneg %p148
        %p634 = pneg %p145
        %p635 = pneg %p169
        %p636 = pneg %p166
        %p637 = pneg %p190
        %p638 = pneg %p187
        %p639 = pneg %p211
        %p640 = pneg %p208
        %p641 = pneg %p232
        %p642 = pneg %p229
        %p643 = pneg %p253
        %p644 = pneg %p250
        %p645 = pneg %p274
        %p646 = pneg %p271
        %p647 = pneg %p295
        %p648 = pneg %p292
        %p649 = pneg %p316
        %p650 = pneg %p313
        %p651 = pneg %p337
        %p652 = pneg %p334
        %p653 = pneg %p358
        %p654 = pneg %p355
        %p655 = scmp.lt.s32.totalorder %s38, 3
        %s656 = scalar_select %p655, %s38, 3
        %s657 = scalar_lea.vmem %s15, %s656
        %p658 = pneg %p384
        %p659 = pneg %p381
        %p660 = pneg %p405
        %p661 = pneg %p402
        %p662 = pneg %p431
        %p663 = pneg %p428
        %s664 = sand.u32 %s418, 1
        %s665 = scalar_lea.sflag [#allocation9], %s664
        %s666 = sand.u32 %s418, 1
        %s667 = smul.addr %s666, 64
        %s668 = scalar_lea.vmem [#allocation18], %s667
        %p669 = scmp.lt.s32.totalorder %s38, 3
        %s670 = scalar_select %p669, %s38, 3
        %s671 = scalar_lea.vmem %s3, %s670
        %p672 = scmp.lt.s32.totalorder %s38, 3
        %s673 = scalar_select %p672, %s38, 3
        %s674 = scalar_lea.vmem %s15, %s673
        %p675 = scmp.eq.s32.totalorder %s38, 0
        // Predicated region
        $region113: #{tpu_custom_call.1} parent=87 // pred_check
          %p676 = pneg %p675
        $region114: #{tpu_custom_call.1} parent=87 // pred_check_branch
          %678 = sbr.rel (%p676) target = $region116
        $region115: #{tpu_custom_call.1} parent=87 // pred_region
          %679 = vst [vmem:[#allocation2] sm:$0xff] 0.0
          %680 = vst [vmem:[#allocation2 + $0x8] sm:$0xff] 0.0
          %681 = vst [vmem:[#allocation2 + $0x10] sm:$0xff] 0.0
          %682 = vst [vmem:[#allocation2 + $0x18] sm:$0xff] 0.0
          %683 = vst [vmem:[#allocation2 + $0x20] sm:$0xff] 0.0
          %684 = vst [vmem:[#allocation2 + $0x28] sm:$0xff] 0.0
          %685 = vst [vmem:[#allocation2 + $0x30] sm:$0xff] 0.0
          %686 = vst [vmem:[#allocation2 + $0x38] sm:$0xff] 0.0
          %687 = vst [vmem:[#allocation3] sm:$0xff] 0.0
          %688 = vst [vmem:[#allocation3 + $0x8] sm:$0xff] 0.0
          %689 = vst [vmem:[#allocation3 + $0x10] sm:$0xff] 0.0
          %690 = vst [vmem:[#allocation3 + $0x18] sm:$0xff] 0.0
          %691 = vst [vmem:[#allocation3 + $0x20] sm:$0x3] 0.0
          %692 = vst [vmem:[#allocation3 + $0x28] sm:$0x3] 0.0
          %693 = vst [vmem:[#allocation3 + $0x30] sm:$0xff] 0.0
          %694 = vst [vmem:[#allocation3 + $0x38] sm:$0xff] 0.0
          %695 = vst [vmem:[#allocation3 + $0x40] sm:$0xff] 0.0
          %696 = vst [vmem:[#allocation3 + $0x48] sm:$0xff] 0.0
          %697 = vst [vmem:[#allocation3 + $0x50] sm:$0x3] 0.0
          %698 = vst [vmem:[#allocation3 + $0x58] sm:$0x3] 0.0
          %699 = vst [vmem:[#allocation4] sm:$0xff] 0.0
          %vm700 = vcmask 130048
          %701 = vst.msk [vmem:[#allocation4 + $0x8] sm:$0xff] %vm700, 0.0
          %702 = vst [vmem:[#allocation4 + $0x10] sm:$0xff] 0.0
          %703 = vst.msk [vmem:[#allocation4 + $0x18] sm:$0xff] %vm700, 0.0
          %704 = vst [vmem:[#allocation4 + $0x20] sm:$0x3f] 0.0
          %vm705 = vcmask 128000
          %706 = vst.msk [vmem:[#allocation4 + $0x28] sm:$0x3f] %vm705, 0.0
          %707 = vst [vmem:[#allocation4 + $0x30] sm:$0xff] 0.0
          %708 = vst.msk [vmem:[#allocation4 + $0x38] sm:$0xff] %vm700, 0.0
          %709 = vst [vmem:[#allocation4 + $0x40] sm:$0xff] 0.0
          %710 = vst.msk [vmem:[#allocation4 + $0x48] sm:$0xff] %vm700, 0.0
          %711 = vst [vmem:[#allocation4 + $0x50] sm:$0x3f] 0.0
          %712 = vst.msk [vmem:[#allocation4 + $0x58] sm:$0x3f] %vm705, 0.0
          %713 = vst [vmem:[#allocation5] sm:$0xff] 0.0
          %714 = vst [vmem:[#allocation5 + $0x8] sm:$0xff] 0.0
          %715 = vst [vmem:[#allocation5 + $0x10] sm:$0x3] 0.0
          %716 = vst [vmem:[#allocation5 + $0x18] sm:$0xff] 0.0
          %717 = vst [vmem:[#allocation5 + $0x20] sm:$0xff] 0.0
          %718 = vst [vmem:[#allocation5 + $0x28] sm:$0x3] 0.0
        $region116: #{tpu_custom_call.1} parent=87 // pred_fallthru
          _
        %v719 = vld [vmem:[%s586] sm:$0xff]
        %v720 = vld [vmem:[%s586 + $0x8] sm:$0xff]
        %v721 = vld [vmem:[%s586 + $0x10] sm:$0xff]
        %v722 = vld [vmem:[%s586 + $0x18] sm:$0xff]
        %v723 = vld [vmem:[%s586 + $0x20] sm:$0xff]
        %v724 = vld [vmem:[%s586 + $0x28] sm:$0xff]
        %v725 = vld [vmem:[%s586 + $0x30] sm:$0xff]
        %v726 = vld [vmem:[%s586 + $0x38] sm:$0xff]
        %v727 = vld [vmem:[#allocation2] sm:$0xff]
        %v728 = vld [vmem:[#allocation2 + $0x8] sm:$0xff]
        %v729 = vld [vmem:[#allocation2 + $0x10] sm:$0xff]
        %v730 = vld [vmem:[#allocation2 + $0x18] sm:$0xff]
        %v731 = vld [vmem:[#allocation2 + $0x20] sm:$0xff]
        %v732 = vld [vmem:[#allocation2 + $0x28] sm:$0xff]
        %v733 = vld [vmem:[#allocation2 + $0x30] sm:$0xff]
        %v734 = vld [vmem:[#allocation2 + $0x38] sm:$0xff]
        %vm735 = vcmp.gt.f32.partialorder %v727, 0.35
        %vm736 = vcmp.gt.f32.partialorder %v728, 0.35
        %vm737 = vcmp.gt.f32.partialorder %v729, 0.35
        %vm738 = vcmp.gt.f32.partialorder %v730, 0.35
        %vm739 = vcmp.gt.f32.partialorder %v731, 0.35
        %vm740 = vcmp.gt.f32.partialorder %v732, 0.35
        %vm741 = vcmp.gt.f32.partialorder %v733, 0.35
        %vm742 = vcmp.gt.f32.partialorder %v734, 0.35
        %v743 = vsel %vm735, 1, 0
        %v744 = vsel %vm736, 1, 0
        %v745 = vsel %vm737, 1, 0
        %v746 = vsel %vm738, 1, 0
        %v747 = vsel %vm739, 1, 0
        %v748 = vsel %vm740, 1, 0
        %v749 = vsel %vm741, 1, 0
        %v750 = vsel %vm742, 1, 0
        %v751 = vcvt.s32.f32 %v743
        %v752 = vcvt.s32.f32 %v744
        %v753 = vcvt.s32.f32 %v745
        %v754 = vcvt.s32.f32 %v746
        %v755 = vcvt.s32.f32 %v747
        %v756 = vcvt.s32.f32 %v748
        %v757 = vcvt.s32.f32 %v749
        %v758 = vcvt.s32.f32 %v750
        %v759 = vmul.f32 %v727, 0.6
        %v760 = vmul.f32 %v728, 0.6
        %v761 = vmul.f32 %v729, 0.6
        %v762 = vmul.f32 %v730, 0.6
        %v763 = vmul.f32 %v731, 0.6
        %v764 = vmul.f32 %v732, 0.6
        %v765 = vmul.f32 %v733, 0.6
        %v766 = vmul.f32 %v734, 0.6
        %v767 = vadd.f32 %v759, %v719
        %v768 = vadd.f32 %v760, %v720
        %v769 = vadd.f32 %v761, %v721
        %v770 = vadd.f32 %v762, %v722
        %v771 = vadd.f32 %v763, %v723
        %v772 = vadd.f32 %v764, %v724
        %v773 = vadd.f32 %v765, %v725
        %v774 = vadd.f32 %v766, %v726
        %v775 = vmul.f32 %v751, 0.35
        %v776 = vmul.f32 %v752, 0.35
        %v777 = vmul.f32 %v753, 0.35
        %v778 = vmul.f32 %v754, 0.35
        %v779 = vmul.f32 %v755, 0.35
        %v780 = vmul.f32 %v756, 0.35
        %v781 = vmul.f32 %v757, 0.35
        %v782 = vmul.f32 %v758, 0.35
        %v783 = vsub.f32 %v767, %v775
        %v784 = vsub.f32 %v768, %v776
        %v785 = vsub.f32 %v769, %v777
        %v786 = vsub.f32 %v770, %v778
        %v787 = vsub.f32 %v771, %v779
        %v788 = vsub.f32 %v772, %v780
        %v789 = vsub.f32 %v773, %v781
        %v790 = vsub.f32 %v774, %v782
        %vm791 = vcmp.gt.f32.partialorder %v783, 0.35
        %vm792 = vcmp.gt.f32.partialorder %v784, 0.35
        %vm793 = vcmp.gt.f32.partialorder %v785, 0.35
        %vm794 = vcmp.gt.f32.partialorder %v786, 0.35
        %vm795 = vcmp.gt.f32.partialorder %v787, 0.35
        %vm796 = vcmp.gt.f32.partialorder %v788, 0.35
        %vm797 = vcmp.gt.f32.partialorder %v789, 0.35
        %vm798 = vcmp.gt.f32.partialorder %v790, 0.35
        %v799 = vsel %vm791, 1, 0
        %v800 = vsel %vm792, 1, 0
        %v801 = vsel %vm793, 1, 0
        %v802 = vsel %vm794, 1, 0
        %v803 = vsel %vm795, 1, 0
        %v804 = vsel %vm796, 1, 0
        %v805 = vsel %vm797, 1, 0
        %v806 = vsel %vm798, 1, 0
        %v807 = vcvt.s32.f32 %v799
        %v808 = vcvt.s32.f32 %v800
        %v809 = vcvt.s32.f32 %v801
        %v810 = vcvt.s32.f32 %v802
        %v811 = vcvt.s32.f32 %v803
        %v812 = vcvt.s32.f32 %v804
        %v813 = vcvt.s32.f32 %v805
        %v814 = vcvt.s32.f32 %v806
        %815 = vst [vmem:[#allocation2] sm:$0xff] %v783
        %816 = vst [vmem:[#allocation2 + $0x8] sm:$0xff] %v784
        %817 = vst [vmem:[#allocation2 + $0x10] sm:$0xff] %v785
        %818 = vst [vmem:[#allocation2 + $0x18] sm:$0xff] %v786
        %819 = vst [vmem:[#allocation2 + $0x20] sm:$0xff] %v787
        %820 = vst [vmem:[#allocation2 + $0x28] sm:$0xff] %v788
        %821 = vst [vmem:[#allocation2 + $0x30] sm:$0xff] %v789
        %822 = vst [vmem:[#allocation2 + $0x38] sm:$0xff] %v790
        %vm831 = vcmask 1040384
        %v832 = vrot.slane %v807, 7
        %v833 = vrot.slane %v808, 7
        %v834 = vrot.slane %v809, 7
        %v835 = vsel %vm831, %v832, %v834
        %v836 = vrot.slane %v810, 7
        %v837 = vsel %vm831, %v833, %v836
        %v838 = vrot.slane %v811, 7
        %v839 = vrot.slane %v812, 7
        %v840 = vrot.slane %v813, 7
        %v841 = vsel %vm831, %v838, %v840
        %v842 = vrot.slane %v814, 7
        %v843 = vsel %vm831, %v839, %v842
        %856 = vst [vmem:[#allocation3] sm:$0xfe] %v832
        %857 = vst [vmem:[#allocation3 + $0x8] sm:$0xfe] %v833
        %858 = vst [vmem:[#allocation3 + $0x10] sm:$0xff] %v835
        %859 = vst [vmem:[#allocation3 + $0x18] sm:$0xff] %v837
        %860 = vst [vmem:[#allocation3 + $0x20] sm:$0x1] %v834
        %861 = vst [vmem:[#allocation3 + $0x28] sm:$0x1] %v836
        %862 = vst [vmem:[#allocation3 + $0x30] sm:$0xfe] %v838
        %863 = vst [vmem:[#allocation3 + $0x38] sm:$0xfe] %v839
        %864 = vst [vmem:[#allocation3 + $0x40] sm:$0xff] %v841
        %865 = vst [vmem:[#allocation3 + $0x48] sm:$0xff] %v843
        %866 = vst [vmem:[#allocation3 + $0x50] sm:$0x1] %v840
        %867 = vst [vmem:[#allocation3 + $0x58] sm:$0x1] %v842
        %v868 = vld [vmem:[#allocation10] sm:$0x1]
        %v869 = vld [vmem:[#allocation3] sm:$0xff]
        %v870 = vld [vmem:[#allocation3 + $0x8] sm:$0xff]
        %v871 = vld [vmem:[#allocation3 + $0x10] sm:$0xff]
        %v872 = vld [vmem:[#allocation3 + $0x18] sm:$0xff]
        %v873 = vld [vmem:[#allocation3 + $0x30] sm:$0xff]
        %v874 = vld [vmem:[#allocation3 + $0x38] sm:$0xff]
        %v875 = vld [vmem:[#allocation3 + $0x40] sm:$0xff]
        %v876 = vld [vmem:[#allocation3 + $0x48] sm:$0xff]
        %v877 = vpack.c.bf16 %v871, %v869
        %v878 = vpack.c.bf16 %v872, %v870
        %v879 = vpack.c.bf16 %v875, %v873
        %v880 = vpack.c.bf16 %v876, %v874
        %v881 = vld [vmem:[%s1] sm:$0xf]
        %v882 = vld [vmem:[%s1 + $0x4] sm:$0xf]
        %v883 = vld [vmem:[%s1 + $0x8] sm:$0xf]
        %v884 = vld [vmem:[%s1 + $0xc] sm:$0xf]
        %v885 = vld [vmem:[%s1 + $0x10] sm:$0xf]
        %v886 = vld [vmem:[%s1 + $0x14] sm:$0xf]
        %v887 = vld [vmem:[%s1 + $0x18] sm:$0xf]
        %v888 = vld [vmem:[%s1 + $0x1c] sm:$0xf]
        %v889 = vld [vmem:[%s1 + $0x20] sm:$0xf]
        %v890 = vld [vmem:[%s1 + $0x24] sm:$0xf]
        %v891 = vld [vmem:[%s1 + $0x28] sm:$0xf]
        %v892 = vld [vmem:[%s1 + $0x2c] sm:$0xf]
        %v893 = vld [vmem:[%s1 + $0x30] sm:$0xf]
        %v894 = vld [vmem:[%s1 + $0x34] sm:$0xf]
        %v895 = vld [vmem:[%s1 + $0x38] sm:$0xf]
        %v896 = vld [vmem:[%s1 + $0x3c] sm:$0xf]
        %v897 = vld [vmem:[%s1 + $0x40] sm:$0xf]
        %v898 = vld [vmem:[%s1 + $0x44] sm:$0xf]
        %v899 = vld [vmem:[%s1 + $0x48] sm:$0xf]
        %v900 = vld [vmem:[%s1 + $0x4c] sm:$0xf]
        %v901 = vld [vmem:[%s1 + $0x50] sm:$0xf]
        %v902 = vld [vmem:[%s1 + $0x54] sm:$0xf]
        %v903 = vld [vmem:[%s1 + $0x58] sm:$0xf]
        %v904 = vld [vmem:[%s1 + $0x5c] sm:$0xf]
        %v905 = vld [vmem:[%s1 + $0x60] sm:$0xf]
        %v906 = vld [vmem:[%s1 + $0x64] sm:$0xf]
        %v907 = vld [vmem:[%s1 + $0x68] sm:$0xf]
        %v908 = vld [vmem:[%s1 + $0x6c] sm:$0xf]
        %v909 = vld [vmem:[%s1 + $0x70] sm:$0xf]
        %v910 = vld [vmem:[%s1 + $0x74] sm:$0xf]
        %v911 = vld [vmem:[%s1 + $0x78] sm:$0xf]
        %v912 = vld [vmem:[%s1 + $0x7c] sm:$0xf]
        %v913 = vld [vmem:[#allocation3] sm:$0xfe]
        %v914 = vld [vmem:[#allocation3 + $0x8] sm:$0xfe]
        %v915 = vld [vmem:[#allocation3 + $0x20] sm:$0x1]
        %v916 = vld [vmem:[#allocation3 + $0x28] sm:$0x1]
        %v917 = vld [vmem:[#allocation3 + $0x30] sm:$0xfe]
        %v918 = vld [vmem:[#allocation3 + $0x38] sm:$0xfe]
        %v919 = vld [vmem:[#allocation3 + $0x50] sm:$0x1]
        %v920 = vld [vmem:[#allocation3 + $0x58] sm:$0x1]
        %vm933 = vcmask 1046528
        %v934 = vrot.slane %v913, 1
        %v935 = vrot.slane %v871, 1
        %v936 = vsel %vm933, %v934, %v935
        %v937 = vrot.slane %v914, 1
        %v938 = vrot.slane %v872, 1
        %v939 = vsel %vm933, %v937, %v938
        %v940 = vrot.slane %v915, 1
        %v941 = vsel %vm933, %v935, %v940
        %v942 = vrot.slane %v916, 1
        %v943 = vsel %vm933, %v938, %v942
        %v944 = vrot.slane %v917, 1
        %v945 = vrot.slane %v875, 1
        %v946 = vsel %vm933, %v944, %v945
        %v947 = vrot.slane %v918, 1
        %v948 = vrot.slane %v876, 1
        %v949 = vsel %vm933, %v947, %v948
        %v950 = vrot.slane %v919, 1
        %v951 = vsel %vm933, %v945, %v950
        %v952 = vrot.slane %v920, 1
        %v953 = vsel %vm933, %v948, %v952
        %v962 = vpack.c.bf16 %v941, %v936
        %v963 = vpack.c.bf16 %v943, %v939
        %v964 = vpack.c.bf16 %v951, %v946
        %v965 = vpack.c.bf16 %v953, %v949
        %s966 = scalar_lea.vmem %s1, 128
        %v967 = vld [vmem:[%s966] sm:$0xf]
        %v968 = vld [vmem:[%s966 + $0x4] sm:$0xf]
        %v969 = vld [vmem:[%s966 + $0x8] sm:$0xf]
        %v970 = vld [vmem:[%s966 + $0xc] sm:$0xf]
        %v971 = vld [vmem:[%s966 + $0x10] sm:$0xf]
        %v972 = vld [vmem:[%s966 + $0x14] sm:$0xf]
        %v973 = vld [vmem:[%s966 + $0x18] sm:$0xf]
        %v974 = vld [vmem:[%s966 + $0x1c] sm:$0xf]
        %v975 = vld [vmem:[%s966 + $0x20] sm:$0xf]
        %v976 = vld [vmem:[%s966 + $0x24] sm:$0xf]
        %v977 = vld [vmem:[%s966 + $0x28] sm:$0xf]
        %v978 = vld [vmem:[%s966 + $0x2c] sm:$0xf]
        %v979 = vld [vmem:[%s966 + $0x30] sm:$0xf]
        %v980 = vld [vmem:[%s966 + $0x34] sm:$0xf]
        %v981 = vld [vmem:[%s966 + $0x38] sm:$0xf]
        %v982 = vld [vmem:[%s966 + $0x3c] sm:$0xf]
        %v983 = vld [vmem:[%s966 + $0x40] sm:$0xf]
        %v984 = vld [vmem:[%s966 + $0x44] sm:$0xf]
        %v985 = vld [vmem:[%s966 + $0x48] sm:$0xf]
        %v986 = vld [vmem:[%s966 + $0x4c] sm:$0xf]
        %v987 = vld [vmem:[%s966 + $0x50] sm:$0xf]
        %v988 = vld [vmem:[%s966 + $0x54] sm:$0xf]
        %v989 = vld [vmem:[%s966 + $0x58] sm:$0xf]
        %v990 = vld [vmem:[%s966 + $0x5c] sm:$0xf]
        %v991 = vld [vmem:[%s966 + $0x60] sm:$0xf]
        %v992 = vld [vmem:[%s966 + $0x64] sm:$0xf]
        %v993 = vld [vmem:[%s966 + $0x68] sm:$0xf]
        %v994 = vld [vmem:[%s966 + $0x6c] sm:$0xf]
        %v995 = vld [vmem:[%s966 + $0x70] sm:$0xf]
        %v996 = vld [vmem:[%s966 + $0x74] sm:$0xf]
        %v997 = vld [vmem:[%s966 + $0x78] sm:$0xf]
        %v998 = vld [vmem:[%s966 + $0x7c] sm:$0xf]
        %v1031 = vunpack.c.l.b16 %v967
        %v1032 = vunpack.c.l.b16 %v968
        %v1033 = vunpack.c.l.b16 %v969
        %v1034 = vunpack.c.l.b16 %v970
        %v1035 = vunpack.c.l.b16 %v971
        %v1036 = vunpack.c.l.b16 %v972
        %v1037 = vunpack.c.l.b16 %v973
        %v1038 = vunpack.c.l.b16 %v974
        %v1039 = vunpack.c.l.b16 %v975
        %v1040 = vunpack.c.l.b16 %v976
        %v1041 = vunpack.c.l.b16 %v977
        %v1042 = vunpack.c.l.b16 %v978
        %v1043 = vunpack.c.l.b16 %v979
        %v1044 = vunpack.c.l.b16 %v980
        %v1045 = vunpack.c.l.b16 %v981
        %v1046 = vunpack.c.l.b16 %v982
        %v1047 = vunpack.c.l.b16 %v983
        %v1048 = vunpack.c.l.b16 %v984
        %v1049 = vunpack.c.l.b16 %v985
        %v1050 = vunpack.c.l.b16 %v986
        %v1051 = vunpack.c.l.b16 %v987
        %v1052 = vunpack.c.l.b16 %v988
        %v1053 = vunpack.c.l.b16 %v989
        %v1054 = vunpack.c.l.b16 %v990
        %v1055 = vunpack.c.l.b16 %v991
        %v1056 = vunpack.c.l.b16 %v992
        %v1057 = vunpack.c.l.b16 %v993
        %v1058 = vunpack.c.l.b16 %v994
        %v1059 = vunpack.c.l.b16 %v995
        %v1060 = vunpack.c.l.b16 %v996
        %v1061 = vunpack.c.l.b16 %v997
        %v1062 = vunpack.c.l.b16 %v998
        %v1063 = vpack.c.b16 %v1032, %v1031
        %v1064 = vpack.c.b16 %v1034, %v1033
        %v1065 = vpack.c.b16 %v1036, %v1035
        %v1066 = vpack.c.b16 %v1038, %v1037
        %v1067 = vpack.c.b16 %v1040, %v1039
        %v1068 = vpack.c.b16 %v1042, %v1041
        %v1069 = vpack.c.b16 %v1044, %v1043
        %v1070 = vpack.c.b16 %v1046, %v1045
        %v1071 = vpack.c.b16 %v1048, %v1047
        %v1072 = vpack.c.b16 %v1050, %v1049
        %v1073 = vpack.c.b16 %v1052, %v1051
        %v1074 = vpack.c.b16 %v1054, %v1053
        %v1075 = vpack.c.b16 %v1056, %v1055
        %v1076 = vpack.c.b16 %v1058, %v1057
        %v1077 = vpack.c.b16 %v1060, %v1059
        %v1078 = vpack.c.b16 %v1062, %v1061
        %1095 = vmatpush.bf16.msra.mxu0 %v1070
        %1096 = vmatpush.bf16.msra.mxu0 %v1069
        %1097 = vmatpush.bf16.msra.mxu0 %v1068
        %1098 = vmatpush.bf16.msra.mxu0 %v1067
        %1099 = vmatpush.bf16.msra.mxu0 %v1066
        %1100 = vmatpush.bf16.msra.mxu0 %v1065
        %1101 = vmatpush.bf16.msra.mxu0 %v1064
        %1102 = vmatpush.bf16.msra.mxu0 %v1063
        %1103 = vmatmul.bf16.gmra.mxu0 %v962
        %v1104 = vpop.f32.mrf.mxu0
        %v1105 = vadd.f32 0.0, %v1104
        %v1106 = vpop.f32.mrf.mxu0
        %v1107 = vadd.f32 0.0, %v1106
        %1108 = vmatmul.bf16.gmra.mxu0 %v964
        %v1109 = vpop.f32.mrf.mxu0
        %v1110 = vadd.f32 0.0, %v1109
        %v1111 = vpop.f32.mrf.mxu0
        %v1112 = vadd.f32 0.0, %v1111
        %1113 = vdwg.mxu0
        %1114 = vmatpush.bf16.msra.mxu0 %v1078
        %1115 = vmatpush.bf16.msra.mxu0 %v1077
        %1116 = vmatpush.bf16.msra.mxu0 %v1076
        %1117 = vmatpush.bf16.msra.mxu0 %v1075
        %1118 = vmatpush.bf16.msra.mxu0 %v1074
        %1119 = vmatpush.bf16.msra.mxu0 %v1073
        %1120 = vmatpush.bf16.msra.mxu0 %v1072
        %1121 = vmatpush.bf16.msra.mxu0 %v1071
        %1122 = vmatmul.bf16.gmra.mxu0 %v963
        %v1123 = vpop.f32.mrf.mxu0
        %v1124 = vadd.f32 %v1105, %v1123
        %v1125 = vpop.f32.mrf.mxu0
        %v1126 = vadd.f32 %v1107, %v1125
        %1127 = vmatmul.bf16.gmra.mxu0 %v965
        %v1128 = vpop.f32.mrf.mxu0
        %v1129 = vadd.f32 %v1110, %v1128
        %v1130 = vpop.f32.mrf.mxu0
        %v1131 = vadd.f32 %v1112, %v1130
        %1132 = vdwg.mxu0
        %v1165 = vunpack.c.l.b16 %v881
        %v1166 = vunpack.c.l.b16 %v882
        %v1167 = vunpack.c.l.b16 %v883
        %v1168 = vunpack.c.l.b16 %v884
        %v1169 = vunpack.c.l.b16 %v885
        %v1170 = vunpack.c.l.b16 %v886
        %v1171 = vunpack.c.l.b16 %v887
        %v1172 = vunpack.c.l.b16 %v888
        %v1173 = vunpack.c.l.b16 %v889
        %v1174 = vunpack.c.l.b16 %v890
        %v1175 = vunpack.c.l.b16 %v891
        %v1176 = vunpack.c.l.b16 %v892
        %v1177 = vunpack.c.l.b16 %v893
        %v1178 = vunpack.c.l.b16 %v894
        %v1179 = vunpack.c.l.b16 %v895
        %v1180 = vunpack.c.l.b16 %v896
        %v1181 = vunpack.c.l.b16 %v897
        %v1182 = vunpack.c.l.b16 %v898
        %v1183 = vunpack.c.l.b16 %v899
        %v1184 = vunpack.c.l.b16 %v900
        %v1185 = vunpack.c.l.b16 %v901
        %v1186 = vunpack.c.l.b16 %v902
        %v1187 = vunpack.c.l.b16 %v903
        %v1188 = vunpack.c.l.b16 %v904
        %v1189 = vunpack.c.l.b16 %v905
        %v1190 = vunpack.c.l.b16 %v906
        %v1191 = vunpack.c.l.b16 %v907
        %v1192 = vunpack.c.l.b16 %v908
        %v1193 = vunpack.c.l.b16 %v909
        %v1194 = vunpack.c.l.b16 %v910
        %v1195 = vunpack.c.l.b16 %v911
        %v1196 = vunpack.c.l.b16 %v912
        %v1197 = vpack.c.b16 %v1166, %v1165
        %v1198 = vpack.c.b16 %v1168, %v1167
        %v1199 = vpack.c.b16 %v1170, %v1169
        %v1200 = vpack.c.b16 %v1172, %v1171
        %v1201 = vpack.c.b16 %v1174, %v1173
        %v1202 = vpack.c.b16 %v1176, %v1175
        %v1203 = vpack.c.b16 %v1178, %v1177
        %v1204 = vpack.c.b16 %v1180, %v1179
        %v1205 = vpack.c.b16 %v1182, %v1181
        %v1206 = vpack.c.b16 %v1184, %v1183
        %v1207 = vpack.c.b16 %v1186, %v1185
        %v1208 = vpack.c.b16 %v1188, %v1187
        %v1209 = vpack.c.b16 %v1190, %v1189
        %v1210 = vpack.c.b16 %v1192, %v1191
        %v1211 = vpack.c.b16 %v1194, %v1193
        %v1212 = vpack.c.b16 %v1196, %v1195
        %1229 = vmatpush.bf16.msra.mxu0 %v1204
        %1230 = vmatpush.bf16.msra.mxu0 %v1203
        %1231 = vmatpush.bf16.msra.mxu0 %v1202
        %1232 = vmatpush.bf16.msra.mxu0 %v1201
        %1233 = vmatpush.bf16.msra.mxu0 %v1200
        %1234 = vmatpush.bf16.msra.mxu0 %v1199
        %1235 = vmatpush.bf16.msra.mxu0 %v1198
        %1236 = vmatpush.bf16.msra.mxu0 %v1197
        %1237 = vmatmul.bf16.gmra.mxu0 %v877
        %v1238 = vpop.f32.mrf.mxu0
        %v1239 = vadd.f32 %v1124, %v1238
        %v1240 = vpop.f32.mrf.mxu0
        %v1241 = vadd.f32 %v1126, %v1240
        %1242 = vmatmul.bf16.gmra.mxu0 %v879
        %v1243 = vpop.f32.mrf.mxu0
        %v1244 = vadd.f32 %v1129, %v1243
        %v1245 = vpop.f32.mrf.mxu0
        %v1246 = vadd.f32 %v1131, %v1245
        %1247 = vdwg.mxu0
        %1248 = vmatpush.bf16.msra.mxu0 %v1212
        %1249 = vmatpush.bf16.msra.mxu0 %v1211
        %1250 = vmatpush.bf16.msra.mxu0 %v1210
        %1251 = vmatpush.bf16.msra.mxu0 %v1209
        %1252 = vmatpush.bf16.msra.mxu0 %v1208
        %1253 = vmatpush.bf16.msra.mxu0 %v1207
        %1254 = vmatpush.bf16.msra.mxu0 %v1206
        %1255 = vmatpush.bf16.msra.mxu0 %v1205
        %1256 = vmatmul.bf16.gmra.mxu0 %v878
        %v1257 = vpop.f32.mrf.mxu0
        %v1258 = vadd.f32 %v1239, %v1257
        %v1259 = vpop.f32.mrf.mxu0
        %v1260 = vadd.f32 %v1241, %v1259
        %1261 = vmatmul.bf16.gmra.mxu0 %v880
        %v1262 = vpop.f32.mrf.mxu0
        %v1263 = vadd.f32 %v1244, %v1262
        %v1264 = vpop.f32.mrf.mxu0
        %v1265 = vadd.f32 %v1246, %v1264
        %1266 = vdwg.mxu0
        %v1267 = vld [vmem:[#allocation3] sm:$0xfc]
        %v1268 = vld [vmem:[#allocation3 + $0x8] sm:$0xfc]
        %v1269 = vld [vmem:[#allocation3 + $0x20] sm:$0x3]
        %v1270 = vld [vmem:[#allocation3 + $0x28] sm:$0x3]
        %v1271 = vld [vmem:[#allocation3 + $0x30] sm:$0xfc]
        %v1272 = vld [vmem:[#allocation3 + $0x38] sm:$0xfc]
        %v1273 = vld [vmem:[#allocation3 + $0x50] sm:$0x3]
        %v1274 = vld [vmem:[#allocation3 + $0x58] sm:$0x3]
        %vm1283 = vcmask 1045504
        %v1284 = vrot.slane %v1267, 2
        %v1285 = vrot.slane %v871, 2
        %v1286 = vsel %vm1283, %v1284, %v1285
        %v1287 = vrot.slane %v1268, 2
        %v1288 = vrot.slane %v872, 2
        %v1289 = vsel %vm1283, %v1287, %v1288
        %v1290 = vrot.slane %v1269, 2
        %v1291 = vsel %vm1283, %v1285, %v1290
        %v1292 = vrot.slane %v1270, 2
        %v1293 = vsel %vm1283, %v1288, %v1292
        %v1294 = vrot.slane %v1271, 2
        %v1295 = vrot.slane %v875, 2
        %v1296 = vsel %vm1283, %v1294, %v1295
        %v1297 = vrot.slane %v1272, 2
        %v1298 = vrot.slane %v876, 2
        %v1299 = vsel %vm1283, %v1297, %v1298
        %v1300 = vrot.slane %v1273, 2
        %v1301 = vsel %vm1283, %v1295, %v1300
        %v1302 = vrot.slane %v1274, 2
        %v1303 = vsel %vm1283, %v1298, %v1302
        %v1312 = vpack.c.bf16 %v1291, %v1286
        %v1313 = vpack.c.bf16 %v1293, %v1289
        %v1314 = vpack.c.bf16 %v1301, %v1296
        %v1315 = vpack.c.bf16 %v1303, %v1299
        %s1316 = scalar_lea.vmem %s1, 256
        %v1317 = vld [vmem:[%s1316] sm:$0xf]
        %v1318 = vld [vmem:[%s1316 + $0x4] sm:$0xf]
        %v1319 = vld [vmem:[%s1316 + $0x8] sm:$0xf]
        %v1320 = vld [vmem:[%s1316 + $0xc] sm:$0xf]
        %v1321 = vld [vmem:[%s1316 + $0x10] sm:$0xf]
        %v1322 = vld [vmem:[%s1316 + $0x14] sm:$0xf]
        %v1323 = vld [vmem:[%s1316 + $0x18] sm:$0xf]
        %v1324 = vld [vmem:[%s1316 + $0x1c] sm:$0xf]
        %v1325 = vld [vmem:[%s1316 + $0x20] sm:$0xf]
        %v1326 = vld [vmem:[%s1316 + $0x24] sm:$0xf]
        %v1327 = vld [vmem:[%s1316 + $0x28] sm:$0xf]
        %v1328 = vld [vmem:[%s1316 + $0x2c] sm:$0xf]
        %v1329 = vld [vmem:[%s1316 + $0x30] sm:$0xf]
        %v1330 = vld [vmem:[%s1316 + $0x34] sm:$0xf]
        %v1331 = vld [vmem:[%s1316 + $0x38] sm:$0xf]
        %v1332 = vld [vmem:[%s1316 + $0x3c] sm:$0xf]
        %v1333 = vld [vmem:[%s1316 + $0x40] sm:$0xf]
        %v1334 = vld [vmem:[%s1316 + $0x44] sm:$0xf]
        %v1335 = vld [vmem:[%s1316 + $0x48] sm:$0xf]
        %v1336 = vld [vmem:[%s1316 + $0x4c] sm:$0xf]
        %v1337 = vld [vmem:[%s1316 + $0x50] sm:$0xf]
        %v1338 = vld [vmem:[%s1316 + $0x54] sm:$0xf]
        %v1339 = vld [vmem:[%s1316 + $0x58] sm:$0xf]
        %v1340 = vld [vmem:[%s1316 + $0x5c] sm:$0xf]
        %v1341 = vld [vmem:[%s1316 + $0x60] sm:$0xf]
        %v1342 = vld [vmem:[%s1316 + $0x64] sm:$0xf]
        %v1343 = vld [vmem:[%s1316 + $0x68] sm:$0xf]
        %v1344 = vld [vmem:[%s1316 + $0x6c] sm:$0xf]
        %v1345 = vld [vmem:[%s1316 + $0x70] sm:$0xf]
        %v1346 = vld [vmem:[%s1316 + $0x74] sm:$0xf]
        %v1347 = vld [vmem:[%s1316 + $0x78] sm:$0xf]
        %v1348 = vld [vmem:[%s1316 + $0x7c] sm:$0xf]
        %v1381 = vunpack.c.l.b16 %v1317
        %v1382 = vunpack.c.l.b16 %v1318
        %v1383 = vunpack.c.l.b16 %v1319
        %v1384 = vunpack.c.l.b16 %v1320
        %v1385 = vunpack.c.l.b16 %v1321
        %v1386 = vunpack.c.l.b16 %v1322
        %v1387 = vunpack.c.l.b16 %v1323
        %v1388 = vunpack.c.l.b16 %v1324
        %v1389 = vunpack.c.l.b16 %v1325
        %v1390 = vunpack.c.l.b16 %v1326
        %v1391 = vunpack.c.l.b16 %v1327
        %v1392 = vunpack.c.l.b16 %v1328
        %v1393 = vunpack.c.l.b16 %v1329
        %v1394 = vunpack.c.l.b16 %v1330
        %v1395 = vunpack.c.l.b16 %v1331
        %v1396 = vunpack.c.l.b16 %v1332
        %v1397 = vunpack.c.l.b16 %v1333
        %v1398 = vunpack.c.l.b16 %v1334
        %v1399 = vunpack.c.l.b16 %v1335
        %v1400 = vunpack.c.l.b16 %v1336
        %v1401 = vunpack.c.l.b16 %v1337
        %v1402 = vunpack.c.l.b16 %v1338
        %v1403 = vunpack.c.l.b16 %v1339
        %v1404 = vunpack.c.l.b16 %v1340
        %v1405 = vunpack.c.l.b16 %v1341
        %v1406 = vunpack.c.l.b16 %v1342
        %v1407 = vunpack.c.l.b16 %v1343
        %v1408 = vunpack.c.l.b16 %v1344
        %v1409 = vunpack.c.l.b16 %v1345
        %v1410 = vunpack.c.l.b16 %v1346
        %v1411 = vunpack.c.l.b16 %v1347
        %v1412 = vunpack.c.l.b16 %v1348
        %v1413 = vpack.c.b16 %v1382, %v1381
        %v1414 = vpack.c.b16 %v1384, %v1383
        %v1415 = vpack.c.b16 %v1386, %v1385
        %v1416 = vpack.c.b16 %v1388, %v1387
        %v1417 = vpack.c.b16 %v1390, %v1389
        %v1418 = vpack.c.b16 %v1392, %v1391
        %v1419 = vpack.c.b16 %v1394, %v1393
        %v1420 = vpack.c.b16 %v1396, %v1395
        %v1421 = vpack.c.b16 %v1398, %v1397
        %v1422 = vpack.c.b16 %v1400, %v1399
        %v1423 = vpack.c.b16 %v1402, %v1401
        %v1424 = vpack.c.b16 %v1404, %v1403
        %v1425 = vpack.c.b16 %v1406, %v1405
        %v1426 = vpack.c.b16 %v1408, %v1407
        %v1427 = vpack.c.b16 %v1410, %v1409
        %v1428 = vpack.c.b16 %v1412, %v1411
        %1445 = vmatpush.bf16.msra.mxu0 %v1420
        %1446 = vmatpush.bf16.msra.mxu0 %v1419
        %1447 = vmatpush.bf16.msra.mxu0 %v1418
        %1448 = vmatpush.bf16.msra.mxu0 %v1417
        %1449 = vmatpush.bf16.msra.mxu0 %v1416
        %1450 = vmatpush.bf16.msra.mxu0 %v1415
        %1451 = vmatpush.bf16.msra.mxu0 %v1414
        %1452 = vmatpush.bf16.msra.mxu0 %v1413
        %1453 = vmatmul.bf16.gmra.mxu0 %v1312
        %v1454 = vpop.f32.mrf.mxu0
        %v1455 = vadd.f32 0.0, %v1454
        %v1456 = vpop.f32.mrf.mxu0
        %v1457 = vadd.f32 0.0, %v1456
        %1458 = vmatmul.bf16.gmra.mxu0 %v1314
        %v1459 = vpop.f32.mrf.mxu0
        %v1460 = vadd.f32 0.0, %v1459
        %v1461 = vpop.f32.mrf.mxu0
        %v1462 = vadd.f32 0.0, %v1461
        %1463 = vdwg.mxu0
        %1464 = vmatpush.bf16.msra.mxu0 %v1428
        %1465 = vmatpush.bf16.msra.mxu0 %v1427
        %1466 = vmatpush.bf16.msra.mxu0 %v1426
        %1467 = vmatpush.bf16.msra.mxu0 %v1425
        %1468 = vmatpush.bf16.msra.mxu0 %v1424
        %1469 = vmatpush.bf16.msra.mxu0 %v1423
        %1470 = vmatpush.bf16.msra.mxu0 %v1422
        %1471 = vmatpush.bf16.msra.mxu0 %v1421
        %1472 = vmatmul.bf16.gmra.mxu0 %v1313
        %v1473 = vpop.f32.mrf.mxu0
        %v1474 = vadd.f32 %v1455, %v1473
        %v1475 = vpop.f32.mrf.mxu0
        %v1476 = vadd.f32 %v1457, %v1475
        %1477 = vmatmul.bf16.gmra.mxu0 %v1315
        %v1478 = vpop.f32.mrf.mxu0
        %v1479 = vadd.f32 %v1460, %v1478
        %v1480 = vpop.f32.mrf.mxu0
        %v1481 = vadd.f32 %v1462, %v1480
        %1482 = vdwg.mxu0
        %v1483 = vadd.f32 %v1258, %v1474
        %v1484 = vadd.f32 %v1260, %v1476
        %v1485 = vadd.f32 %v1263, %v1479
        %v1486 = vadd.f32 %v1265, %v1481
        %v1488 = vperm.slane %v868, 0
        %v1490 = vadd.f32 %v1483, %v1488
        %v1491 = vadd.f32 %v1484, %v1488
        %v1492 = vadd.f32 %v1485, %v1488
        %v1493 = vadd.f32 %v1486, %v1488
        %v1494 = vsub.f32 0.0, %v1490
        %v1495 = vsub.f32 0.0, %v1491
        %v1496 = vsub.f32 0.0, %v1492
        %v1497 = vsub.f32 0.0, %v1493
        %v1498 = vmul.f32 %v1494, 1.442695
        %v1499 = vpow.pop %v1498
        %v1500 = vmul.f32 %v1495, 1.442695
        %v1501 = vpow.pop %v1500
        %v1502 = vmul.f32 %v1496, 1.442695
        %v1503 = vpow.pop %v1502
        %v1504 = vmul.f32 %v1497, 1.442695
        %v1505 = vpow.pop %v1504
        %v1506 = vadd.f32 %v1499, 1.0
        %v1507 = vadd.f32 %v1501, 1.0
        %v1508 = vadd.f32 %v1503, 1.0
        %v1509 = vadd.f32 %v1505, 1.0
        %v1510 = vrcp.pop %v1506
        %v1511 = vmul.f32 %v1506, %v1510
        %v1512 = vsub.f32 1.0, %v1511
        %v1513 = vmul.f32 %v1510, %v1512
        %v1514 = vadd.f32 %v1510, %v1513
        %vm1515 = vweird.f32 %v1506
        %vm1516 = vweird.f32 %v1510
        %vm1517 = vmor %vm1515, %vm1516
        %v1518 = vsel %vm1517, %v1510, %v1514
        %v1519 = vand.u32 2147483647, %v1506
        %vm1520 = vcmp.eq.f32.partialorder %v1519, 8.507059e+37
        %v1521 = vand.u32 %v1506, 2147483648
        %v1522 = vor.u32 1.1754944e-38, %v1521
        %v1523 = vsel %vm1520, %v1522, %v1518
        %v1524 = vrcp.pop %v1507
        %v1525 = vmul.f32 %v1507, %v1524
        %v1526 = vsub.f32 1.0, %v1525
        %v1527 = vmul.f32 %v1524, %v1526
        %v1528 = vadd.f32 %v1524, %v1527
        %vm1529 = vweird.f32 %v1507
        %vm1530 = vweird.f32 %v1524
        %vm1531 = vmor %vm1529, %vm1530
        %v1532 = vsel %vm1531, %v1524, %v1528
        %v1533 = vand.u32 2147483647, %v1507
        %vm1534 = vcmp.eq.f32.partialorder %v1533, 8.507059e+37
        %v1535 = vand.u32 %v1507, 2147483648
        %v1536 = vor.u32 1.1754944e-38, %v1535
        %v1537 = vsel %vm1534, %v1536, %v1532
        %v1538 = vrcp.pop %v1508
        %v1539 = vmul.f32 %v1508, %v1538
        %v1540 = vsub.f32 1.0, %v1539
        %v1541 = vmul.f32 %v1538, %v1540
        %v1542 = vadd.f32 %v1538, %v1541
        %vm1543 = vweird.f32 %v1508
        %vm1544 = vweird.f32 %v1538
        %vm1545 = vmor %vm1543, %vm1544
        %v1546 = vsel %vm1545, %v1538, %v1542
        %v1547 = vand.u32 2147483647, %v1508
        %vm1548 = vcmp.eq.f32.partialorder %v1547, 8.507059e+37
        %v1549 = vand.u32 %v1508, 2147483648
        %v1550 = vor.u32 1.1754944e-38, %v1549
        %v1551 = vsel %vm1548, %v1550, %v1546
        %v1552 = vrcp.pop %v1509
        %v1553 = vmul.f32 %v1509, %v1552
        %v1554 = vsub.f32 1.0, %v1553
        %v1555 = vmul.f32 %v1552, %v1554
        %v1556 = vadd.f32 %v1552, %v1555
        %vm1557 = vweird.f32 %v1509
        %vm1558 = vweird.f32 %v1552
        %vm1559 = vmor %vm1557, %vm1558
        %v1560 = vsel %vm1559, %v1552, %v1556
        %v1561 = vand.u32 2147483647, %v1509
        %vm1562 = vcmp.eq.f32.partialorder %v1561, 8.507059e+37
        %v1563 = vand.u32 %v1509, 2147483648
        %v1564 = vor.u32 1.1754944e-38, %v1563
        %v1565 = vsel %vm1562, %v1564, %v1560
        %v1566 = vmul.f32 %v1490, %v1523
        %v1567 = vmul.f32 %v1491, %v1537
        %v1568 = vmul.f32 %v1492, %v1551
        %v1569 = vmul.f32 %v1493, %v1565
        %v1570 = vld [vmem:[%s671] sm:$0x1]
        %v1571 = vld [vmem:[%s4] sm:$0xff]
        %v1572 = vld [vmem:[%s4 + $0x8] sm:$0xff]
        %v1573 = vld [vmem:[%s4 + $0x10] sm:$0xff]
        %v1574 = vld [vmem:[%s4 + $0x18] sm:$0xff]
        %v1575 = vld [vmem:[%s4 + $0x20] sm:$0xff]
        %v1576 = vld [vmem:[%s4 + $0x28] sm:$0xff]
        %v1577 = vld [vmem:[%s4 + $0x30] sm:$0xff]
        %v1578 = vld [vmem:[%s4 + $0x38] sm:$0xff]
        %v1579 = vld [vmem:[%s4 + $0x40] sm:$0xff]
        %v1580 = vld [vmem:[%s4 + $0x48] sm:$0xff]
        %v1581 = vld [vmem:[%s4 + $0x50] sm:$0xff]
        %v1582 = vld [vmem:[%s4 + $0x58] sm:$0xff]
        %v1583 = vld [vmem:[%s4 + $0x60] sm:$0xff]
        %v1584 = vld [vmem:[%s4 + $0x68] sm:$0xff]
        %v1585 = vld [vmem:[%s4 + $0x70] sm:$0xff]
        %v1586 = vld [vmem:[%s4 + $0x78] sm:$0xff]
        %v1587 = vadd.f32 %v1566, %v1567
        %v1588 = vadd.f32 %v1587, %v1568
        %v1589 = vadd.f32 %v1588, %v1569
        %v1590 = vrot.slane %v1589, 4
        %v1591 = vadd.f32 %v1589, %v1590
        %v1592 = vrot.slane %v1591, 2
        %v1593 = vadd.f32 %v1591, %v1592
        %v1594 = vrot.slane %v1593, 1
        %v1595 = vadd.f32 %v1593, %v1594
        %v1596 = vmul.f32 %v1566, %v1566
        %v1597 = vmul.f32 %v1567, %v1567
        %v1598 = vmul.f32 %v1568, %v1568
        %v1599 = vmul.f32 %v1569, %v1569
        %v1600 = vadd.f32 %v1596, %v1597
        %v1601 = vadd.f32 %v1600, %v1598
        %v1602 = vadd.f32 %v1601, %v1599
        %v1603 = vrot.slane %v1602, 4
        %v1604 = vadd.f32 %v1602, %v1603
        %v1605 = vrot.slane %v1604, 2
        %v1606 = vadd.f32 %v1604, %v1605
        %v1607 = vrot.slane %v1606, 1
        %v1608 = vadd.f32 %v1606, %v1607
        %v1609 = vsel %vm831, %v1595, %v1608
        %1610 = vmatpush.msra.mxu0 %v1586
        %1611 = vmatpush.msra.mxu0 %v1585
        %1612 = vmatpush.msra.mxu0 %v1584
        %1613 = vmatpush.msra.mxu0 %v1583
        %1614 = vmatpush.msra.mxu0 %v1582
        %1615 = vmatpush.msra.mxu0 %v1581
        %1616 = vmatpush.msra.mxu0 %v1580
        %1617 = vmatpush.msra.mxu0 %v1579
        %1618 = vmatpush.msra.mxu0 %v1578
        %1619 = vmatpush.msra.mxu0 %v1577
        %1620 = vmatpush.msra.mxu0 %v1576
        %1621 = vmatpush.msra.mxu0 %v1575
        %1622 = vmatpush.msra.mxu0 %v1574
        %1623 = vmatpush.msra.mxu0 %v1573
        %1624 = vmatpush.msra.mxu0 %v1572
        %1625 = vmatpush.msra.mxu0 %v1571
        %1626 = vmatmul.f32.gmra.mxu0 %v1609
        %v1627 = vpop.f32.mrf.mxu0
        %v1628 = vadd.f32 0.0, %v1627
        %1629 = vdwg.mxu0
        %v1630 = vmul.f32 %v1628, 0.001953125
        %v1631 = vmul.f32 %v1630, %v1630
        %v1633 = vrot.slane %v1631, 7
        %v1635 = vsub.f32 %v1630, %v1633
        %v1636 = vmax.f32 %v1635, 0.0
        %v1637 = vadd.f32 %v1636, 1e-05
        %v1638 = vrsqrt.pop %v1637
        %v1639 = vmul.f32 %v1638, %v1637
        %v1640 = vmul.f32 %v1639, %v1638
        %v1641 = vmul.f32 0.5, %v1640
        %v1642 = vsub.f32 1.5, %v1641
        %v1643 = vmul.f32 %v1638, %v1642
        %vm1644 = vweird.f32 %v1637
        %vm1645 = vweird.f32 %v1638
        %vm1646 = vmor %vm1644, %vm1645
        %v1647 = vsel %vm1646, %v1638, %v1643
        %1649 = vst [vmem:[#allocation1] sm:$0xff] %v1647
        %s1650 = scalar_lea.vmem [#allocation1], 1
        %v1651 = vld [vmem:[%s1650] ss:$9 sm:$0xff]
        %v1653 = vmul.f32 %v1570, %v1651
        %v1654 = vmul.f32 %v1630, %v1653
        %v1656 = vrot.slane %v1654, 7
        %v1658 = vsel %vm831, %v1653, %v1656
        %1660 = vrot.lane.b32.xlu0 %v1658, 8
        %v1661 = vpop.permute.xlu0 %1660
        %1663 = vrot.lane.b32.xlu0 %v1658, 16
        %v1664 = vpop.permute.xlu0 %1663
        %1666 = vrot.lane.b32.xlu0 %v1658, 24
        %v1667 = vpop.permute.xlu0 %1666
        %1669 = vrot.lane.b32.xlu0 %v1658, 32
        %v1670 = vpop.permute.xlu0 %1669
        %1672 = vrot.lane.b32.xlu0 %v1658, 40
        %v1673 = vpop.permute.xlu0 %1672
        %1675 = vrot.lane.b32.xlu0 %v1658, 48
        %v1676 = vpop.permute.xlu0 %1675
        %1678 = vrot.lane.b32.xlu0 %v1658, 56
        %v1679 = vpop.permute.xlu0 %1678
        %1681 = vrot.lane.b32.xlu0 %v1658, 64
        %v1682 = vpop.permute.xlu0 %1681
        %1684 = vrot.lane.b32.xlu0 %v1658, 72
        %v1685 = vpop.permute.xlu0 %1684
        %1687 = vrot.lane.b32.xlu0 %v1658, 80
        %v1688 = vpop.permute.xlu0 %1687
        %1690 = vrot.lane.b32.xlu0 %v1658, 88
        %v1691 = vpop.permute.xlu0 %1690
        %1693 = vrot.lane.b32.xlu0 %v1658, 96
        %v1694 = vpop.permute.xlu0 %1693
        %1696 = vrot.lane.b32.xlu0 %v1658, 104
        %v1697 = vpop.permute.xlu0 %1696
        %1699 = vrot.lane.b32.xlu0 %v1658, 112
        %v1700 = vpop.permute.xlu0 %1699
        %1702 = vrot.lane.b32.xlu0 %v1658, 120
        %v1703 = vpop.permute.xlu0 %1702
        %vm1705 = vcmask 64512
        %v1706 = vsel %vm1705, %v1658, %v1661
        %vm1707 = vcmask 130048
        %v1708 = vsel %vm1707, %v1706, %v1664
        %vm1709 = vcmask 195584
        %v1710 = vsel %vm1709, %v1708, %v1667
        %vm1711 = vcmask 261120
        %v1712 = vsel %vm1711, %v1710, %v1670
        %vm1713 = vcmask 326656
        %v1714 = vsel %vm1713, %v1712, %v1673
        %vm1715 = vcmask 392192
        %v1716 = vsel %vm1715, %v1714, %v1676
        %vm1717 = vcmask 457728
        %v1718 = vsel %vm1717, %v1716, %v1679
        %vm1719 = vcmask 523264
        %v1720 = vsel %vm1719, %v1718, %v1682
        %vm1721 = vcmask 588800
        %v1722 = vsel %vm1721, %v1720, %v1685
        %vm1723 = vcmask 654336
        %v1724 = vsel %vm1723, %v1722, %v1688
        %vm1725 = vcmask 719872
        %v1726 = vsel %vm1725, %v1724, %v1691
        %vm1727 = vcmask 785408
        %v1728 = vsel %vm1727, %v1726, %v1694
        %vm1729 = vcmask 850944
        %v1730 = vsel %vm1729, %v1728, %v1697
        %vm1731 = vcmask 916480
        %v1732 = vsel %vm1731, %v1730, %v1700
        %vm1733 = vcmask 982016
        %v1734 = vsel %vm1733, %v1732, %v1703
        %v1735 = vperm.slane %v1734, 0
        %v1736 = vmul.f32 %v1566, %v1735
        %v1737 = vmul.f32 %v1567, %v1735
        %v1738 = vmul.f32 %v1568, %v1735
        %v1739 = vmul.f32 %v1569, %v1735
        %v1740 = vperm.slane %v1734, 1
        %v1741 = vsub.f32 %v1736, %v1740
        %v1742 = vsub.f32 %v1737, %v1740
        %v1743 = vsub.f32 %v1738, %v1740
        %v1744 = vsub.f32 %v1739, %v1740
        %v1745 = vadd.f32 %v1741, %v1742
        %v1746 = vrot.slane %v1745, 4
        %v1747 = vadd.f32 %v1745, %v1746
        %v1748 = vrot.slane %v1747, 2
        %v1749 = vadd.f32 %v1747, %v1748
        %v1750 = vrot.slane %v1749, 1
        %v1751 = vadd.f32 %v1749, %v1750
        %v1752 = vadd.f32 %v1743, %v1744
        %v1753 = vrot.slane %v1752, 4
        %v1754 = vadd.f32 %v1752, %v1753
        %v1755 = vrot.slane %v1754, 2
        %v1756 = vadd.f32 %v1754, %v1755
        %v1757 = vrot.slane %v1756, 1
        %v1758 = vadd.f32 %v1756, %v1757
        %v1759 = vmax.f32 %v1741, %v1742
        %v1760 = vrot.slane %v1759, 4
        %v1761 = vmax.f32 %v1759, %v1760
        %v1762 = vrot.slane %v1761, 2
        %v1763 = vmax.f32 %v1761, %v1762
        %v1764 = vrot.slane %v1763, 1
        %v1765 = vmax.f32 %v1763, %v1764
        %v1766 = vmax.f32 %v1743, %v1744
        %v1767 = vrot.slane %v1766, 4
        %v1768 = vmax.f32 %v1766, %v1767
        %v1769 = vrot.slane %v1768, 2
        %v1770 = vmax.f32 %v1768, %v1769
        %v1771 = vrot.slane %v1770, 1
        %v1772 = vmax.f32 %v1770, %v1771
        %vm1775 = vcmask 1041409
        %v1776 = vsel %vm1775, %v1758, %v1751
        %1778 = vmatpush.msra.mxu0 %v1586
        %1779 = vmatpush.msra.mxu0 %v1585
        %1780 = vmatpush.msra.mxu0 %v1584
        %1781 = vmatpush.msra.mxu0 %v1583
        %1782 = vmatpush.msra.mxu0 %v1582
        %1783 = vmatpush.msra.mxu0 %v1581
        %1784 = vmatpush.msra.mxu0 %v1580
        %1785 = vmatpush.msra.mxu0 %v1579
        %1786 = vmatpush.msra.mxu0 %v1578
        %1787 = vmatpush.msra.mxu0 %v1577
        %1788 = vmatpush.msra.mxu0 %v1576
        %1789 = vmatpush.msra.mxu0 %v1575
        %1790 = vmatpush.msra.mxu0 %v1574
        %1791 = vmatpush.msra.mxu0 %v1573
        %1792 = vmatpush.msra.mxu0 %v1572
        %1793 = vmatpush.msra.mxu0 %v1571
        %1794 = vmatmul.f32.gmra.mxu0 %v1776
        %v1795 = vpop.f32.mrf.mxu0
        %v1796 = vadd.f32 0.0, %v1795
        %1797 = vdwg.mxu0
        %v1798 = vmul.f32 %v1796, 0.00390625
        %1801 = vrot.lane.b32.xlu0 %v1765, 120
        %v1802 = vpop.permute.xlu0 %1801
        %1803 = vrot.lane.b32.xlu0 %v1772, 120
        %v1804 = vpop.permute.xlu0 %1803
        %v1807 = vmax.f32 %v1765, %v1802
        %v1808 = vmax.f32 %v1772, %v1804
        %1809 = vrot.lane.b32.xlu0 %v1765, 112
        %v1810 = vpop.permute.xlu0 %1809
        %1811 = vrot.lane.b32.xlu0 %v1772, 112
        %v1812 = vpop.permute.xlu0 %1811
        %v1815 = vmax.f32 %v1807, %v1810
        %v1816 = vmax.f32 %v1808, %v1812
        %1817 = vrot.lane.b32.xlu0 %v1765, 104
        %v1818 = vpop.permute.xlu0 %1817
        %1819 = vrot.lane.b32.xlu0 %v1772, 104
        %v1820 = vpop.permute.xlu0 %1819
        %v1823 = vmax.f32 %v1815, %v1818
        %v1824 = vmax.f32 %v1816, %v1820
        %1825 = vrot.lane.b32.xlu0 %v1765, 96
        %v1826 = vpop.permute.xlu0 %1825
        %1827 = vrot.lane.b32.xlu0 %v1772, 96
        %v1828 = vpop.permute.xlu0 %1827
        %v1831 = vmax.f32 %v1823, %v1826
        %v1832 = vmax.f32 %v1824, %v1828
        %1833 = vrot.lane.b32.xlu0 %v1765, 88
        %v1834 = vpop.permute.xlu0 %1833
        %1835 = vrot.lane.b32.xlu0 %v1772, 88
        %v1836 = vpop.permute.xlu0 %1835
        %v1839 = vmax.f32 %v1831, %v1834
        %v1840 = vmax.f32 %v1832, %v1836
        %1841 = vrot.lane.b32.xlu0 %v1765, 80
        %v1842 = vpop.permute.xlu0 %1841
        %1843 = vrot.lane.b32.xlu0 %v1772, 80
        %v1844 = vpop.permute.xlu0 %1843
        %v1847 = vmax.f32 %v1839, %v1842
        %v1848 = vmax.f32 %v1840, %v1844
        %1849 = vrot.lane.b32.xlu0 %v1765, 72
        %v1850 = vpop.permute.xlu0 %1849
        %1851 = vrot.lane.b32.xlu0 %v1772, 72
        %v1852 = vpop.permute.xlu0 %1851
        %v1855 = vmax.f32 %v1847, %v1850
        %v1856 = vmax.f32 %v1848, %v1852
        %1857 = vrot.lane.b32.xlu0 %v1765, 64
        %v1858 = vpop.permute.xlu0 %1857
        %1859 = vrot.lane.b32.xlu0 %v1772, 64
        %v1860 = vpop.permute.xlu0 %1859
        %v1863 = vmax.f32 %v1855, %v1858
        %v1864 = vmax.f32 %v1856, %v1860
        %1865 = vrot.lane.b32.xlu0 %v1765, 56
        %v1866 = vpop.permute.xlu0 %1865
        %1867 = vrot.lane.b32.xlu0 %v1772, 56
        %v1868 = vpop.permute.xlu0 %1867
        %v1871 = vmax.f32 %v1863, %v1866
        %v1872 = vmax.f32 %v1864, %v1868
        %1873 = vrot.lane.b32.xlu0 %v1765, 48
        %v1874 = vpop.permute.xlu0 %1873
        %1875 = vrot.lane.b32.xlu0 %v1772, 48
        %v1876 = vpop.permute.xlu0 %1875
        %v1879 = vmax.f32 %v1871, %v1874
        %v1880 = vmax.f32 %v1872, %v1876
        %1881 = vrot.lane.b32.xlu0 %v1765, 40
        %v1882 = vpop.permute.xlu0 %1881
        %1883 = vrot.lane.b32.xlu0 %v1772, 40
        %v1884 = vpop.permute.xlu0 %1883
        %v1887 = vmax.f32 %v1879, %v1882
        %v1888 = vmax.f32 %v1880, %v1884
        %1889 = vrot.lane.b32.xlu0 %v1765, 32
        %v1890 = vpop.permute.xlu0 %1889
        %1891 = vrot.lane.b32.xlu0 %v1772, 32
        %v1892 = vpop.permute.xlu0 %1891
        %v1895 = vmax.f32 %v1887, %v1890
        %v1896 = vmax.f32 %v1888, %v1892
        %1897 = vrot.lane.b32.xlu0 %v1765, 24
        %v1898 = vpop.permute.xlu0 %1897
        %1899 = vrot.lane.b32.xlu0 %v1772, 24
        %v1900 = vpop.permute.xlu0 %1899
        %v1903 = vmax.f32 %v1895, %v1898
        %v1904 = vmax.f32 %v1896, %v1900
        %1905 = vrot.lane.b32.xlu0 %v1765, 16
        %v1906 = vpop.permute.xlu0 %1905
        %1907 = vrot.lane.b32.xlu0 %v1772, 16
        %v1908 = vpop.permute.xlu0 %1907
        %v1911 = vmax.f32 %v1903, %v1906
        %v1912 = vmax.f32 %v1904, %v1908
        %1913 = vrot.lane.b32.xlu0 %v1765, 8
        %v1914 = vpop.permute.xlu0 %1913
        %1915 = vrot.lane.b32.xlu0 %v1772, 8
        %v1916 = vpop.permute.xlu0 %1915
        %v1919 = vmax.f32 %v1911, %v1914
        %v1920 = vmax.f32 %v1912, %v1916
        %v1923 = vrot.slane %v1919, 6
        %v1924 = vrot.slane %v1920, 5
        %vm1925 = vcmask 1043459
        %v1926 = vsel %vm1925, %v1924, %v1923
        %vm1928 = vcmask 1041408
        %v1929 = vsel %vm1928, %v1798, %v1926
        %v1930 = vld [vmem:[%s5] sm:$0xff]
        %v1931 = vld [vmem:[#allocation12] sm:$0x1]
        %v1933 = vperm.slane %v1931, 0
        %v1936 = vsel %vm1705, %v1929, 0
        %1938 = vmatpush.msra.mxu0 0.0
        %1939 = vmatpush.msra.mxu0 0.0
        %1940 = vmatpush.msra.mxu0 0.0
        %1941 = vmatpush.msra.mxu0 0.0
        %1942 = vmatpush.msra.mxu0 0.0
        %1943 = vmatpush.msra.mxu0 0.0
        %1944 = vmatpush.msra.mxu0 0.0
        %1945 = vmatpush.msra.mxu0 0.0
        %1946 = vmatpush.msra.mxu0 0.0
        %1947 = vmatpush.msra.mxu0 0.0
        %1948 = vmatpush.msra.mxu0 0.0
        %1949 = vmatpush.msra.mxu0 0.0
        %1950 = vmatpush.msra.mxu0 0.0
        %1951 = vmatpush.msra.mxu0 0.0
        %1952 = vmatpush.msra.mxu0 0.0
        %1953 = vmatpush.msra.mxu0 %v1930
        %1954 = vmatmul.f32.gmra.mxu0 %v1936
        %v1955 = vpop.f32.mrf.mxu0
        %v1956 = vadd.f32 %v1933, %v1955
        %1957 = vdwg.mxu0
        %v1958 = vmax.f32 %v1956, 0.0
        %v1959 = vmin.f32 %v1958, 6.0
        %vm1960 = vcmask 25600
        %v1961 = vsel %vm1960, %v1959, 0.0
        %v1962 = vrot.slane %v1961, 4
        %v1963 = vadd.f32 %v1961, %v1962
        %v1964 = vrot.slane %v1963, 2
        %v1965 = vadd.f32 %v1963, %v1964
        %v1966 = vrot.slane %v1965, 1
        %v1967 = vadd.f32 %v1965, %v1966
        %v1968 = vrcp.pop 2.0
        %v1969 = vmul.f32 2.0, %v1968
        %v1970 = vsub.f32 1.0, %v1969
        %v1971 = vmul.f32 %v1968, %v1970
        %v1972 = vadd.f32 %v1968, %v1971
        %vm1973 = vweird.f32 %v1968
        %v1974 = vsel %vm1973, %v1968, %v1972
        %v1975 = vmul.f32 %v1967, %v1974
        %v1976 = vmul.f32 %v1959, %v1959
        %v1977 = vsel %vm1960, %v1976, 0.0
        %v1978 = vrot.slane %v1977, 4
        %v1979 = vadd.f32 %v1977, %v1978
        %v1980 = vrot.slane %v1979, 2
        %v1981 = vadd.f32 %v1979, %v1980
        %v1982 = vrot.slane %v1981, 1
        %v1983 = vadd.f32 %v1981, %v1982
        %v1984 = vmul.f32 %v1983, %v1974
        %v1985 = vmul.f32 %v1975, %v1975
        %v1986 = vsub.f32 %v1984, %v1985
        %v1987 = vmax.f32 %v1986, 0.0
        %v1988 = vsub.f32 %v1959, %v1975
        %v1989 = vadd.f32 %v1987, 1e-05
        %v1990 = vrsqrt.pop %v1989
        %v1991 = vmul.f32 %v1990, %v1989
        %v1992 = vmul.f32 %v1991, %v1990
        %v1993 = vmul.f32 0.5, %v1992
        %v1994 = vsub.f32 1.5, %v1993
        %v1995 = vmul.f32 %v1990, %v1994
        %vm1996 = vweird.f32 %v1989
        %vm1997 = vweird.f32 %v1990
        %vm1998 = vmor %vm1996, %vm1997
        %v1999 = vsel %vm1998, %v1990, %v1995
        %v2000 = vmul.f32 %v1988, %v1999
        %v2001 = vld [vmem:[#allocation13] sm:$0x1]
        %v2003 = vperm.slane %v2001, 0
        %v2005 = vmul.f32 %v2000, %v2003
        %v2006 = vld [vmem:[%s8] sm:$0x1]
        %v2008 = vperm.slane %v2006, 0
        %v2010 = vadd.f32 %v2005, %v2008
        %v2012 = vrot.slane %v1959, 2
        %v2014 = vsel %vm1960, %v2012, 0.0
        %v2015 = vrot.slane %v2014, 4
        %v2016 = vadd.f32 %v2014, %v2015
        %v2017 = vrot.slane %v2016, 2
        %v2018 = vadd.f32 %v2016, %v2017
        %v2019 = vrot.slane %v2018, 1
        %v2020 = vadd.f32 %v2018, %v2019
        %v2021 = vmul.f32 %v2020, %v1974
        %v2023 = vrot.slane %v1976, 2
        %v2025 = vsel %vm1960, %v2023, 0.0
        %v2026 = vrot.slane %v2025, 4
        %v2027 = vadd.f32 %v2025, %v2026
        %v2028 = vrot.slane %v2027, 2
        %v2029 = vadd.f32 %v2027, %v2028
        %v2030 = vrot.slane %v2029, 1
        %v2031 = vadd.f32 %v2029, %v2030
        %v2032 = vmul.f32 %v2031, %v1974
        %v2033 = vmul.f32 %v2021, %v2021
        %v2034 = vsub.f32 %v2032, %v2033
        %v2035 = vmax.f32 %v2034, 0.0
        %v2036 = vsub.f32 %v1959, %v2021
        %v2037 = vadd.f32 %v2035, 1e-05
        %v2038 = vrsqrt.pop %v2037
        %v2039 = vmul.f32 %v2038, %v2037
        %v2040 = vmul.f32 %v2039, %v2038
        %v2041 = vmul.f32 0.5, %v2040
        %v2042 = vsub.f32 1.5, %v2041
        %v2043 = vmul.f32 %v2038, %v2042
        %vm2044 = vweird.f32 %v2037
        %vm2045 = vweird.f32 %v2038
        %vm2046 = vmor %vm2044, %vm2045
        %v2047 = vsel %vm2046, %v2038, %v2043
        %v2048 = vmul.f32 %v2036, %v2047
        %v2049 = vmul.f32 %v2048, %v2003
        %v2050 = vadd.f32 %v2049, %v2008
        %v2051 = vsel %vm1928, %v2010, %v2050
        %v2052 = vld [vmem:[%s9] sm:$0xf]
        %v2053 = vld [vmem:[%s10] sm:$0x1]
        %v2055 = vperm.slane %v2053, 0
        %vm2057 = vcmask 31744
        %v2059 = vsel %vm2057, %v2051, 0
        %vm2061 = vcmask 1043456
        %v2063 = vsel %vm2061, %v2052, 0
        %2065 = vmatpush.msra.mxu0 0.0
        %2066 = vmatpush.msra.mxu0 0.0
        %2067 = vmatpush.msra.mxu0 0.0
        %2068 = vmatpush.msra.mxu0 0.0
        %2069 = vmatpush.msra.mxu0 0.0
        %2070 = vmatpush.msra.mxu0 0.0
        %2071 = vmatpush.msra.mxu0 0.0
        %2072 = vmatpush.msra.mxu0 0.0
        %2073 = vmatpush.msra.mxu0 0.0
        %2074 = vmatpush.msra.mxu0 0.0
        %2075 = vmatpush.msra.mxu0 0.0
        %2076 = vmatpush.msra.mxu0 0.0
        %2077 = vmatpush.msra.mxu0 0.0
        %2078 = vmatpush.msra.mxu0 0.0
        %2079 = vmatpush.msra.mxu0 0.0
        %2080 = vmatpush.msra.mxu0 %v2063
        %2081 = vmatmul.f32.gmra.mxu0 %v2059
        %v2082 = vpop.f32.mrf.mxu0
        %v2083 = vadd.f32 %v2055, %v2082
        %2084 = vdwg.mxu0
        %v2086 = vrot.slane %v2083, 2
        %v2088 = vadd.f32 %v2083, %v2086
        %v2089 = vsub.f32 0.0, %v2088
        %v2090 = vmul.f32 %v2089, 1.442695
        %v2091 = vpow.pop %v2090
        %v2092 = vadd.f32 %v2091, 1.0
        %v2093 = vrcp.pop %v2092
        %v2094 = vmul.f32 %v2092, %v2093
        %v2095 = vsub.f32 1.0, %v2094
        %v2096 = vmul.f32 %v2093, %v2095
        %v2097 = vadd.f32 %v2093, %v2096
        %vm2098 = vweird.f32 %v2092
        %vm2099 = vweird.f32 %v2093
        %vm2100 = vmor %vm2098, %vm2099
        %v2101 = vsel %vm2100, %v2093, %v2097
        %v2102 = vand.u32 2147483647, %v2092
        %vm2103 = vcmp.eq.f32.partialorder %v2102, 8.507059e+37
        %v2104 = vand.u32 %v2092, 2147483648
        %v2105 = vor.u32 1.1754944e-38, %v2104
        %v2106 = vsel %vm2103, %v2105, %v2101
        %2108 = vrot.lane.b32.xlu0 %v2106, 8
        %v2109 = vpop.permute.xlu0 %2108
        %2111 = vrot.lane.b32.xlu0 %v2106, 16
        %v2112 = vpop.permute.xlu0 %2111
        %2114 = vrot.lane.b32.xlu0 %v2106, 24
        %v2115 = vpop.permute.xlu0 %2114
        %2117 = vrot.lane.b32.xlu0 %v2106, 32
        %v2118 = vpop.permute.xlu0 %2117
        %2120 = vrot.lane.b32.xlu0 %v2106, 40
        %v2121 = vpop.permute.xlu0 %2120
        %2123 = vrot.lane.b32.xlu0 %v2106, 48
        %v2124 = vpop.permute.xlu0 %2123
        %2126 = vrot.lane.b32.xlu0 %v2106, 56
        %v2127 = vpop.permute.xlu0 %2126
        %2129 = vrot.lane.b32.xlu0 %v2106, 64
        %v2130 = vpop.permute.xlu0 %2129
        %2132 = vrot.lane.b32.xlu0 %v2106, 72
        %v2133 = vpop.permute.xlu0 %2132
        %2135 = vrot.lane.b32.xlu0 %v2106, 80
        %v2136 = vpop.permute.xlu0 %2135
        %2138 = vrot.lane.b32.xlu0 %v2106, 88
        %v2139 = vpop.permute.xlu0 %2138
        %2141 = vrot.lane.b32.xlu0 %v2106, 96
        %v2142 = vpop.permute.xlu0 %2141
        %2144 = vrot.lane.b32.xlu0 %v2106, 104
        %v2145 = vpop.permute.xlu0 %2144
        %2147 = vrot.lane.b32.xlu0 %v2106, 112
        %v2148 = vpop.permute.xlu0 %2147
        %2150 = vrot.lane.b32.xlu0 %v2106, 120
        %v2151 = vpop.permute.xlu0 %2150
        %v2153 = vsel %vm1705, %v2106, %v2109
        %v2154 = vsel %vm1707, %v2153, %v2112
        %v2155 = vsel %vm1709, %v2154, %v2115
        %v2156 = vsel %vm1711, %v2155, %v2118
        %v2157 = vsel %vm1713, %v2156, %v2121
        %v2158 = vsel %vm1715, %v2157, %v2124
        %v2159 = vsel %vm1717, %v2158, %v2127
        %v2160 = vsel %vm1719, %v2159, %v2130
        %v2161 = vsel %vm1721, %v2160, %v2133
        %v2162 = vsel %vm1723, %v2161, %v2136
        %v2163 = vsel %vm1725, %v2162, %v2139
        %v2164 = vsel %vm1727, %v2163, %v2142
        %v2165 = vsel %vm1729, %v2164, %v2145
        %v2166 = vsel %vm1731, %v2165, %v2148
        %v2167 = vsel %vm1733, %v2166, %v2151
        %v2169 = vrot.slane %v2167, 1
        %v2170 = vperm.slane %v2167, 0
        %v2171 = vperm.slane %v2169, 0
        %v2174 = vmul.f32 %v1741, %v2170
        %v2175 = vmul.f32 %v1742, %v2170
        %v2176 = vmul.f32 %v1743, %v2171
        %v2177 = vmul.f32 %v1744, %v2171
        %v2178 = vsel %vm1705, %v2174, -inf
        %2179 = vmax.xlane.f32.xlu0 %v2178
        %v2180 = vpop.xlane.xlu0 %2179
        %v2181 = vsel %vm1705, %v2175, -inf
        %2182 = vmax.xlane.f32.xlu0 %v2181
        %v2183 = vpop.xlane.xlu0 %2182
        %v2184 = vsel %vm1705, %v2176, -inf
        %2185 = vmax.xlane.f32.xlu0 %v2184
        %v2186 = vpop.xlane.xlu0 %2185
        %v2187 = vsel %vm1705, %v2177, -inf
        %2188 = vmax.xlane.f32.xlu0 %v2187
        %v2189 = vpop.xlane.xlu0 %2188
        %vm2190 = vcmask 130112
        %v2191 = vsel %vm2190, %v2174, -inf
        %2192 = vmax.xlane.f32.xlu0 %v2191
        %v2193 = vpop.xlane.xlu0 %2192
        %v2194 = vsel %vm2190, %v2175, -inf
        %2195 = vmax.xlane.f32.xlu0 %v2194
        %v2196 = vpop.xlane.xlu0 %2195
        %v2197 = vsel %vm2190, %v2176, -inf
        %2198 = vmax.xlane.f32.xlu0 %v2197
        %v2199 = vpop.xlane.xlu0 %2198
        %v2200 = vsel %vm2190, %v2177, -inf
        %2201 = vmax.xlane.f32.xlu0 %v2200
        %v2202 = vpop.xlane.xlu0 %2201
        %vm2203 = vcmask 195712
        %v2204 = vsel %vm2203, %v2174, -inf
        %2205 = vmax.xlane.f32.xlu0 %v2204
        %v2206 = vpop.xlane.xlu0 %2205
        %v2207 = vsel %vm2203, %v2175, -inf
        %2208 = vmax.xlane.f32.xlu0 %v2207
        %v2209 = vpop.xlane.xlu0 %2208
        %v2210 = vsel %vm2203, %v2176, -inf
        %2211 = vmax.xlane.f32.xlu0 %v2210
        %v2212 = vpop.xlane.xlu0 %2211
        %v2213 = vsel %vm2203, %v2177, -inf
        %2214 = vmax.xlane.f32.xlu0 %v2213
        %v2215 = vpop.xlane.xlu0 %2214
        %vm2216 = vcmask 261312
        %v2217 = vsel %vm2216, %v2174, -inf
        %2218 = vmax.xlane.f32.xlu0 %v2217
        %v2219 = vpop.xlane.xlu0 %2218
        %v2220 = vsel %vm2216, %v2175, -inf
        %2221 = vmax.xlane.f32.xlu0 %v2220
        %v2222 = vpop.xlane.xlu0 %2221
        %v2223 = vsel %vm2216, %v2176, -inf
        %2224 = vmax.xlane.f32.xlu0 %v2223
        %v2225 = vpop.xlane.xlu0 %2224
        %v2226 = vsel %vm2216, %v2177, -inf
        %2227 = vmax.xlane.f32.xlu0 %v2226
        %v2228 = vpop.xlane.xlu0 %2227
        %vm2229 = vcmask 326912
        %v2230 = vsel %vm2229, %v2174, -inf
        %2231 = vmax.xlane.f32.xlu0 %v2230
        %v2232 = vpop.xlane.xlu0 %2231
        %v2233 = vsel %vm2229, %v2175, -inf
        %2234 = vmax.xlane.f32.xlu0 %v2233
        %v2235 = vpop.xlane.xlu0 %2234
        %v2236 = vsel %vm2229, %v2176, -inf
        %2237 = vmax.xlane.f32.xlu0 %v2236
        %v2238 = vpop.xlane.xlu0 %2237
        %v2239 = vsel %vm2229, %v2177, -inf
        %2240 = vmax.xlane.f32.xlu0 %v2239
        %v2241 = vpop.xlane.xlu0 %2240
        %vm2242 = vcmask 392512
        %v2243 = vsel %vm2242, %v2174, -inf
        %2244 = vmax.xlane.f32.xlu0 %v2243
        %v2245 = vpop.xlane.xlu0 %2244
        %v2246 = vsel %vm2242, %v2175, -inf
        %2247 = vmax.xlane.f32.xlu0 %v2246
        %v2248 = vpop.xlane.xlu0 %2247
        %v2249 = vsel %vm2242, %v2176, -inf
        %2250 = vmax.xlane.f32.xlu0 %v2249
        %v2251 = vpop.xlane.xlu0 %2250
        %v2252 = vsel %vm2242, %v2177, -inf
        %2253 = vmax.xlane.f32.xlu0 %v2252
        %v2254 = vpop.xlane.xlu0 %2253
        %vm2255 = vcmask 458112
        %v2256 = vsel %vm2255, %v2174, -inf
        %2257 = vmax.xlane.f32.xlu0 %v2256
        %v2258 = vpop.xlane.xlu0 %2257
        %v2259 = vsel %vm2255, %v2175, -inf
        %2260 = vmax.xlane.f32.xlu0 %v2259
        %v2261 = vpop.xlane.xlu0 %2260
        %v2262 = vsel %vm2255, %v2176, -inf
        %2263 = vmax.xlane.f32.xlu0 %v2262
        %v2264 = vpop.xlane.xlu0 %2263
        %v2265 = vsel %vm2255, %v2177, -inf
        %2266 = vmax.xlane.f32.xlu0 %v2265
        %v2267 = vpop.xlane.xlu0 %2266
        %vm2268 = vcmask 523712
        %v2269 = vsel %vm2268, %v2174, -inf
        %2270 = vmax.xlane.f32.xlu0 %v2269
        %v2271 = vpop.xlane.xlu0 %2270
        %v2272 = vsel %vm2268, %v2175, -inf
        %2273 = vmax.xlane.f32.xlu0 %v2272
        %v2274 = vpop.xlane.xlu0 %2273
        %v2275 = vsel %vm2268, %v2176, -inf
        %2276 = vmax.xlane.f32.xlu0 %v2275
        %v2277 = vpop.xlane.xlu0 %2276
        %v2278 = vsel %vm2268, %v2177, -inf
        %2279 = vmax.xlane.f32.xlu0 %v2278
        %v2280 = vpop.xlane.xlu0 %2279
        %vm2281 = vcmask 589312
        %v2282 = vsel %vm2281, %v2174, -inf
        %2283 = vmax.xlane.f32.xlu0 %v2282
        %v2284 = vpop.xlane.xlu0 %2283
        %v2285 = vsel %vm2281, %v2175, -inf
        %2286 = vmax.xlane.f32.xlu0 %v2285
        %v2287 = vpop.xlane.xlu0 %2286
        %v2288 = vsel %vm2281, %v2176, -inf
        %2289 = vmax.xlane.f32.xlu0 %v2288
        %v2290 = vpop.xlane.xlu0 %2289
        %v2291 = vsel %vm2281, %v2177, -inf
        %2292 = vmax.xlane.f32.xlu0 %v2291
        %v2293 = vpop.xlane.xlu0 %2292
        %vm2294 = vcmask 654912
        %v2295 = vsel %vm2294, %v2174, -inf
        %2296 = vmax.xlane.f32.xlu0 %v2295
        %v2297 = vpop.xlane.xlu0 %2296
        %v2298 = vsel %vm2294, %v2175, -inf
        %2299 = vmax.xlane.f32.xlu0 %v2298
        %v2300 = vpop.xlane.xlu0 %2299
        %v2301 = vsel %vm2294, %v2176, -inf
        %2302 = vmax.xlane.f32.xlu0 %v2301
        %v2303 = vpop.xlane.xlu0 %2302
        %v2304 = vsel %vm2294, %v2177, -inf
        %2305 = vmax.xlane.f32.xlu0 %v2304
        %v2306 = vpop.xlane.xlu0 %2305
        %vm2307 = vcmask 720512
        %v2308 = vsel %vm2307, %v2174, -inf
        %2309 = vmax.xlane.f32.xlu0 %v2308
        %v2310 = vpop.xlane.xlu0 %2309
        %v2311 = vsel %vm2307, %v2175, -inf
        %2312 = vmax.xlane.f32.xlu0 %v2311
        %v2313 = vpop.xlane.xlu0 %2312
        %v2314 = vsel %vm2307, %v2176, -inf
        %2315 = vmax.xlane.f32.xlu0 %v2314
        %v2316 = vpop.xlane.xlu0 %2315
        %v2317 = vsel %vm2307, %v2177, -inf
        %2318 = vmax.xlane.f32.xlu0 %v2317
        %v2319 = vpop.xlane.xlu0 %2318
        %vm2320 = vcmask 786112
        %v2321 = vsel %vm2320, %v2174, -inf
        %2322 = vmax.xlane.f32.xlu0 %v2321
        %v2323 = vpop.xlane.xlu0 %2322
        %v2324 = vsel %vm2320, %v2175, -inf
        %2325 = vmax.xlane.f32.xlu0 %v2324
        %v2326 = vpop.xlane.xlu0 %2325
        %v2327 = vsel %vm2320, %v2176, -inf
        %2328 = vmax.xlane.f32.xlu0 %v2327
        %v2329 = vpop.xlane.xlu0 %2328
        %v2330 = vsel %vm2320, %v2177, -inf
        %2331 = vmax.xlane.f32.xlu0 %v2330
        %v2332 = vpop.xlane.xlu0 %2331
        %vm2333 = vcmask 851712
        %v2334 = vsel %vm2333, %v2174, -inf
        %2335 = vmax.xlane.f32.xlu0 %v2334
        %v2336 = vpop.xlane.xlu0 %2335
        %v2337 = vsel %vm2333, %v2175, -inf
        %2338 = vmax.xlane.f32.xlu0 %v2337
        %v2339 = vpop.xlane.xlu0 %2338
        %v2340 = vsel %vm2333, %v2176, -inf
        %2341 = vmax.xlane.f32.xlu0 %v2340
        %v2342 = vpop.xlane.xlu0 %2341
        %v2343 = vsel %vm2333, %v2177, -inf
        %2344 = vmax.xlane.f32.xlu0 %v2343
        %v2345 = vpop.xlane.xlu0 %2344
        %vm2346 = vcmask 917312
        %v2347 = vsel %vm2346, %v2174, -inf
        %2348 = vmax.xlane.f32.xlu0 %v2347
        %v2349 = vpop.xlane.xlu0 %2348
        %v2350 = vsel %vm2346, %v2175, -inf
        %2351 = vmax.xlane.f32.xlu0 %v2350
        %v2352 = vpop.xlane.xlu0 %2351
        %v2353 = vsel %vm2346, %v2176, -inf
        %2354 = vmax.xlane.f32.xlu0 %v2353
        %v2355 = vpop.xlane.xlu0 %2354
        %v2356 = vsel %vm2346, %v2177, -inf
        %2357 = vmax.xlane.f32.xlu0 %v2356
        %v2358 = vpop.xlane.xlu0 %2357
        %vm2359 = vcmask 982912
        %v2360 = vsel %vm2359, %v2174, -inf
        %2361 = vmax.xlane.f32.xlu0 %v2360
        %v2362 = vpop.xlane.xlu0 %2361
        %v2363 = vsel %vm2359, %v2175, -inf
        %2364 = vmax.xlane.f32.xlu0 %v2363
        %v2365 = vpop.xlane.xlu0 %2364
        %v2366 = vsel %vm2359, %v2176, -inf
        %2367 = vmax.xlane.f32.xlu0 %v2366
        %v2368 = vpop.xlane.xlu0 %2367
        %v2369 = vsel %vm2359, %v2177, -inf
        %2370 = vmax.xlane.f32.xlu0 %v2369
        %v2371 = vpop.xlane.xlu0 %2370
        %vm2372 = vcmask 1048512
        %v2373 = vsel %vm2372, %v2174, -inf
        %2374 = vmax.xlane.f32.xlu0 %v2373
        %v2375 = vpop.xlane.xlu0 %2374
        %v2376 = vsel %vm2372, %v2175, -inf
        %2377 = vmax.xlane.f32.xlu0 %v2376
        %v2378 = vpop.xlane.xlu0 %2377
        %v2379 = vsel %vm2372, %v2176, -inf
        %2380 = vmax.xlane.f32.xlu0 %v2379
        %v2381 = vpop.xlane.xlu0 %2380
        %v2382 = vsel %vm2372, %v2177, -inf
        %2383 = vmax.xlane.f32.xlu0 %v2382
        %v2384 = vpop.xlane.xlu0 %2383
        %vm2385 = vcmask 7168
        %v2386 = vsel %vm2385, %v2180, %v2193
        %v2387 = vsel %vm2385, %v2183, %v2196
        %v2388 = vsel %vm2385, %v2186, %v2199
        %v2389 = vsel %vm2385, %v2189, %v2202
        %vm2390 = vcmask 15360
        %v2391 = vsel %vm2390, %v2386, %v2206
        %v2392 = vsel %vm2390, %v2387, %v2209
        %v2393 = vsel %vm2390, %v2388, %v2212
        %v2394 = vsel %vm2390, %v2389, %v2215
        %vm2395 = vcmask 23552
        %v2396 = vsel %vm2395, %v2391, %v2219
        %v2397 = vsel %vm2395, %v2392, %v2222
        %v2398 = vsel %vm2395, %v2393, %v2225
        %v2399 = vsel %vm2395, %v2394, %v2228
        %v2400 = vsel %vm2057, %v2396, %v2232
        %v2401 = vsel %vm2057, %v2397, %v2235
        %v2402 = vsel %vm2057, %v2398, %v2238
        %v2403 = vsel %vm2057, %v2399, %v2241
        %vm2404 = vcmask 39936
        %v2405 = vsel %vm2404, %v2400, %v2245
        %v2406 = vsel %vm2404, %v2401, %v2248
        %v2407 = vsel %vm2404, %v2402, %v2251
        %v2408 = vsel %vm2404, %v2403, %v2254
        %vm2409 = vcmask 48128
        %v2410 = vsel %vm2409, %v2405, %v2258
        %v2411 = vsel %vm2409, %v2406, %v2261
        %v2412 = vsel %vm2409, %v2407, %v2264
        %v2413 = vsel %vm2409, %v2408, %v2267
        %vm2414 = vcmask 56320
        %v2415 = vsel %vm2414, %v2410, %v2271
        %v2416 = vsel %vm2414, %v2411, %v2274
        %v2417 = vsel %vm2414, %v2412, %v2277
        %v2418 = vsel %vm2414, %v2413, %v2280
        %v2419 = vsel %vm1705, %v2415, %v2284
        %v2420 = vsel %vm1705, %v2416, %v2287
        %v2421 = vsel %vm1705, %v2417, %v2290
        %v2422 = vsel %vm1705, %v2418, %v2293
        %vm2423 = vcmask 72704
        %v2424 = vsel %vm2423, %v2419, %v2297
        %v2425 = vsel %vm2423, %v2420, %v2300
        %v2426 = vsel %vm2423, %v2421, %v2303
        %v2427 = vsel %vm2423, %v2422, %v2306
        %vm2428 = vcmask 80896
        %v2429 = vsel %vm2428, %v2424, %v2310
        %v2430 = vsel %vm2428, %v2425, %v2313
        %v2431 = vsel %vm2428, %v2426, %v2316
        %v2432 = vsel %vm2428, %v2427, %v2319
        %vm2433 = vcmask 89088
        %v2434 = vsel %vm2433, %v2429, %v2323
        %v2435 = vsel %vm2433, %v2430, %v2326
        %v2436 = vsel %vm2433, %v2431, %v2329
        %v2437 = vsel %vm2433, %v2432, %v2332
        %vm2438 = vcmask 97280
        %v2439 = vsel %vm2438, %v2434, %v2336
        %v2440 = vsel %vm2438, %v2435, %v2339
        %v2441 = vsel %vm2438, %v2436, %v2342
        %v2442 = vsel %vm2438, %v2437, %v2345
        %vm2443 = vcmask 105472
        %v2444 = vsel %vm2443, %v2439, %v2349
        %v2445 = vsel %vm2443, %v2440, %v2352
        %v2446 = vsel %vm2443, %v2441, %v2355
        %v2447 = vsel %vm2443, %v2442, %v2358
        %vm2448 = vcmask 113664
        %v2449 = vsel %vm2448, %v2444, %v2362
        %v2450 = vsel %vm2448, %v2445, %v2365
        %v2451 = vsel %vm2448, %v2446, %v2368
        %v2452 = vsel %vm2448, %v2447, %v2371
        %vm2453 = vcmask 121856
        %v2454 = vsel %vm2453, %v2449, %v2375
        %v2455 = vsel %vm2453, %v2450, %v2378
        %v2456 = vsel %vm2453, %v2451, %v2381
        %v2457 = vsel %vm2453, %v2452, %v2384
        %vm2462 = vcmask 1042432
        %v2463 = vrot.slane %v2174, 5
        %v2464 = vrot.slane %v2175, 5
        %v2465 = vsel %vm2462, %v2463, %v2464
        %v2466 = vrot.slane %v2176, 5
        %v2467 = vrot.slane %v2177, 5
        %v2468 = vsel %vm2462, %v2466, %v2467
        %2475 = vst [vmem:[#allocation4] sm:$0xf8] %v2463
        %2476 = vst [vmem:[#allocation4 + $0x10] sm:$0xff] %v2465
        %2477 = vst [vmem:[#allocation4 + $0x20] sm:$0x7] %v2464
        %2478 = vst [vmem:[#allocation4 + $0x30] sm:$0xf8] %v2466
        %2479 = vst [vmem:[#allocation4 + $0x40] sm:$0xff] %v2468
        %2480 = vst [vmem:[#allocation4 + $0x50] sm:$0x7] %v2467
        %v2485 = vrot.slane %v2454, 5
        %v2486 = vrot.slane %v2455, 5
        %v2487 = vsel %vm2462, %v2485, %v2486
        %v2488 = vrot.slane %v2456, 5
        %v2489 = vrot.slane %v2457, 5
        %v2490 = vsel %vm2462, %v2488, %v2489
        %vm2497 = vcmask 130051
        %2498 = vst.msk [vmem:[#allocation4 + $0x8] sm:$0xf8] %vm2497, %v2485
        %2499 = vst.msk [vmem:[#allocation4 + $0x18] sm:$0xff] %vm1707, %v2487
        %vm2500 = vcmask 124928
        %2501 = vst.msk [vmem:[#allocation4 + $0x28] sm:$0x7] %vm2500, %v2486
        %2502 = vst.msk [vmem:[#allocation4 + $0x38] sm:$0xf8] %vm2497, %v2488
        %2503 = vst.msk [vmem:[#allocation4 + $0x48] sm:$0xff] %vm1707, %v2490
        %2504 = vst.msk [vmem:[#allocation4 + $0x58] sm:$0x7] %vm2500, %v2489
        %v2505 = vld [vmem:[#allocation4] sm:$0xff]
        %v2506 = vld [vmem:[#allocation4 + $0x8] sm:$0xff]
        %v2507 = vld [vmem:[#allocation4 + $0x10] sm:$0xff]
        %v2508 = vld [vmem:[#allocation4 + $0x18] sm:$0xff]
        %v2509 = vld [vmem:[#allocation4 + $0x30] sm:$0xff]
        %v2510 = vld [vmem:[#allocation4 + $0x38] sm:$0xff]
        %v2511 = vld [vmem:[#allocation4 + $0x40] sm:$0xff]
        %v2512 = vld [vmem:[#allocation4 + $0x48] sm:$0xff]
        %v2513 = vld [vmem:[#allocation15] sm:$0xff]
        %v2514 = vld [vmem:[#allocation15 + $0x8] sm:$0xff]
        %v2515 = vld [vmem:[#allocation15 + $0x10] sm:$0xff]
        %v2516 = vld [vmem:[#allocation15 + $0x18] sm:$0xff]
        %v2517 = vld [vmem:[#allocation15 + $0x20] sm:$0xff]
        %v2518 = vld [vmem:[#allocation15 + $0x28] sm:$0xff]
        %v2519 = vld [vmem:[#allocation15 + $0x30] sm:$0xff]
        %v2520 = vld [vmem:[#allocation15 + $0x38] sm:$0xff]
        %v2521 = vld [vmem:[#allocation15 + $0x40] sm:$0xff]
        %v2522 = vld [vmem:[#allocation15 + $0x48] sm:$0xff]
        %v2523 = vld [vmem:[#allocation15 + $0x50] sm:$0xff]
        %v2524 = vld [vmem:[#allocation15 + $0x58] sm:$0xff]
        %v2525 = vld [vmem:[#allocation15 + $0x60] sm:$0xff]
        %v2526 = vld [vmem:[#allocation15 + $0x68] sm:$0xff]
        %v2527 = vld [vmem:[#allocation15 + $0x70] sm:$0xff]
        %v2528 = vld [vmem:[#allocation15 + $0x78] sm:$0xff]
        %v2529 = vld [vmem:[#allocation15 + $0x80] sm:$0xff]
        %v2530 = vld [vmem:[#allocation15 + $0x88] sm:$0xff]
        %v2531 = vld [vmem:[#allocation4] sm:$0xfe]
        %v2532 = vld [vmem:[#allocation4 + $0x8] sm:$0xfe]
        %v2533 = vld [vmem:[#allocation4 + $0x20] sm:$0x1]
        %v2534 = vld [vmem:[#allocation4 + $0x28] sm:$0x1]
        %v2535 = vld [vmem:[#allocation4 + $0x30] sm:$0xfe]
        %v2536 = vld [vmem:[#allocation4 + $0x38] sm:$0xfe]
        %v2537 = vld [vmem:[#allocation4 + $0x50] sm:$0x1]
        %v2538 = vld [vmem:[#allocation4 + $0x58] sm:$0x1]
        %v2551 = vrot.slane %v2531, 1
        %v2552 = vrot.slane %v2507, 1
        %v2553 = vsel %vm933, %v2551, %v2552
        %v2554 = vrot.slane %v2532, 1
        %v2555 = vrot.slane %v2508, 1
        %v2556 = vsel %vm933, %v2554, %v2555
        %v2557 = vrot.slane %v2533, 1
        %v2558 = vsel %vm933, %v2552, %v2557
        %v2559 = vrot.slane %v2534, 1
        %v2560 = vsel %vm933, %v2555, %v2559
        %v2561 = vrot.slane %v2535, 1
        %v2562 = vrot.slane %v2511, 1
        %v2563 = vsel %vm933, %v2561, %v2562
        %v2564 = vrot.slane %v2536, 1
        %v2565 = vrot.slane %v2512, 1
        %v2566 = vsel %vm933, %v2564, %v2565
        %v2567 = vrot.slane %v2537, 1
        %v2568 = vsel %vm933, %v2562, %v2567
        %v2569 = vrot.slane %v2538, 1
        %v2570 = vsel %vm933, %v2565, %v2569
        %s2575 = scalar_lea.vmem [#allocation15], 144
        %v2576 = vld [vmem:[%s2575] sm:$0xff]
        %v2577 = vld [vmem:[%s2575 + $0x8] sm:$0xff]
        %v2578 = vld [vmem:[%s2575 + $0x10] sm:$0xff]
        %v2579 = vld [vmem:[%s2575 + $0x18] sm:$0xff]
        %v2580 = vld [vmem:[%s2575 + $0x20] sm:$0xff]
        %v2581 = vld [vmem:[%s2575 + $0x28] sm:$0xff]
        %v2582 = vld [vmem:[%s2575 + $0x30] sm:$0xff]
        %v2583 = vld [vmem:[%s2575 + $0x38] sm:$0xff]
        %v2584 = vld [vmem:[%s2575 + $0x40] sm:$0xff]
        %v2585 = vld [vmem:[%s2575 + $0x48] sm:$0xff]
        %v2586 = vld [vmem:[%s2575 + $0x50] sm:$0xff]
        %v2587 = vld [vmem:[%s2575 + $0x58] sm:$0xff]
        %v2588 = vld [vmem:[%s2575 + $0x60] sm:$0xff]
        %v2589 = vld [vmem:[%s2575 + $0x68] sm:$0xff]
        %v2590 = vld [vmem:[%s2575 + $0x70] sm:$0xff]
        %v2591 = vld [vmem:[%s2575 + $0x78] sm:$0xff]
        %v2592 = vld [vmem:[%s2575 + $0x80] sm:$0xff]
        %v2593 = vld [vmem:[%s2575 + $0x88] sm:$0xff]
        %v2594 = vsel %vm1707, %v2556, 0
        %v2596 = vsel %vm1707, %v2560, 0
        %v2598 = vsel %vm1707, %v2566, 0
        %v2600 = vsel %vm1707, %v2570, 0
        %2602 = vmatpush.msra.mxu0 %v2591
        %2603 = vmatpush.msra.mxu0 %v2590
        %2604 = vmatpush.msra.mxu0 %v2589
        %2605 = vmatpush.msra.mxu0 %v2588
        %2606 = vmatpush.msra.mxu0 %v2587
        %2607 = vmatpush.msra.mxu0 %v2586
        %2608 = vmatpush.msra.mxu0 %v2585
        %2609 = vmatpush.msra.mxu0 %v2584
        %2610 = vmatpush.msra.mxu0 %v2583
        %2611 = vmatpush.msra.mxu0 %v2582
        %2612 = vmatpush.msra.mxu0 %v2581
        %2613 = vmatpush.msra.mxu0 %v2580
        %2614 = vmatpush.msra.mxu0 %v2579
        %2615 = vmatpush.msra.mxu0 %v2578
        %2616 = vmatpush.msra.mxu0 %v2577
        %2617 = vmatpush.msra.mxu0 %v2576
        %2618 = vmatmul.f32.gmra.mxu0 %v2553
        %v2619 = vpop.f32.mrf.mxu0
        %v2620 = vadd.f32 0.0, %v2619
        %2621 = vmatmul.f32.gmra.mxu0 %v2558
        %v2622 = vpop.f32.mrf.mxu0
        %v2623 = vadd.f32 0.0, %v2622
        %2624 = vmatmul.f32.gmra.mxu0 %v2563
        %v2625 = vpop.f32.mrf.mxu0
        %v2626 = vadd.f32 0.0, %v2625
        %2627 = vmatmul.f32.gmra.mxu0 %v2568
        %v2628 = vpop.f32.mrf.mxu0
        %v2629 = vadd.f32 0.0, %v2628
        %2630 = vdwg.mxu0
        %2631 = vmatpush.msra.mxu0 0.0
        %2632 = vmatpush.msra.mxu0 0.0
        %2633 = vmatpush.msra.mxu0 0.0
        %2634 = vmatpush.msra.mxu0 0.0
        %2635 = vmatpush.msra.mxu0 0.0
        %2636 = vmatpush.msra.mxu0 0.0
        %2637 = vmatpush.msra.mxu0 0.0
        %2638 = vmatpush.msra.mxu0 0.0
        %2639 = vmatpush.msra.mxu0 0.0
        %2640 = vmatpush.msra.mxu0 0.0
        %2641 = vmatpush.msra.mxu0 0.0
        %2642 = vmatpush.msra.mxu0 0.0
        %2643 = vmatpush.msra.mxu0 0.0
        %2644 = vmatpush.msra.mxu0 0.0
        %2645 = vmatpush.msra.mxu0 %v2593
        %2646 = vmatpush.msra.mxu0 %v2592
        %2647 = vmatmul.f32.gmra.mxu0 %v2594
        %v2648 = vpop.f32.mrf.mxu0
        %v2649 = vadd.f32 %v2620, %v2648
        %2650 = vmatmul.f32.gmra.mxu0 %v2596
        %v2651 = vpop.f32.mrf.mxu0
        %v2652 = vadd.f32 %v2623, %v2651
        %2653 = vmatmul.f32.gmra.mxu0 %v2598
        %v2654 = vpop.f32.mrf.mxu0
        %v2655 = vadd.f32 %v2626, %v2654
        %2656 = vmatmul.f32.gmra.mxu0 %v2600
        %v2657 = vpop.f32.mrf.mxu0
        %v2658 = vadd.f32 %v2629, %v2657
        %2659 = vdwg.mxu0
        %v2661 = vsel %vm1707, %v2506, 0
        %v2663 = vsel %vm1707, %v2508, 0
        %v2666 = vsel %vm1707, %v2510, 0
        %v2668 = vsel %vm1707, %v2512, 0
        %2670 = vmatpush.msra.mxu0 %v2528
        %2671 = vmatpush.msra.mxu0 %v2527
        %2672 = vmatpush.msra.mxu0 %v2526
        %2673 = vmatpush.msra.mxu0 %v2525
        %2674 = vmatpush.msra.mxu0 %v2524
        %2675 = vmatpush.msra.mxu0 %v2523
        %2676 = vmatpush.msra.mxu0 %v2522
        %2677 = vmatpush.msra.mxu0 %v2521
        %2678 = vmatpush.msra.mxu0 %v2520
        %2679 = vmatpush.msra.mxu0 %v2519
        %2680 = vmatpush.msra.mxu0 %v2518
        %2681 = vmatpush.msra.mxu0 %v2517
        %2682 = vmatpush.msra.mxu0 %v2516
        %2683 = vmatpush.msra.mxu0 %v2515
        %2684 = vmatpush.msra.mxu0 %v2514
        %2685 = vmatpush.msra.mxu0 %v2513
        %2686 = vmatmul.f32.gmra.mxu0 %v2505
        %v2687 = vpop.f32.mrf.mxu0
        %v2688 = vadd.f32 %v2649, %v2687
        %2689 = vmatmul.f32.gmra.mxu0 %v2507
        %v2690 = vpop.f32.mrf.mxu0
        %v2691 = vadd.f32 %v2652, %v2690
        %2692 = vmatmul.f32.gmra.mxu0 %v2509
        %v2693 = vpop.f32.mrf.mxu0
        %v2694 = vadd.f32 %v2655, %v2693
        %2695 = vmatmul.f32.gmra.mxu0 %v2511
        %v2696 = vpop.f32.mrf.mxu0
        %v2697 = vadd.f32 %v2658, %v2696
        %2698 = vdwg.mxu0
        %2699 = vmatpush.msra.mxu0 0.0
        %2700 = vmatpush.msra.mxu0 0.0
        %2701 = vmatpush.msra.mxu0 0.0
        %2702 = vmatpush.msra.mxu0 0.0
        %2703 = vmatpush.msra.mxu0 0.0
        %2704 = vmatpush.msra.mxu0 0.0
        %2705 = vmatpush.msra.mxu0 0.0
        %2706 = vmatpush.msra.mxu0 0.0
        %2707 = vmatpush.msra.mxu0 0.0
        %2708 = vmatpush.msra.mxu0 0.0
        %2709 = vmatpush.msra.mxu0 0.0
        %2710 = vmatpush.msra.mxu0 0.0
        %2711 = vmatpush.msra.mxu0 0.0
        %2712 = vmatpush.msra.mxu0 0.0
        %2713 = vmatpush.msra.mxu0 %v2530
        %2714 = vmatpush.msra.mxu0 %v2529
        %2715 = vmatmul.f32.gmra.mxu0 %v2661
        %v2716 = vpop.f32.mrf.mxu0
        %v2717 = vadd.f32 %v2688, %v2716
        %2718 = vmatmul.f32.gmra.mxu0 %v2663
        %v2719 = vpop.f32.mrf.mxu0
        %v2720 = vadd.f32 %v2691, %v2719
        %2721 = vmatmul.f32.gmra.mxu0 %v2666
        %v2722 = vpop.f32.mrf.mxu0
        %v2723 = vadd.f32 %v2694, %v2722
        %2724 = vmatmul.f32.gmra.mxu0 %v2668
        %v2725 = vpop.f32.mrf.mxu0
        %v2726 = vadd.f32 %v2697, %v2725
        %2727 = vdwg.mxu0
        %v2728 = vld [vmem:[#allocation4] sm:$0xfc]
        %v2729 = vld [vmem:[#allocation4 + $0x8] sm:$0xfc]
        %v2730 = vld [vmem:[#allocation4 + $0x20] sm:$0x3]
        %v2731 = vld [vmem:[#allocation4 + $0x28] sm:$0x3]
        %v2732 = vld [vmem:[#allocation4 + $0x30] sm:$0xfc]
        %v2733 = vld [vmem:[#allocation4 + $0x38] sm:$0xfc]
        %v2734 = vld [vmem:[#allocation4 + $0x50] sm:$0x3]
        %v2735 = vld [vmem:[#allocation4 + $0x58] sm:$0x3]
        %v2744 = vrot.slane %v2728, 2
        %v2745 = vrot.slane %v2507, 2
        %v2746 = vsel %vm1283, %v2744, %v2745
        %v2747 = vrot.slane %v2729, 2
        %v2748 = vrot.slane %v2508, 2
        %v2749 = vsel %vm1283, %v2747, %v2748
        %v2750 = vrot.slane %v2730, 2
        %v2751 = vsel %vm1283, %v2745, %v2750
        %v2752 = vrot.slane %v2731, 2
        %v2753 = vsel %vm1283, %v2748, %v2752
        %v2754 = vrot.slane %v2732, 2
        %v2755 = vrot.slane %v2511, 2
        %v2756 = vsel %vm1283, %v2754, %v2755
        %v2757 = vrot.slane %v2733, 2
        %v2758 = vrot.slane %v2512, 2
        %v2759 = vsel %vm1283, %v2757, %v2758
        %v2760 = vrot.slane %v2734, 2
        %v2761 = vsel %vm1283, %v2755, %v2760
        %v2762 = vrot.slane %v2735, 2
        %v2763 = vsel %vm1283, %v2758, %v2762
        %s2768 = scalar_lea.vmem [#allocation15], 288
        %v2769 = vld [vmem:[%s2768] sm:$0xff]
        %v2770 = vld [vmem:[%s2768 + $0x8] sm:$0xff]
        %v2771 = vld [vmem:[%s2768 + $0x10] sm:$0xff]
        %v2772 = vld [vmem:[%s2768 + $0x18] sm:$0xff]
        %v2773 = vld [vmem:[%s2768 + $0x20] sm:$0xff]
        %v2774 = vld [vmem:[%s2768 + $0x28] sm:$0xff]
        %v2775 = vld [vmem:[%s2768 + $0x30] sm:$0xff]
        %v2776 = vld [vmem:[%s2768 + $0x38] sm:$0xff]
        %v2777 = vld [vmem:[%s2768 + $0x40] sm:$0xff]
        %v2778 = vld [vmem:[%s2768 + $0x48] sm:$0xff]
        %v2779 = vld [vmem:[%s2768 + $0x50] sm:$0xff]
        %v2780 = vld [vmem:[%s2768 + $0x58] sm:$0xff]
        %v2781 = vld [vmem:[%s2768 + $0x60] sm:$0xff]
        %v2782 = vld [vmem:[%s2768 + $0x68] sm:$0xff]
        %v2783 = vld [vmem:[%s2768 + $0x70] sm:$0xff]
        %v2784 = vld [vmem:[%s2768 + $0x78] sm:$0xff]
        %v2785 = vld [vmem:[%s2768 + $0x80] sm:$0xff]
        %v2786 = vld [vmem:[%s2768 + $0x88] sm:$0xff]
        %v2787 = vsel %vm1707, %v2749, 0
        %v2789 = vsel %vm1707, %v2753, 0
        %v2791 = vsel %vm1707, %v2759, 0
        %v2793 = vsel %vm1707, %v2763, 0
        %2795 = vmatpush.msra.mxu0 %v2784
        %2796 = vmatpush.msra.mxu0 %v2783
        %2797 = vmatpush.msra.mxu0 %v2782
        %2798 = vmatpush.msra.mxu0 %v2781
        %2799 = vmatpush.msra.mxu0 %v2780
        %2800 = vmatpush.msra.mxu0 %v2779
        %2801 = vmatpush.msra.mxu0 %v2778
        %2802 = vmatpush.msra.mxu0 %v2777
        %2803 = vmatpush.msra.mxu0 %v2776
        %2804 = vmatpush.msra.mxu0 %v2775
        %2805 = vmatpush.msra.mxu0 %v2774
        %2806 = vmatpush.msra.mxu0 %v2773
        %2807 = vmatpush.msra.mxu0 %v2772
        %2808 = vmatpush.msra.mxu0 %v2771
        %2809 = vmatpush.msra.mxu0 %v2770
        %2810 = vmatpush.msra.mxu0 %v2769
        %2811 = vmatmul.f32.gmra.mxu0 %v2746
        %v2812 = vpop.f32.mrf.mxu0
        %v2813 = vadd.f32 0.0, %v2812
        %2814 = vmatmul.f32.gmra.mxu0 %v2751
        %v2815 = vpop.f32.mrf.mxu0
        %v2816 = vadd.f32 0.0, %v2815
        %2817 = vmatmul.f32.gmra.mxu0 %v2756
        %v2818 = vpop.f32.mrf.mxu0
        %v2819 = vadd.f32 0.0, %v2818
        %2820 = vmatmul.f32.gmra.mxu0 %v2761
        %v2821 = vpop.f32.mrf.mxu0
        %v2822 = vadd.f32 0.0, %v2821
        %2823 = vdwg.mxu0
        %2824 = vmatpush.msra.mxu0 0.0
        %2825 = vmatpush.msra.mxu0 0.0
        %2826 = vmatpush.msra.mxu0 0.0
        %2827 = vmatpush.msra.mxu0 0.0
        %2828 = vmatpush.msra.mxu0 0.0
        %2829 = vmatpush.msra.mxu0 0.0
        %2830 = vmatpush.msra.mxu0 0.0
        %2831 = vmatpush.msra.mxu0 0.0
        %2832 = vmatpush.msra.mxu0 0.0
        %2833 = vmatpush.msra.mxu0 0.0
        %2834 = vmatpush.msra.mxu0 0.0
        %2835 = vmatpush.msra.mxu0 0.0
        %2836 = vmatpush.msra.mxu0 0.0
        %2837 = vmatpush.msra.mxu0 0.0
        %2838 = vmatpush.msra.mxu0 %v2786
        %2839 = vmatpush.msra.mxu0 %v2785
        %2840 = vmatmul.f32.gmra.mxu0 %v2787
        %v2841 = vpop.f32.mrf.mxu0
        %v2842 = vadd.f32 %v2813, %v2841
        %2843 = vmatmul.f32.gmra.mxu0 %v2789
        %v2844 = vpop.f32.mrf.mxu0
        %v2845 = vadd.f32 %v2816, %v2844
        %2846 = vmatmul.f32.gmra.mxu0 %v2791
        %v2847 = vpop.f32.mrf.mxu0
        %v2848 = vadd.f32 %v2819, %v2847
        %2849 = vmatmul.f32.gmra.mxu0 %v2793
        %v2850 = vpop.f32.mrf.mxu0
        %v2851 = vadd.f32 %v2822, %v2850
        %2852 = vdwg.mxu0
        %v2853 = vadd.f32 %v2717, %v2842
        %v2854 = vadd.f32 %v2720, %v2845
        %v2855 = vadd.f32 %v2723, %v2848
        %v2856 = vadd.f32 %v2726, %v2851
        %v2857 = vld [vmem:[#allocation4] sm:$0xf8]
        %v2858 = vld [vmem:[#allocation4 + $0x8] sm:$0xf8]
        %v2859 = vld [vmem:[#allocation4 + $0x20] sm:$0x7]
        %v2860 = vld [vmem:[#allocation4 + $0x28] sm:$0x7]
        %v2861 = vld [vmem:[#allocation4 + $0x30] sm:$0xf8]
        %v2862 = vld [vmem:[#allocation4 + $0x38] sm:$0xf8]
        %v2863 = vld [vmem:[#allocation4 + $0x50] sm:$0x7]
        %v2864 = vld [vmem:[#allocation4 + $0x58] sm:$0x7]
        %vm2873 = vcmask 1044480
        %v2874 = vrot.slane %v2857, 3
        %v2875 = vrot.slane %v2507, 3
        %v2876 = vsel %vm2873, %v2874, %v2875
        %v2877 = vrot.slane %v2858, 3
        %v2878 = vrot.slane %v2508, 3
        %v2879 = vsel %vm2873, %v2877, %v2878
        %v2880 = vrot.slane %v2859, 3
        %v2881 = vsel %vm2873, %v2875, %v2880
        %v2882 = vrot.slane %v2860, 3
        %v2883 = vsel %vm2873, %v2878, %v2882
        %v2884 = vrot.slane %v2861, 3
        %v2885 = vrot.slane %v2511, 3
        %v2886 = vsel %vm2873, %v2884, %v2885
        %v2887 = vrot.slane %v2862, 3
        %v2888 = vrot.slane %v2512, 3
        %v2889 = vsel %vm2873, %v2887, %v2888
        %v2890 = vrot.slane %v2863, 3
        %v2891 = vsel %vm2873, %v2885, %v2890
        %v2892 = vrot.slane %v2864, 3
        %v2893 = vsel %vm2873, %v2888, %v2892
        %s2898 = scalar_lea.vmem [#allocation15], 432
        %v2899 = vld [vmem:[%s2898] sm:$0xff]
        %v2900 = vld [vmem:[%s2898 + $0x8] sm:$0xff]
        %v2901 = vld [vmem:[%s2898 + $0x10] sm:$0xff]
        %v2902 = vld [vmem:[%s2898 + $0x18] sm:$0xff]
        %v2903 = vld [vmem:[%s2898 + $0x20] sm:$0xff]
        %v2904 = vld [vmem:[%s2898 + $0x28] sm:$0xff]
        %v2905 = vld [vmem:[%s2898 + $0x30] sm:$0xff]
        %v2906 = vld [vmem:[%s2898 + $0x38] sm:$0xff]
        %v2907 = vld [vmem:[%s2898 + $0x40] sm:$0xff]
        %v2908 = vld [vmem:[%s2898 + $0x48] sm:$0xff]
        %v2909 = vld [vmem:[%s2898 + $0x50] sm:$0xff]
        %v2910 = vld [vmem:[%s2898 + $0x58] sm:$0xff]
        %v2911 = vld [vmem:[%s2898 + $0x60] sm:$0xff]
        %v2912 = vld [vmem:[%s2898 + $0x68] sm:$0xff]
        %v2913 = vld [vmem:[%s2898 + $0x70] sm:$0xff]
        %v2914 = vld [vmem:[%s2898 + $0x78] sm:$0xff]
        %v2915 = vld [vmem:[%s2898 + $0x80] sm:$0xff]
        %v2916 = vld [vmem:[%s2898 + $0x88] sm:$0xff]
        %v2917 = vsel %vm1707, %v2879, 0
        %v2919 = vsel %vm1707, %v2883, 0
        %v2921 = vsel %vm1707, %v2889, 0
        %v2923 = vsel %vm1707, %v2893, 0
        %2925 = vmatpush.msra.mxu0 %v2914
        %2926 = vmatpush.msra.mxu0 %v2913
        %2927 = vmatpush.msra.mxu0 %v2912
        %2928 = vmatpush.msra.mxu0 %v2911
        %2929 = vmatpush.msra.mxu0 %v2910
        %2930 = vmatpush.msra.mxu0 %v2909
        %2931 = vmatpush.msra.mxu0 %v2908
        %2932 = vmatpush.msra.mxu0 %v2907
        %2933 = vmatpush.msra.mxu0 %v2906
        %2934 = vmatpush.msra.mxu0 %v2905
        %2935 = vmatpush.msra.mxu0 %v2904
        %2936 = vmatpush.msra.mxu0 %v2903
        %2937 = vmatpush.msra.mxu0 %v2902
        %2938 = vmatpush.msra.mxu0 %v2901
        %2939 = vmatpush.msra.mxu0 %v2900
        %2940 = vmatpush.msra.mxu0 %v2899
        %2941 = vmatmul.f32.gmra.mxu0 %v2876
        %v2942 = vpop.f32.mrf.mxu0
        %v2943 = vadd.f32 0.0, %v2942
        %2944 = vmatmul.f32.gmra.mxu0 %v2881
        %v2945 = vpop.f32.mrf.mxu0
        %v2946 = vadd.f32 0.0, %v2945
        %2947 = vmatmul.f32.gmra.mxu0 %v2886
        %v2948 = vpop.f32.mrf.mxu0
        %v2949 = vadd.f32 0.0, %v2948
        %2950 = vmatmul.f32.gmra.mxu0 %v2891
        %v2951 = vpop.f32.mrf.mxu0
        %v2952 = vadd.f32 0.0, %v2951
        %2953 = vdwg.mxu0
        %2954 = vmatpush.msra.mxu0 0.0
        %2955 = vmatpush.msra.mxu0 0.0
        %2956 = vmatpush.msra.mxu0 0.0
        %2957 = vmatpush.msra.mxu0 0.0
        %2958 = vmatpush.msra.mxu0 0.0
        %2959 = vmatpush.msra.mxu0 0.0
        %2960 = vmatpush.msra.mxu0 0.0
        %2961 = vmatpush.msra.mxu0 0.0
        %2962 = vmatpush.msra.mxu0 0.0
        %2963 = vmatpush.msra.mxu0 0.0
        %2964 = vmatpush.msra.mxu0 0.0
        %2965 = vmatpush.msra.mxu0 0.0
        %2966 = vmatpush.msra.mxu0 0.0
        %2967 = vmatpush.msra.mxu0 0.0
        %2968 = vmatpush.msra.mxu0 %v2916
        %2969 = vmatpush.msra.mxu0 %v2915
        %2970 = vmatmul.f32.gmra.mxu0 %v2917
        %v2971 = vpop.f32.mrf.mxu0
        %v2972 = vadd.f32 %v2943, %v2971
        %2973 = vmatmul.f32.gmra.mxu0 %v2919
        %v2974 = vpop.f32.mrf.mxu0
        %v2975 = vadd.f32 %v2946, %v2974
        %2976 = vmatmul.f32.gmra.mxu0 %v2921
        %v2977 = vpop.f32.mrf.mxu0
        %v2978 = vadd.f32 %v2949, %v2977
        %2979 = vmatmul.f32.gmra.mxu0 %v2923
        %v2980 = vpop.f32.mrf.mxu0
        %v2981 = vadd.f32 %v2952, %v2980
        %2982 = vdwg.mxu0
        %v2983 = vadd.f32 %v2853, %v2972
        %v2984 = vadd.f32 %v2854, %v2975
        %v2985 = vadd.f32 %v2855, %v2978
        %v2986 = vadd.f32 %v2856, %v2981
        %v2987 = vld [vmem:[#allocation4] sm:$0xf0]
        %v2988 = vld [vmem:[#allocation4 + $0x8] sm:$0xf0]
        %v2989 = vld [vmem:[#allocation4 + $0x20] sm:$0xf]
        %v2990 = vld [vmem:[#allocation4 + $0x28] sm:$0xf]
        %v2991 = vld [vmem:[#allocation4 + $0x30] sm:$0xf0]
        %v2992 = vld [vmem:[#allocation4 + $0x38] sm:$0xf0]
        %v2993 = vld [vmem:[#allocation4 + $0x50] sm:$0xf]
        %v2994 = vld [vmem:[#allocation4 + $0x58] sm:$0xf]
        %v3003 = vrot.slane %v2987, 4
        %v3004 = vrot.slane %v2507, 4
        %v3005 = vsel %vm2061, %v3003, %v3004
        %v3006 = vrot.slane %v2988, 4
        %v3007 = vrot.slane %v2508, 4
        %v3008 = vsel %vm2061, %v3006, %v3007
        %v3009 = vrot.slane %v2989, 4
        %v3010 = vsel %vm2061, %v3004, %v3009
        %v3011 = vrot.slane %v2990, 4
        %v3012 = vsel %vm2061, %v3007, %v3011
        %v3013 = vrot.slane %v2991, 4
        %v3014 = vrot.slane %v2511, 4
        %v3015 = vsel %vm2061, %v3013, %v3014
        %v3016 = vrot.slane %v2992, 4
        %v3017 = vrot.slane %v2512, 4
        %v3018 = vsel %vm2061, %v3016, %v3017
        %v3019 = vrot.slane %v2993, 4
        %v3020 = vsel %vm2061, %v3014, %v3019
        %v3021 = vrot.slane %v2994, 4
        %v3022 = vsel %vm2061, %v3017, %v3021
        %s3027 = scalar_lea.vmem [#allocation15], 576
        %v3028 = vld [vmem:[%s3027] sm:$0xff]
        %v3029 = vld [vmem:[%s3027 + $0x8] sm:$0xff]
        %v3030 = vld [vmem:[%s3027 + $0x10] sm:$0xff]
        %v3031 = vld [vmem:[%s3027 + $0x18] sm:$0xff]
        %v3032 = vld [vmem:[%s3027 + $0x20] sm:$0xff]
        %v3033 = vld [vmem:[%s3027 + $0x28] sm:$0xff]
        %v3034 = vld [vmem:[%s3027 + $0x30] sm:$0xff]
        %v3035 = vld [vmem:[%s3027 + $0x38] sm:$0xff]
        %v3036 = vld [vmem:[%s3027 + $0x40] sm:$0xff]
        %v3037 = vld [vmem:[%s3027 + $0x48] sm:$0xff]
        %v3038 = vld [vmem:[%s3027 + $0x50] sm:$0xff]
        %v3039 = vld [vmem:[%s3027 + $0x58] sm:$0xff]
        %v3040 = vld [vmem:[%s3027 + $0x60] sm:$0xff]
        %v3041 = vld [vmem:[%s3027 + $0x68] sm:$0xff]
        %v3042 = vld [vmem:[%s3027 + $0x70] sm:$0xff]
        %v3043 = vld [vmem:[%s3027 + $0x78] sm:$0xff]
        %v3044 = vld [vmem:[%s3027 + $0x80] sm:$0xff]
        %v3045 = vld [vmem:[%s3027 + $0x88] sm:$0xff]
        %v3046 = vsel %vm1707, %v3008, 0
        %v3048 = vsel %vm1707, %v3012, 0
        %v3050 = vsel %vm1707, %v3018, 0
        %v3052 = vsel %vm1707, %v3022, 0
        %3054 = vmatpush.msra.mxu0 %v3043
        %3055 = vmatpush.msra.mxu0 %v3042
        %3056 = vmatpush.msra.mxu0 %v3041
        %3057 = vmatpush.msra.mxu0 %v3040
        %3058 = vmatpush.msra.mxu0 %v3039
        %3059 = vmatpush.msra.mxu0 %v3038
        %3060 = vmatpush.msra.mxu0 %v3037
        %3061 = vmatpush.msra.mxu0 %v3036
        %3062 = vmatpush.msra.mxu0 %v3035
        %3063 = vmatpush.msra.mxu0 %v3034
        %3064 = vmatpush.msra.mxu0 %v3033
        %3065 = vmatpush.msra.mxu0 %v3032
        %3066 = vmatpush.msra.mxu0 %v3031
        %3067 = vmatpush.msra.mxu0 %v3030
        %3068 = vmatpush.msra.mxu0 %v3029
        %3069 = vmatpush.msra.mxu0 %v3028
        %3070 = vmatmul.f32.gmra.mxu0 %v3005
        %v3071 = vpop.f32.mrf.mxu0
        %v3072 = vadd.f32 0.0, %v3071
        %3073 = vmatmul.f32.gmra.mxu0 %v3010
        %v3074 = vpop.f32.mrf.mxu0
        %v3075 = vadd.f32 0.0, %v3074
        %3076 = vmatmul.f32.gmra.mxu0 %v3015
        %v3077 = vpop.f32.mrf.mxu0
        %v3078 = vadd.f32 0.0, %v3077
        %3079 = vmatmul.f32.gmra.mxu0 %v3020
        %v3080 = vpop.f32.mrf.mxu0
        %v3081 = vadd.f32 0.0, %v3080
        %3082 = vdwg.mxu0
        %3083 = vmatpush.msra.mxu0 0.0
        %3084 = vmatpush.msra.mxu0 0.0
        %3085 = vmatpush.msra.mxu0 0.0
        %3086 = vmatpush.msra.mxu0 0.0
        %3087 = vmatpush.msra.mxu0 0.0
        %3088 = vmatpush.msra.mxu0 0.0
        %3089 = vmatpush.msra.mxu0 0.0
        %3090 = vmatpush.msra.mxu0 0.0
        %3091 = vmatpush.msra.mxu0 0.0
        %3092 = vmatpush.msra.mxu0 0.0
        %3093 = vmatpush.msra.mxu0 0.0
        %3094 = vmatpush.msra.mxu0 0.0
        %3095 = vmatpush.msra.mxu0 0.0
        %3096 = vmatpush.msra.mxu0 0.0
        %3097 = vmatpush.msra.mxu0 %v3045
        %3098 = vmatpush.msra.mxu0 %v3044
        %3099 = vmatmul.f32.gmra.mxu0 %v3046
        %v3100 = vpop.f32.mrf.mxu0
        %v3101 = vadd.f32 %v3072, %v3100
        %3102 = vmatmul.f32.gmra.mxu0 %v3048
        %v3103 = vpop.f32.mrf.mxu0
        %v3104 = vadd.f32 %v3075, %v3103
        %3105 = vmatmul.f32.gmra.mxu0 %v3050
        %v3106 = vpop.f32.mrf.mxu0
        %v3107 = vadd.f32 %v3078, %v3106
        %3108 = vmatmul.f32.gmra.mxu0 %v3052
        %v3109 = vpop.f32.mrf.mxu0
        %v3110 = vadd.f32 %v3081, %v3109
        %3111 = vdwg.mxu0
        %v3112 = vadd.f32 %v2983, %v3101
        %v3113 = vadd.f32 %v2984, %v3104
        %v3114 = vadd.f32 %v2985, %v3107
        %v3115 = vadd.f32 %v2986, %v3110
        %v3116 = vld [vmem:[#allocation4] sm:$0xe0]
        %v3117 = vld [vmem:[#allocation4 + $0x8] sm:$0xe0]
        %v3118 = vld [vmem:[#allocation4 + $0x20] sm:$0x1f]
        %v3119 = vld [vmem:[#allocation4 + $0x28] sm:$0x1f]
        %v3120 = vld [vmem:[#allocation4 + $0x30] sm:$0xe0]
        %v3121 = vld [vmem:[#allocation4 + $0x38] sm:$0xe0]
        %v3122 = vld [vmem:[#allocation4 + $0x50] sm:$0x1f]
        %v3123 = vld [vmem:[#allocation4 + $0x58] sm:$0x1f]
        %v3132 = vrot.slane %v3116, 5
        %v3133 = vrot.slane %v2507, 5
        %v3134 = vsel %vm2462, %v3132, %v3133
        %v3135 = vrot.slane %v3117, 5
        %v3136 = vrot.slane %v2508, 5
        %v3137 = vsel %vm2462, %v3135, %v3136
        %v3138 = vrot.slane %v3118, 5
        %v3139 = vsel %vm2462, %v3133, %v3138
        %v3140 = vrot.slane %v3119, 5
        %v3141 = vsel %vm2462, %v3136, %v3140
        %v3142 = vrot.slane %v3120, 5
        %v3143 = vrot.slane %v2511, 5
        %v3144 = vsel %vm2462, %v3142, %v3143
        %v3145 = vrot.slane %v3121, 5
        %v3146 = vrot.slane %v2512, 5
        %v3147 = vsel %vm2462, %v3145, %v3146
        %v3148 = vrot.slane %v3122, 5
        %v3149 = vsel %vm2462, %v3143, %v3148
        %v3150 = vrot.slane %v3123, 5
        %v3151 = vsel %vm2462, %v3146, %v3150
        %s3156 = scalar_lea.vmem [#allocation15], 720
        %v3157 = vld [vmem:[%s3156] sm:$0xff]
        %v3158 = vld [vmem:[%s3156 + $0x8] sm:$0xff]
        %v3159 = vld [vmem:[%s3156 + $0x10] sm:$0xff]
        %v3160 = vld [vmem:[%s3156 + $0x18] sm:$0xff]
        %v3161 = vld [vmem:[%s3156 + $0x20] sm:$0xff]
        %v3162 = vld [vmem:[%s3156 + $0x28] sm:$0xff]
        %v3163 = vld [vmem:[%s3156 + $0x30] sm:$0xff]
        %v3164 = vld [vmem:[%s3156 + $0x38] sm:$0xff]
        %v3165 = vld [vmem:[%s3156 + $0x40] sm:$0xff]
        %v3166 = vld [vmem:[%s3156 + $0x48] sm:$0xff]
        %v3167 = vld [vmem:[%s3156 + $0x50] sm:$0xff]
        %v3168 = vld [vmem:[%s3156 + $0x58] sm:$0xff]
        %v3169 = vld [vmem:[%s3156 + $0x60] sm:$0xff]
        %v3170 = vld [vmem:[%s3156 + $0x68] sm:$0xff]
        %v3171 = vld [vmem:[%s3156 + $0x70] sm:$0xff]
        %v3172 = vld [vmem:[%s3156 + $0x78] sm:$0xff]
        %v3173 = vld [vmem:[%s3156 + $0x80] sm:$0xff]
        %v3174 = vld [vmem:[%s3156 + $0x88] sm:$0xff]
        %v3175 = vsel %vm1707, %v3137, 0
        %v3177 = vsel %vm1707, %v3141, 0
        %v3179 = vsel %vm1707, %v3147, 0
        %v3181 = vsel %vm1707, %v3151, 0
        %3183 = vmatpush.msra.mxu0 %v3172
        %3184 = vmatpush.msra.mxu0 %v3171
        %3185 = vmatpush.msra.mxu0 %v3170
        %3186 = vmatpush.msra.mxu0 %v3169
        %3187 = vmatpush.msra.mxu0 %v3168
        %3188 = vmatpush.msra.mxu0 %v3167
        %3189 = vmatpush.msra.mxu0 %v3166
        %3190 = vmatpush.msra.mxu0 %v3165
        %3191 = vmatpush.msra.mxu0 %v3164
        %3192 = vmatpush.msra.mxu0 %v3163
        %3193 = vmatpush.msra.mxu0 %v3162
        %3194 = vmatpush.msra.mxu0 %v3161
        %3195 = vmatpush.msra.mxu0 %v3160
        %3196 = vmatpush.msra.mxu0 %v3159
        %3197 = vmatpush.msra.mxu0 %v3158
        %3198 = vmatpush.msra.mxu0 %v3157
        %3199 = vmatmul.f32.gmra.mxu0 %v3134
        %v3200 = vpop.f32.mrf.mxu0
        %v3201 = vadd.f32 0.0, %v3200
        %3202 = vmatmul.f32.gmra.mxu0 %v3139
        %v3203 = vpop.f32.mrf.mxu0
        %v3204 = vadd.f32 0.0, %v3203
        %3205 = vmatmul.f32.gmra.mxu0 %v3144
        %v3206 = vpop.f32.mrf.mxu0
        %v3207 = vadd.f32 0.0, %v3206
        %3208 = vmatmul.f32.gmra.mxu0 %v3149
        %v3209 = vpop.f32.mrf.mxu0
        %v3210 = vadd.f32 0.0, %v3209
        %3211 = vdwg.mxu0
        %3212 = vmatpush.msra.mxu0 0.0
        %3213 = vmatpush.msra.mxu0 0.0
        %3214 = vmatpush.msra.mxu0 0.0
        %3215 = vmatpush.msra.mxu0 0.0
        %3216 = vmatpush.msra.mxu0 0.0
        %3217 = vmatpush.msra.mxu0 0.0
        %3218 = vmatpush.msra.mxu0 0.0
        %3219 = vmatpush.msra.mxu0 0.0
        %3220 = vmatpush.msra.mxu0 0.0
        %3221 = vmatpush.msra.mxu0 0.0
        %3222 = vmatpush.msra.mxu0 0.0
        %3223 = vmatpush.msra.mxu0 0.0
        %3224 = vmatpush.msra.mxu0 0.0
        %3225 = vmatpush.msra.mxu0 0.0
        %3226 = vmatpush.msra.mxu0 %v3174
        %3227 = vmatpush.msra.mxu0 %v3173
        %3228 = vmatmul.f32.gmra.mxu0 %v3175
        %v3229 = vpop.f32.mrf.mxu0
        %v3230 = vadd.f32 %v3201, %v3229
        %3231 = vmatmul.f32.gmra.mxu0 %v3177
        %v3232 = vpop.f32.mrf.mxu0
        %v3233 = vadd.f32 %v3204, %v3232
        %3234 = vmatmul.f32.gmra.mxu0 %v3179
        %v3235 = vpop.f32.mrf.mxu0
        %v3236 = vadd.f32 %v3207, %v3235
        %3237 = vmatmul.f32.gmra.mxu0 %v3181
        %v3238 = vpop.f32.mrf.mxu0
        %v3239 = vadd.f32 %v3210, %v3238
        %3240 = vdwg.mxu0
        %v3241 = vadd.f32 %v3112, %v3230
        %v3242 = vadd.f32 %v3113, %v3233
        %v3243 = vadd.f32 %v3114, %v3236
        %v3244 = vadd.f32 %v3115, %v3239
        %v3245 = vld [vmem:[#allocation4] sm:$0xc0]
        %v3246 = vld [vmem:[#allocation4 + $0x8] sm:$0xc0]
        %v3247 = vld [vmem:[#allocation4 + $0x20] sm:$0x3f]
        %v3248 = vld [vmem:[#allocation4 + $0x28] sm:$0x3f]
        %v3249 = vld [vmem:[#allocation4 + $0x30] sm:$0xc0]
        %v3250 = vld [vmem:[#allocation4 + $0x38] sm:$0xc0]
        %v3251 = vld [vmem:[#allocation4 + $0x50] sm:$0x3f]
        %v3252 = vld [vmem:[#allocation4 + $0x58] sm:$0x3f]
        %v3261 = vrot.slane %v3245, 6
        %v3262 = vrot.slane %v2507, 6
        %v3263 = vsel %vm1928, %v3261, %v3262
        %v3264 = vrot.slane %v3246, 6
        %v3265 = vrot.slane %v2508, 6
        %v3266 = vsel %vm1928, %v3264, %v3265
        %v3267 = vrot.slane %v3247, 6
        %v3268 = vsel %vm1928, %v3262, %v3267
        %v3269 = vrot.slane %v3248, 6
        %v3270 = vsel %vm1928, %v3265, %v3269
        %v3271 = vrot.slane %v3249, 6
        %v3272 = vrot.slane %v2511, 6
        %v3273 = vsel %vm1928, %v3271, %v3272
        %v3274 = vrot.slane %v3250, 6
        %v3275 = vrot.slane %v2512, 6
        %v3276 = vsel %vm1928, %v3274, %v3275
        %v3277 = vrot.slane %v3251, 6
        %v3278 = vsel %vm1928, %v3272, %v3277
        %v3279 = vrot.slane %v3252, 6
        %v3280 = vsel %vm1928, %v3275, %v3279
        %s3285 = scalar_lea.vmem [#allocation15], 864
        %v3286 = vld [vmem:[%s3285] sm:$0xff]
        %v3287 = vld [vmem:[%s3285 + $0x8] sm:$0xff]
        %v3288 = vld [vmem:[%s3285 + $0x10] sm:$0xff]
        %v3289 = vld [vmem:[%s3285 + $0x18] sm:$0xff]
        %v3290 = vld [vmem:[%s3285 + $0x20] sm:$0xff]
        %v3291 = vld [vmem:[%s3285 + $0x28] sm:$0xff]
        %v3292 = vld [vmem:[%s3285 + $0x30] sm:$0xff]
        %v3293 = vld [vmem:[%s3285 + $0x38] sm:$0xff]
        %v3294 = vld [vmem:[%s3285 + $0x40] sm:$0xff]
        %v3295 = vld [vmem:[%s3285 + $0x48] sm:$0xff]
        %v3296 = vld [vmem:[%s3285 + $0x50] sm:$0xff]
        %v3297 = vld [vmem:[%s3285 + $0x58] sm:$0xff]
        %v3298 = vld [vmem:[%s3285 + $0x60] sm:$0xff]
        %v3299 = vld [vmem:[%s3285 + $0x68] sm:$0xff]
        %v3300 = vld [vmem:[%s3285 + $0x70] sm:$0xff]
        %v3301 = vld [vmem:[%s3285 + $0x78] sm:$0xff]
        %v3302 = vld [vmem:[%s3285 + $0x80] sm:$0xff]
        %v3303 = vld [vmem:[%s3285 + $0x88] sm:$0xff]
        %v3304 = vsel %vm1707, %v3266, 0
        %v3306 = vsel %vm1707, %v3270, 0
        %v3308 = vsel %vm1707, %v3276, 0
        %v3310 = vsel %vm1707, %v3280, 0
        %3312 = vmatpush.msra.mxu0 %v3301
        %3313 = vmatpush.msra.mxu0 %v3300
        %3314 = vmatpush.msra.mxu0 %v3299
        %3315 = vmatpush.msra.mxu0 %v3298
        %3316 = vmatpush.msra.mxu0 %v3297
        %3317 = vmatpush.msra.mxu0 %v3296
        %3318 = vmatpush.msra.mxu0 %v3295
        %3319 = vmatpush.msra.mxu0 %v3294
        %3320 = vmatpush.msra.mxu0 %v3293
        %3321 = vmatpush.msra.mxu0 %v3292
        %3322 = vmatpush.msra.mxu0 %v3291
        %3323 = vmatpush.msra.mxu0 %v3290
        %3324 = vmatpush.msra.mxu0 %v3289
        %3325 = vmatpush.msra.mxu0 %v3288
        %3326 = vmatpush.msra.mxu0 %v3287
        %3327 = vmatpush.msra.mxu0 %v3286
        %3328 = vmatmul.f32.gmra.mxu0 %v3263
        %v3329 = vpop.f32.mrf.mxu0
        %v3330 = vadd.f32 0.0, %v3329
        %3331 = vmatmul.f32.gmra.mxu0 %v3268
        %v3332 = vpop.f32.mrf.mxu0
        %v3333 = vadd.f32 0.0, %v3332
        %3334 = vmatmul.f32.gmra.mxu0 %v3273
        %v3335 = vpop.f32.mrf.mxu0
        %v3336 = vadd.f32 0.0, %v3335
        %3337 = vmatmul.f32.gmra.mxu0 %v3278
        %v3338 = vpop.f32.mrf.mxu0
        %v3339 = vadd.f32 0.0, %v3338
        %3340 = vdwg.mxu0
        %3341 = vmatpush.msra.mxu0 0.0
        %3342 = vmatpush.msra.mxu0 0.0
        %3343 = vmatpush.msra.mxu0 0.0
        %3344 = vmatpush.msra.mxu0 0.0
        %3345 = vmatpush.msra.mxu0 0.0
        %3346 = vmatpush.msra.mxu0 0.0
        %3347 = vmatpush.msra.mxu0 0.0
        %3348 = vmatpush.msra.mxu0 0.0
        %3349 = vmatpush.msra.mxu0 0.0
        %3350 = vmatpush.msra.mxu0 0.0
        %3351 = vmatpush.msra.mxu0 0.0
        %3352 = vmatpush.msra.mxu0 0.0
        %3353 = vmatpush.msra.mxu0 0.0
        %3354 = vmatpush.msra.mxu0 0.0
        %3355 = vmatpush.msra.mxu0 %v3303
        %3356 = vmatpush.msra.mxu0 %v3302
        %3357 = vmatmul.f32.gmra.mxu0 %v3304
        %v3358 = vpop.f32.mrf.mxu0
        %v3359 = vadd.f32 %v3330, %v3358
        %3360 = vmatmul.f32.gmra.mxu0 %v3306
        %v3361 = vpop.f32.mrf.mxu0
        %v3362 = vadd.f32 %v3333, %v3361
        %3363 = vmatmul.f32.gmra.mxu0 %v3308
        %v3364 = vpop.f32.mrf.mxu0
        %v3365 = vadd.f32 %v3336, %v3364
        %3366 = vmatmul.f32.gmra.mxu0 %v3310
        %v3367 = vpop.f32.mrf.mxu0
        %v3368 = vadd.f32 %v3339, %v3367
        %3369 = vdwg.mxu0
        %v3370 = vadd.f32 %v3241, %v3359
        %v3371 = vadd.f32 %v3242, %v3362
        %v3372 = vadd.f32 %v3243, %v3365
        %v3373 = vadd.f32 %v3244, %v3368
        %s3374 = sld [smem:[#allocation6]]
        %v3375 = vstv %s3374
        %v3376 = vadd.f32 %v3370, %v3375
        %v3377 = vadd.f32 %v3371, %v3375
        %v3378 = vadd.f32 %v3372, %v3375
        %v3379 = vadd.f32 %v3373, %v3375
        %v3380 = vsub.f32 0.0, %v3376
        %v3381 = vsub.f32 0.0, %v3377
        %v3382 = vsub.f32 0.0, %v3378
        %v3383 = vsub.f32 0.0, %v3379
        %v3384 = vmul.f32 %v3380, 1.442695
        %v3385 = vpow.pop %v3384
        %v3386 = vmul.f32 %v3381, 1.442695
        %v3387 = vpow.pop %v3386
        %v3388 = vmul.f32 %v3382, 1.442695
        %v3389 = vpow.pop %v3388
        %v3390 = vmul.f32 %v3383, 1.442695
        %v3391 = vpow.pop %v3390
        %v3392 = vadd.f32 %v3385, 1.0
        %v3393 = vadd.f32 %v3387, 1.0
        %v3394 = vadd.f32 %v3389, 1.0
        %v3395 = vadd.f32 %v3391, 1.0
        %v3396 = vrcp.pop %v3392
        %v3397 = vmul.f32 %v3392, %v3396
        %v3398 = vsub.f32 1.0, %v3397
        %v3399 = vmul.f32 %v3396, %v3398
        %v3400 = vadd.f32 %v3396, %v3399
        %vm3401 = vweird.f32 %v3392
        %vm3402 = vweird.f32 %v3396
        %vm3403 = vmor %vm3401, %vm3402
        %v3404 = vsel %vm3403, %v3396, %v3400
        %v3405 = vand.u32 2147483647, %v3392
        %vm3406 = vcmp.eq.f32.partialorder %v3405, 8.507059e+37
        %v3407 = vand.u32 %v3392, 2147483648
        %v3408 = vor.u32 1.1754944e-38, %v3407
        %v3409 = vsel %vm3406, %v3408, %v3404
        %v3410 = vrcp.pop %v3393
        %v3411 = vmul.f32 %v3393, %v3410
        %v3412 = vsub.f32 1.0, %v3411
        %v3413 = vmul.f32 %v3410, %v3412
        %v3414 = vadd.f32 %v3410, %v3413
        %vm3415 = vweird.f32 %v3393
        %vm3416 = vweird.f32 %v3410
        %vm3417 = vmor %vm3415, %vm3416
        %v3418 = vsel %vm3417, %v3410, %v3414
        %v3419 = vand.u32 2147483647, %v3393
        %vm3420 = vcmp.eq.f32.partialorder %v3419, 8.507059e+37
        %v3421 = vand.u32 %v3393, 2147483648
        %v3422 = vor.u32 1.1754944e-38, %v3421
        %v3423 = vsel %vm3420, %v3422, %v3418
        %v3424 = vrcp.pop %v3394
        %v3425 = vmul.f32 %v3394, %v3424
        %v3426 = vsub.f32 1.0, %v3425
        %v3427 = vmul.f32 %v3424, %v3426
        %v3428 = vadd.f32 %v3424, %v3427
        %vm3429 = vweird.f32 %v3394
        %vm3430 = vweird.f32 %v3424
        %vm3431 = vmor %vm3429, %vm3430
        %v3432 = vsel %vm3431, %v3424, %v3428
        %v3433 = vand.u32 2147483647, %v3394
        %vm3434 = vcmp.eq.f32.partialorder %v3433, 8.507059e+37
        %v3435 = vand.u32 %v3394, 2147483648
        %v3436 = vor.u32 1.1754944e-38, %v3435
        %v3437 = vsel %vm3434, %v3436, %v3432
        %v3438 = vrcp.pop %v3395
        %v3439 = vmul.f32 %v3395, %v3438
        %v3440 = vsub.f32 1.0, %v3439
        %v3441 = vmul.f32 %v3438, %v3440
        %v3442 = vadd.f32 %v3438, %v3441
        %vm3443 = vweird.f32 %v3395
        %vm3444 = vweird.f32 %v3438
        %vm3445 = vmor %vm3443, %vm3444
        %v3446 = vsel %vm3445, %v3438, %v3442
        %v3447 = vand.u32 2147483647, %v3395
        %vm3448 = vcmp.eq.f32.partialorder %v3447, 8.507059e+37
        %v3449 = vand.u32 %v3395, 2147483648
        %v3450 = vor.u32 1.1754944e-38, %v3449
        %v3451 = vsel %vm3448, %v3450, %v3446
        %v3452 = vmul.f32 %v2174, %v3409
        %v3453 = vmul.f32 %v2175, %v3423
        %v3454 = vmul.f32 %v2176, %v3437
        %v3455 = vmul.f32 %v2177, %v3451
        %vm3456 = vcmp.gt.f32.partialorder %v3452, 0.4
        %vm3457 = vcmp.gt.f32.partialorder %v3453, 0.4
        %vm3458 = vcmp.gt.f32.partialorder %v3454, 0.4
        %vm3459 = vcmp.gt.f32.partialorder %v3455, 0.4
        %v3460 = vsel %vm3456, 1, 0
        %v3461 = vsel %vm3457, 1, 0
        %v3462 = vsel %vm3458, 1, 0
        %v3463 = vsel %vm3459, 1, 0
        %v3464 = vcvt.s32.f32 %v3460
        %v3465 = vcvt.s32.f32 %v3461
        %v3466 = vcvt.s32.f32 %v3462
        %v3467 = vcvt.s32.f32 %v3463
        %3468 = vst [vmem:[#allocation5 + $0x1] sm:$0xff] %v3464
        %3469 = vst [vmem:[#allocation5 + $0x9] sm:$0xff] %v3465
        %3470 = vst [vmem:[#allocation5 + $0x19] sm:$0xff] %v3466
        %3471 = vst [vmem:[#allocation5 + $0x21] sm:$0xff] %v3467
        %v3472 = vld [vmem:[%s14] sm:$0x3]
        %v3473 = vld [vmem:[#allocation5] sm:$0xff]
        %v3474 = vld [vmem:[#allocation5 + $0x8] sm:$0xff]
        %v3475 = vld [vmem:[#allocation5 + $0x18] sm:$0xff]
        %v3476 = vld [vmem:[#allocation5 + $0x20] sm:$0xff]
        %v3477 = vpack.c.bf16 %v3474, %v3473
        %v3478 = vpack.c.bf16 %v3476, %v3475
        %v3479 = vld [vmem:[#allocation16] sm:$0xff]
        %v3480 = vld [vmem:[#allocation16 + $0x8] sm:$0xff]
        %v3481 = vld [vmem:[#allocation16 + $0x10] sm:$0xff]
        %v3482 = vld [vmem:[#allocation16 + $0x18] sm:$0xff]
        %v3483 = vld [vmem:[#allocation16 + $0x20] sm:$0xff]
        %v3484 = vld [vmem:[#allocation16 + $0x28] sm:$0xff]
        %v3485 = vld [vmem:[#allocation16 + $0x30] sm:$0xff]
        %v3486 = vld [vmem:[#allocation16 + $0x38] sm:$0xff]
        %v3487 = vld [vmem:[#allocation16 + $0x40] sm:$0xff]
        %v3488 = vld [vmem:[#allocation16 + $0x48] sm:$0xff]
        %v3489 = vld [vmem:[#allocation16 + $0x50] sm:$0xff]
        %v3490 = vld [vmem:[#allocation16 + $0x58] sm:$0xff]
        %v3491 = vld [vmem:[#allocation16 + $0x60] sm:$0xff]
        %v3492 = vld [vmem:[#allocation16 + $0x68] sm:$0xff]
        %v3493 = vld [vmem:[#allocation16 + $0x70] sm:$0xff]
        %v3494 = vld [vmem:[#allocation16 + $0x78] sm:$0xff]
        %v3495 = vld [vmem:[#allocation5 + $0x1] sm:$0xff]
        %v3496 = vld [vmem:[#allocation5 + $0x9] sm:$0xff]
        %v3497 = vld [vmem:[#allocation5 + $0x19] sm:$0xff]
        %v3498 = vld [vmem:[#allocation5 + $0x21] sm:$0xff]
        %v3499 = vpack.c.bf16 %v3496, %v3495
        %v3500 = vpack.c.bf16 %v3498, %v3497
        %s3501 = scalar_lea.vmem [#allocation16], 128
        %v3502 = vld [vmem:[%s3501] sm:$0xff]
        %v3503 = vld [vmem:[%s3501 + $0x8] sm:$0xff]
        %v3504 = vld [vmem:[%s3501 + $0x10] sm:$0xff]
        %v3505 = vld [vmem:[%s3501 + $0x18] sm:$0xff]
        %v3506 = vld [vmem:[%s3501 + $0x20] sm:$0xff]
        %v3507 = vld [vmem:[%s3501 + $0x28] sm:$0xff]
        %v3508 = vld [vmem:[%s3501 + $0x30] sm:$0xff]
        %v3509 = vld [vmem:[%s3501 + $0x38] sm:$0xff]
        %v3510 = vld [vmem:[%s3501 + $0x40] sm:$0xff]
        %v3511 = vld [vmem:[%s3501 + $0x48] sm:$0xff]
        %v3512 = vld [vmem:[%s3501 + $0x50] sm:$0xff]
        %v3513 = vld [vmem:[%s3501 + $0x58] sm:$0xff]
        %v3514 = vld [vmem:[%s3501 + $0x60] sm:$0xff]
        %v3515 = vld [vmem:[%s3501 + $0x68] sm:$0xff]
        %v3516 = vld [vmem:[%s3501 + $0x70] sm:$0xff]
        %v3517 = vld [vmem:[%s3501 + $0x78] sm:$0xff]
        %v3534 = vunpack.c.l.b16 %v3502
        %v3535 = vunpack.c.h.b16 %v3502
        %v3536 = vunpack.c.l.b16 %v3503
        %v3537 = vunpack.c.h.b16 %v3503
        %v3538 = vunpack.c.l.b16 %v3504
        %v3539 = vunpack.c.h.b16 %v3504
        %v3540 = vunpack.c.l.b16 %v3505
        %v3541 = vunpack.c.h.b16 %v3505
        %v3542 = vunpack.c.l.b16 %v3506
        %v3543 = vunpack.c.h.b16 %v3506
        %v3544 = vunpack.c.l.b16 %v3507
        %v3545 = vunpack.c.h.b16 %v3507
        %v3546 = vunpack.c.l.b16 %v3508
        %v3547 = vunpack.c.h.b16 %v3508
        %v3548 = vunpack.c.l.b16 %v3509
        %v3549 = vunpack.c.h.b16 %v3509
        %v3550 = vunpack.c.l.b16 %v3510
        %v3551 = vunpack.c.h.b16 %v3510
        %v3552 = vunpack.c.l.b16 %v3511
        %v3553 = vunpack.c.h.b16 %v3511
        %v3554 = vunpack.c.l.b16 %v3512
        %v3555 = vunpack.c.h.b16 %v3512
        %v3556 = vunpack.c.l.b16 %v3513
        %v3557 = vunpack.c.h.b16 %v3513
        %v3558 = vunpack.c.l.b16 %v3514
        %v3559 = vunpack.c.h.b16 %v3514
        %v3560 = vunpack.c.l.b16 %v3515
        %v3561 = vunpack.c.h.b16 %v3515
        %v3562 = vunpack.c.l.b16 %v3516
        %v3563 = vunpack.c.h.b16 %v3516
        %v3564 = vunpack.c.l.b16 %v3517
        %v3565 = vunpack.c.h.b16 %v3517
        %v3566 = vpack.c.b16 %v3536, %v3534
        %v3567 = vpack.c.b16 %v3537, %v3535
        %v3568 = vpack.c.b16 %v3540, %v3538
        %v3569 = vpack.c.b16 %v3541, %v3539
        %v3570 = vpack.c.b16 %v3544, %v3542
        %v3571 = vpack.c.b16 %v3545, %v3543
        %v3572 = vpack.c.b16 %v3548, %v3546
        %v3573 = vpack.c.b16 %v3549, %v3547
        %v3574 = vpack.c.b16 %v3552, %v3550
        %v3575 = vpack.c.b16 %v3553, %v3551
        %v3576 = vpack.c.b16 %v3556, %v3554
        %v3577 = vpack.c.b16 %v3557, %v3555
        %v3578 = vpack.c.b16 %v3560, %v3558
        %v3579 = vpack.c.b16 %v3561, %v3559
        %v3580 = vpack.c.b16 %v3564, %v3562
        %v3581 = vpack.c.b16 %v3565, %v3563
        %3598 = vmatpush.bf16.msra.mxu0 %v3580
        %3599 = vmatpush.bf16.msra.mxu0 %v3578
        %3600 = vmatpush.bf16.msra.mxu0 %v3576
        %3601 = vmatpush.bf16.msra.mxu0 %v3574
        %3602 = vmatpush.bf16.msra.mxu0 %v3572
        %3603 = vmatpush.bf16.msra.mxu0 %v3570
        %3604 = vmatpush.bf16.msra.mxu0 %v3568
        %3605 = vmatpush.bf16.msra.mxu0 %v3566
        %3606 = vmatmul.bf16.gmra.mxu0 %v3499
        %v3607 = vpop.f32.mrf.mxu0
        %v3608 = vadd.f32 0.0, %v3607
        %v3609 = vpop.f32.mrf.mxu0
        %v3610 = vadd.f32 0.0, %v3609
        %3611 = vmatmul.bf16.gmra.mxu0 %v3500
        %v3612 = vpop.f32.mrf.mxu0
        %v3613 = vadd.f32 0.0, %v3612
        %v3614 = vpop.f32.mrf.mxu0
        %v3615 = vadd.f32 0.0, %v3614
        %3616 = vdwg.mxu0
        %3617 = vmatpush.bf16.msra.mxu0 %v3581
        %3618 = vmatpush.bf16.msra.mxu0 %v3579
        %3619 = vmatpush.bf16.msra.mxu0 %v3577
        %3620 = vmatpush.bf16.msra.mxu0 %v3575
        %3621 = vmatpush.bf16.msra.mxu0 %v3573
        %3622 = vmatpush.bf16.msra.mxu0 %v3571
        %3623 = vmatpush.bf16.msra.mxu0 %v3569
        %3624 = vmatpush.bf16.msra.mxu0 %v3567
        %3625 = vmatmul.bf16.gmra.mxu0 %v3499
        %v3626 = vpop.f32.mrf.mxu0
        %v3627 = vadd.f32 0.0, %v3626
        %v3628 = vpop.f32.mrf.mxu0
        %v3629 = vadd.f32 0.0, %v3628
        %3630 = vmatmul.bf16.gmra.mxu0 %v3500
        %v3631 = vpop.f32.mrf.mxu0
        %v3632 = vadd.f32 0.0, %v3631
        %v3633 = vpop.f32.mrf.mxu0
        %v3634 = vadd.f32 0.0, %v3633
        %3635 = vdwg.mxu0
        %v3652 = vunpack.c.l.b16 %v3479
        %v3653 = vunpack.c.h.b16 %v3479
        %v3654 = vunpack.c.l.b16 %v3480
        %v3655 = vunpack.c.h.b16 %v3480
        %v3656 = vunpack.c.l.b16 %v3481
        %v3657 = vunpack.c.h.b16 %v3481
        %v3658 = vunpack.c.l.b16 %v3482
        %v3659 = vunpack.c.h.b16 %v3482
        %v3660 = vunpack.c.l.b16 %v3483
        %v3661 = vunpack.c.h.b16 %v3483
        %v3662 = vunpack.c.l.b16 %v3484
        %v3663 = vunpack.c.h.b16 %v3484
        %v3664 = vunpack.c.l.b16 %v3485
        %v3665 = vunpack.c.h.b16 %v3485
        %v3666 = vunpack.c.l.b16 %v3486
        %v3667 = vunpack.c.h.b16 %v3486
        %v3668 = vunpack.c.l.b16 %v3487
        %v3669 = vunpack.c.h.b16 %v3487
        %v3670 = vunpack.c.l.b16 %v3488
        %v3671 = vunpack.c.h.b16 %v3488
        %v3672 = vunpack.c.l.b16 %v3489
        %v3673 = vunpack.c.h.b16 %v3489
        %v3674 = vunpack.c.l.b16 %v3490
        %v3675 = vunpack.c.h.b16 %v3490
        %v3676 = vunpack.c.l.b16 %v3491
        %v3677 = vunpack.c.h.b16 %v3491
        %v3678 = vunpack.c.l.b16 %v3492
        %v3679 = vunpack.c.h.b16 %v3492
        %v3680 = vunpack.c.l.b16 %v3493
        %v3681 = vunpack.c.h.b16 %v3493
        %v3682 = vunpack.c.l.b16 %v3494
        %v3683 = vunpack.c.h.b16 %v3494
        %v3684 = vpack.c.b16 %v3654, %v3652
        %v3685 = vpack.c.b16 %v3655, %v3653
        %v3686 = vpack.c.b16 %v3658, %v3656
        %v3687 = vpack.c.b16 %v3659, %v3657
        %v3688 = vpack.c.b16 %v3662, %v3660
        %v3689 = vpack.c.b16 %v3663, %v3661
        %v3690 = vpack.c.b16 %v3666, %v3664
        %v3691 = vpack.c.b16 %v3667, %v3665
        %v3692 = vpack.c.b16 %v3670, %v3668
        %v3693 = vpack.c.b16 %v3671, %v3669
        %v3694 = vpack.c.b16 %v3674, %v3672
        %v3695 = vpack.c.b16 %v3675, %v3673
        %v3696 = vpack.c.b16 %v3678, %v3676
        %v3697 = vpack.c.b16 %v3679, %v3677
        %v3698 = vpack.c.b16 %v3682, %v3680
        %v3699 = vpack.c.b16 %v3683, %v3681
        %3716 = vmatpush.bf16.msra.mxu0 %v3698
        %3717 = vmatpush.bf16.msra.mxu0 %v3696
        %3718 = vmatpush.bf16.msra.mxu0 %v3694
        %3719 = vmatpush.bf16.msra.mxu0 %v3692
        %3720 = vmatpush.bf16.msra.mxu0 %v3690
        %3721 = vmatpush.bf16.msra.mxu0 %v3688
        %3722 = vmatpush.bf16.msra.mxu0 %v3686
        %3723 = vmatpush.bf16.msra.mxu0 %v3684
        %3724 = vmatmul.bf16.gmra.mxu0 %v3477
        %v3725 = vpop.f32.mrf.mxu0
        %v3726 = vadd.f32 %v3608, %v3725
        %v3727 = vpop.f32.mrf.mxu0
        %v3728 = vadd.f32 %v3610, %v3727
        %3729 = vmatmul.bf16.gmra.mxu0 %v3478
        %v3730 = vpop.f32.mrf.mxu0
        %v3731 = vadd.f32 %v3613, %v3730
        %v3732 = vpop.f32.mrf.mxu0
        %v3733 = vadd.f32 %v3615, %v3732
        %3734 = vdwg.mxu0
        %3735 = vmatpush.bf16.msra.mxu0 %v3699
        %3736 = vmatpush.bf16.msra.mxu0 %v3697
        %3737 = vmatpush.bf16.msra.mxu0 %v3695
        %3738 = vmatpush.bf16.msra.mxu0 %v3693
        %3739 = vmatpush.bf16.msra.mxu0 %v3691
        %3740 = vmatpush.bf16.msra.mxu0 %v3689
        %3741 = vmatpush.bf16.msra.mxu0 %v3687
        %3742 = vmatpush.bf16.msra.mxu0 %v3685
        %3743 = vmatmul.bf16.gmra.mxu0 %v3477
        %v3744 = vpop.f32.mrf.mxu0
        %v3745 = vadd.f32 %v3627, %v3744
        %v3746 = vpop.f32.mrf.mxu0
        %v3747 = vadd.f32 %v3629, %v3746
        %3748 = vmatmul.bf16.gmra.mxu0 %v3478
        %v3749 = vpop.f32.mrf.mxu0
        %v3750 = vadd.f32 %v3632, %v3749
        %v3751 = vpop.f32.mrf.mxu0
        %v3752 = vadd.f32 %v3634, %v3751
        %3753 = vdwg.mxu0
        %v3754 = vld [vmem:[#allocation5 + $0x2] sm:$0xff]
        %v3755 = vld [vmem:[#allocation5 + $0xa] sm:$0xff]
        %v3756 = vld [vmem:[#allocation5 + $0x1a] sm:$0xff]
        %v3757 = vld [vmem:[#allocation5 + $0x22] sm:$0xff]
        %v3758 = vpack.c.bf16 %v3755, %v3754
        %v3759 = vpack.c.bf16 %v3757, %v3756
        %s3760 = scalar_lea.vmem [#allocation16], 256
        %v3761 = vld [vmem:[%s3760] sm:$0xff]
        %v3762 = vld [vmem:[%s3760 + $0x8] sm:$0xff]
        %v3763 = vld [vmem:[%s3760 + $0x10] sm:$0xff]
        %v3764 = vld [vmem:[%s3760 + $0x18] sm:$0xff]
        %v3765 = vld [vmem:[%s3760 + $0x20] sm:$0xff]
        %v3766 = vld [vmem:[%s3760 + $0x28] sm:$0xff]
        %v3767 = vld [vmem:[%s3760 + $0x30] sm:$0xff]
        %v3768 = vld [vmem:[%s3760 + $0x38] sm:$0xff]
        %v3769 = vld [vmem:[%s3760 + $0x40] sm:$0xff]
        %v3770 = vld [vmem:[%s3760 + $0x48] sm:$0xff]
        %v3771 = vld [vmem:[%s3760 + $0x50] sm:$0xff]
        %v3772 = vld [vmem:[%s3760 + $0x58] sm:$0xff]
        %v3773 = vld [vmem:[%s3760 + $0x60] sm:$0xff]
        %v3774 = vld [vmem:[%s3760 + $0x68] sm:$0xff]
        %v3775 = vld [vmem:[%s3760 + $0x70] sm:$0xff]
        %v3776 = vld [vmem:[%s3760 + $0x78] sm:$0xff]
        %v3793 = vunpack.c.l.b16 %v3761
        %v3794 = vunpack.c.h.b16 %v3761
        %v3795 = vunpack.c.l.b16 %v3762
        %v3796 = vunpack.c.h.b16 %v3762
        %v3797 = vunpack.c.l.b16 %v3763
        %v3798 = vunpack.c.h.b16 %v3763
        %v3799 = vunpack.c.l.b16 %v3764
        %v3800 = vunpack.c.h.b16 %v3764
        %v3801 = vunpack.c.l.b16 %v3765
        %v3802 = vunpack.c.h.b16 %v3765
        %v3803 = vunpack.c.l.b16 %v3766
        %v3804 = vunpack.c.h.b16 %v3766
        %v3805 = vunpack.c.l.b16 %v3767
        %v3806 = vunpack.c.h.b16 %v3767
        %v3807 = vunpack.c.l.b16 %v3768
        %v3808 = vunpack.c.h.b16 %v3768
        %v3809 = vunpack.c.l.b16 %v3769
        %v3810 = vunpack.c.h.b16 %v3769
        %v3811 = vunpack.c.l.b16 %v3770
        %v3812 = vunpack.c.h.b16 %v3770
        %v3813 = vunpack.c.l.b16 %v3771
        %v3814 = vunpack.c.h.b16 %v3771
        %v3815 = vunpack.c.l.b16 %v3772
        %v3816 = vunpack.c.h.b16 %v3772
        %v3817 = vunpack.c.l.b16 %v3773
        %v3818 = vunpack.c.h.b16 %v3773
        %v3819 = vunpack.c.l.b16 %v3774
        %v3820 = vunpack.c.h.b16 %v3774
        %v3821 = vunpack.c.l.b16 %v3775
        %v3822 = vunpack.c.h.b16 %v3775
        %v3823 = vunpack.c.l.b16 %v3776
        %v3824 = vunpack.c.h.b16 %v3776
        %v3825 = vpack.c.b16 %v3795, %v3793
        %v3826 = vpack.c.b16 %v3796, %v3794
        %v3827 = vpack.c.b16 %v3799, %v3797
        %v3828 = vpack.c.b16 %v3800, %v3798
        %v3829 = vpack.c.b16 %v3803, %v3801
        %v3830 = vpack.c.b16 %v3804, %v3802
        %v3831 = vpack.c.b16 %v3807, %v3805
        %v3832 = vpack.c.b16 %v3808, %v3806
        %v3833 = vpack.c.b16 %v3811, %v3809
        %v3834 = vpack.c.b16 %v3812, %v3810
        %v3835 = vpack.c.b16 %v3815, %v3813
        %v3836 = vpack.c.b16 %v3816, %v3814
        %v3837 = vpack.c.b16 %v3819, %v3817
        %v3838 = vpack.c.b16 %v3820, %v3818
        %v3839 = vpack.c.b16 %v3823, %v3821
        %v3840 = vpack.c.b16 %v3824, %v3822
        %3857 = vmatpush.bf16.msra.mxu0 %v3839
        %3858 = vmatpush.bf16.msra.mxu0 %v3837
        %3859 = vmatpush.bf16.msra.mxu0 %v3835
        %3860 = vmatpush.bf16.msra.mxu0 %v3833
        %3861 = vmatpush.bf16.msra.mxu0 %v3831
        %3862 = vmatpush.bf16.msra.mxu0 %v3829
        %3863 = vmatpush.bf16.msra.mxu0 %v3827
        %3864 = vmatpush.bf16.msra.mxu0 %v3825
        %3865 = vmatmul.bf16.gmra.mxu0 %v3758
        %v3866 = vpop.f32.mrf.mxu0
        %v3867 = vadd.f32 0.0, %v3866
        %v3868 = vpop.f32.mrf.mxu0
        %v3869 = vadd.f32 0.0, %v3868
        %3870 = vmatmul.bf16.gmra.mxu0 %v3759
        %v3871 = vpop.f32.mrf.mxu0
        %v3872 = vadd.f32 0.0, %v3871
        %v3873 = vpop.f32.mrf.mxu0
        %v3874 = vadd.f32 0.0, %v3873
        %3875 = vdwg.mxu0
        %3876 = vmatpush.bf16.msra.mxu0 %v3840
        %3877 = vmatpush.bf16.msra.mxu0 %v3838
        %3878 = vmatpush.bf16.msra.mxu0 %v3836
        %3879 = vmatpush.bf16.msra.mxu0 %v3834
        %3880 = vmatpush.bf16.msra.mxu0 %v3832
        %3881 = vmatpush.bf16.msra.mxu0 %v3830
        %3882 = vmatpush.bf16.msra.mxu0 %v3828
        %3883 = vmatpush.bf16.msra.mxu0 %v3826
        %3884 = vmatmul.bf16.gmra.mxu0 %v3758
        %v3885 = vpop.f32.mrf.mxu0
        %v3886 = vadd.f32 0.0, %v3885
        %v3887 = vpop.f32.mrf.mxu0
        %v3888 = vadd.f32 0.0, %v3887
        %3889 = vmatmul.bf16.gmra.mxu0 %v3759
        %v3890 = vpop.f32.mrf.mxu0
        %v3891 = vadd.f32 0.0, %v3890
        %v3892 = vpop.f32.mrf.mxu0
        %v3893 = vadd.f32 0.0, %v3892
        %3894 = vdwg.mxu0
        %v3895 = vadd.f32 %v3726, %v3867
        %v3896 = vadd.f32 %v3745, %v3886
        %v3897 = vadd.f32 %v3728, %v3869
        %v3898 = vadd.f32 %v3747, %v3888
        %v3899 = vadd.f32 %v3731, %v3872
        %v3900 = vadd.f32 %v3750, %v3891
        %v3901 = vadd.f32 %v3733, %v3874
        %v3902 = vadd.f32 %v3752, %v3893
        %v3904 = vperm.slane %v3472, 0
        %v3905 = vperm.slane %v3472, 1
        %v3908 = vadd.f32 %v3895, %v3904
        %v3909 = vadd.f32 %v3896, %v3905
        %v3910 = vadd.f32 %v3897, %v3904
        %v3911 = vadd.f32 %v3898, %v3905
        %v3912 = vadd.f32 %v3899, %v3904
        %v3913 = vadd.f32 %v3900, %v3905
        %v3914 = vadd.f32 %v3901, %v3904
        %v3915 = vadd.f32 %v3902, %v3905
        %v3916 = vsub.f32 0.0, %v3908
        %v3917 = vsub.f32 0.0, %v3909
        %v3918 = vsub.f32 0.0, %v3910
        %v3919 = vsub.f32 0.0, %v3911
        %v3920 = vsub.f32 0.0, %v3912
        %v3921 = vsub.f32 0.0, %v3913
        %v3922 = vsub.f32 0.0, %v3914
        %v3923 = vsub.f32 0.0, %v3915
        %v3924 = vmul.f32 %v3916, 1.442695
        %v3925 = vpow.pop %v3924
        %v3926 = vmul.f32 %v3917, 1.442695
        %v3927 = vpow.pop %v3926
        %v3928 = vmul.f32 %v3918, 1.442695
        %v3929 = vpow.pop %v3928
        %v3930 = vmul.f32 %v3919, 1.442695
        %v3931 = vpow.pop %v3930
        %v3932 = vmul.f32 %v3920, 1.442695
        %v3933 = vpow.pop %v3932
        %v3934 = vmul.f32 %v3921, 1.442695
        %v3935 = vpow.pop %v3934
        %v3936 = vmul.f32 %v3922, 1.442695
        %v3937 = vpow.pop %v3936
        %v3938 = vmul.f32 %v3923, 1.442695
        %v3939 = vpow.pop %v3938
        %v3940 = vadd.f32 %v3925, 1.0
        %v3941 = vadd.f32 %v3927, 1.0
        %v3942 = vadd.f32 %v3929, 1.0
        %v3943 = vadd.f32 %v3931, 1.0
        %v3944 = vadd.f32 %v3933, 1.0
        %v3945 = vadd.f32 %v3935, 1.0
        %v3946 = vadd.f32 %v3937, 1.0
        %v3947 = vadd.f32 %v3939, 1.0
        %v3948 = vrcp.pop %v3940
        %v3949 = vmul.f32 %v3940, %v3948
        %v3950 = vsub.f32 1.0, %v3949
        %v3951 = vmul.f32 %v3948, %v3950
        %v3952 = vadd.f32 %v3948, %v3951
        %vm3953 = vweird.f32 %v3940
        %vm3954 = vweird.f32 %v3948
        %vm3955 = vmor %vm3953, %vm3954
        %v3956 = vsel %vm3955, %v3948, %v3952
        %v3957 = vand.u32 2147483647, %v3940
        %vm3958 = vcmp.eq.f32.partialorder %v3957, 8.507059e+37
        %v3959 = vand.u32 %v3940, 2147483648
        %v3960 = vor.u32 1.1754944e-38, %v3959
        %v3961 = vsel %vm3958, %v3960, %v3956
        %v3962 = vrcp.pop %v3941
        %v3963 = vmul.f32 %v3941, %v3962
        %v3964 = vsub.f32 1.0, %v3963
        %v3965 = vmul.f32 %v3962, %v3964
        %v3966 = vadd.f32 %v3962, %v3965
        %vm3967 = vweird.f32 %v3941
        %vm3968 = vweird.f32 %v3962
        %vm3969 = vmor %vm3967, %vm3968
        %v3970 = vsel %vm3969, %v3962, %v3966
        %v3971 = vand.u32 2147483647, %v3941
        %vm3972 = vcmp.eq.f32.partialorder %v3971, 8.507059e+37
        %v3973 = vand.u32 %v3941, 2147483648
        %v3974 = vor.u32 1.1754944e-38, %v3973
        %v3975 = vsel %vm3972, %v3974, %v3970
        %v3976 = vrcp.pop %v3942
        %v3977 = vmul.f32 %v3942, %v3976
        %v3978 = vsub.f32 1.0, %v3977
        %v3979 = vmul.f32 %v3976, %v3978
        %v3980 = vadd.f32 %v3976, %v3979
        %vm3981 = vweird.f32 %v3942
        %vm3982 = vweird.f32 %v3976
        %vm3983 = vmor %vm3981, %vm3982
        %v3984 = vsel %vm3983, %v3976, %v3980
        %v3985 = vand.u32 2147483647, %v3942
        %vm3986 = vcmp.eq.f32.partialorder %v3985, 8.507059e+37
        %v3987 = vand.u32 %v3942, 2147483648
        %v3988 = vor.u32 1.1754944e-38, %v3987
        %v3989 = vsel %vm3986, %v3988, %v3984
        %v3990 = vrcp.pop %v3943
        %v3991 = vmul.f32 %v3943, %v3990
        %v3992 = vsub.f32 1.0, %v3991
        %v3993 = vmul.f32 %v3990, %v3992
        %v3994 = vadd.f32 %v3990, %v3993
        %vm3995 = vweird.f32 %v3943
        %vm3996 = vweird.f32 %v3990
        %vm3997 = vmor %vm3995, %vm3996
        %v3998 = vsel %vm3997, %v3990, %v3994
        %v3999 = vand.u32 2147483647, %v3943
        %vm4000 = vcmp.eq.f32.partialorder %v3999, 8.507059e+37
        %v4001 = vand.u32 %v3943, 2147483648
        %v4002 = vor.u32 1.1754944e-38, %v4001
        %v4003 = vsel %vm4000, %v4002, %v3998
        %v4004 = vrcp.pop %v3944
        %v4005 = vmul.f32 %v3944, %v4004
        %v4006 = vsub.f32 1.0, %v4005
        %v4007 = vmul.f32 %v4004, %v4006
        %v4008 = vadd.f32 %v4004, %v4007
        %vm4009 = vweird.f32 %v3944
        %vm4010 = vweird.f32 %v4004
        %vm4011 = vmor %vm4009, %vm4010
        %v4012 = vsel %vm4011, %v4004, %v4008
        %v4013 = vand.u32 2147483647, %v3944
        %vm4014 = vcmp.eq.f32.partialorder %v4013, 8.507059e+37
        %v4015 = vand.u32 %v3944, 2147483648
        %v4016 = vor.u32 1.1754944e-38, %v4015
        %v4017 = vsel %vm4014, %v4016, %v4012
        %v4018 = vrcp.pop %v3945
        %v4019 = vmul.f32 %v3945, %v4018
        %v4020 = vsub.f32 1.0, %v4019
        %v4021 = vmul.f32 %v4018, %v4020
        %v4022 = vadd.f32 %v4018, %v4021
        %vm4023 = vweird.f32 %v3945
        %vm4024 = vweird.f32 %v4018
        %vm4025 = vmor %vm4023, %vm4024
        %v4026 = vsel %vm4025, %v4018, %v4022
        %v4027 = vand.u32 2147483647, %v3945
        %vm4028 = vcmp.eq.f32.partialorder %v4027, 8.507059e+37
        %v4029 = vand.u32 %v3945, 2147483648
        %v4030 = vor.u32 1.1754944e-38, %v4029
        %v4031 = vsel %vm4028, %v4030, %v4026
        %v4032 = vrcp.pop %v3946
        %v4033 = vmul.f32 %v3946, %v4032
        %v4034 = vsub.f32 1.0, %v4033
        %v4035 = vmul.f32 %v4032, %v4034
        %v4036 = vadd.f32 %v4032, %v4035
        %vm4037 = vweird.f32 %v3946
        %vm4038 = vweird.f32 %v4032
        %vm4039 = vmor %vm4037, %vm4038
        %v4040 = vsel %vm4039, %v4032, %v4036
        %v4041 = vand.u32 2147483647, %v3946
        %vm4042 = vcmp.eq.f32.partialorder %v4041, 8.507059e+37
        %v4043 = vand.u32 %v3946, 2147483648
        %v4044 = vor.u32 1.1754944e-38, %v4043
        %v4045 = vsel %vm4042, %v4044, %v4040
        %v4046 = vrcp.pop %v3947
        %v4047 = vmul.f32 %v3947, %v4046
        %v4048 = vsub.f32 1.0, %v4047
        %v4049 = vmul.f32 %v4046, %v4048
        %v4050 = vadd.f32 %v4046, %v4049
        %vm4051 = vweird.f32 %v3947
        %vm4052 = vweird.f32 %v4046
        %vm4053 = vmor %vm4051, %vm4052
        %v4054 = vsel %vm4053, %v4046, %v4050
        %v4055 = vand.u32 2147483647, %v3947
        %vm4056 = vcmp.eq.f32.partialorder %v4055, 8.507059e+37
        %v4057 = vand.u32 %v3947, 2147483648
        %v4058 = vor.u32 1.1754944e-38, %v4057
        %v4059 = vsel %vm4056, %v4058, %v4054
        %v4060 = vmul.f32 %v3908, %v3961
        %v4061 = vmul.f32 %v3909, %v3975
        %v4062 = vmul.f32 %v3910, %v3989
        %v4063 = vmul.f32 %v3911, %v4003
        %v4064 = vmul.f32 %v3912, %v4017
        %v4065 = vmul.f32 %v3913, %v4031
        %v4066 = vmul.f32 %v3914, %v4045
        %v4067 = vmul.f32 %v3915, %v4059
        %v4068 = vld [vmem:[%s674] sm:$0x1]
        %v4069 = vld [vmem:[%s16] sm:$0xff]
        %v4070 = vld [vmem:[%s16 + $0x8] sm:$0xff]
        %v4071 = vld [vmem:[%s16 + $0x10] sm:$0xff]
        %v4072 = vld [vmem:[%s16 + $0x18] sm:$0xff]
        %v4073 = vld [vmem:[%s16 + $0x20] sm:$0xff]
        %v4074 = vld [vmem:[%s16 + $0x28] sm:$0xff]
        %v4075 = vld [vmem:[%s16 + $0x30] sm:$0xff]
        %v4076 = vld [vmem:[%s16 + $0x38] sm:$0xff]
        %v4077 = vld [vmem:[%s16 + $0x40] sm:$0xff]
        %v4078 = vld [vmem:[%s16 + $0x48] sm:$0xff]
        %v4079 = vld [vmem:[%s16 + $0x50] sm:$0xff]
        %v4080 = vld [vmem:[%s16 + $0x58] sm:$0xff]
        %v4081 = vld [vmem:[%s16 + $0x60] sm:$0xff]
        %v4082 = vld [vmem:[%s16 + $0x68] sm:$0xff]
        %v4083 = vld [vmem:[%s16 + $0x70] sm:$0xff]
        %v4084 = vld [vmem:[%s16 + $0x78] sm:$0xff]
        %v4085 = vld [vmem:[%s16 + $0x80] sm:$0xff]
        %v4086 = vld [vmem:[%s16 + $0x88] sm:$0xff]
        %v4087 = vld [vmem:[%s16 + $0x90] sm:$0xff]
        %v4088 = vld [vmem:[%s16 + $0x98] sm:$0xff]
        %v4089 = vld [vmem:[%s16 + $0xa0] sm:$0xff]
        %v4090 = vld [vmem:[%s16 + $0xa8] sm:$0xff]
        %v4091 = vld [vmem:[%s16 + $0xb0] sm:$0xff]
        %v4092 = vld [vmem:[%s16 + $0xb8] sm:$0xff]
        %v4093 = vld [vmem:[%s16 + $0xc0] sm:$0xff]
        %v4094 = vld [vmem:[%s16 + $0xc8] sm:$0xff]
        %v4095 = vld [vmem:[%s16 + $0xd0] sm:$0xff]
        %v4096 = vld [vmem:[%s16 + $0xd8] sm:$0xff]
        %v4097 = vld [vmem:[%s16 + $0xe0] sm:$0xff]
        %v4098 = vld [vmem:[%s16 + $0xe8] sm:$0xff]
        %v4099 = vld [vmem:[%s16 + $0xf0] sm:$0xff]
        %v4100 = vld [vmem:[%s16 + $0xf8] sm:$0xff]
        %v4101 = vadd.f32 %v4060, %v4062
        %v4102 = vadd.f32 %v4101, %v4064
        %v4103 = vadd.f32 %v4102, %v4066
        %v4104 = vrot.slane %v4103, 4
        %v4105 = vadd.f32 %v4103, %v4104
        %v4106 = vrot.slane %v4105, 2
        %v4107 = vadd.f32 %v4105, %v4106
        %v4108 = vrot.slane %v4107, 1
        %v4109 = vadd.f32 %v4107, %v4108
        %v4110 = vadd.f32 %v4061, %v4063
        %v4111 = vadd.f32 %v4110, %v4065
        %v4112 = vadd.f32 %v4111, %v4067
        %v4113 = vrot.slane %v4112, 4
        %v4114 = vadd.f32 %v4112, %v4113
        %v4115 = vrot.slane %v4114, 2
        %v4116 = vadd.f32 %v4114, %v4115
        %v4117 = vrot.slane %v4116, 1
        %v4118 = vadd.f32 %v4116, %v4117
        %v4119 = vmul.f32 %v4060, %v4060
        %v4120 = vmul.f32 %v4061, %v4061
        %v4121 = vmul.f32 %v4062, %v4062
        %v4122 = vmul.f32 %v4063, %v4063
        %v4123 = vmul.f32 %v4064, %v4064
        %v4124 = vmul.f32 %v4065, %v4065
        %v4125 = vmul.f32 %v4066, %v4066
        %v4126 = vmul.f32 %v4067, %v4067
        %v4127 = vadd.f32 %v4119, %v4121
        %v4128 = vadd.f32 %v4127, %v4123
        %v4129 = vadd.f32 %v4128, %v4125
        %v4130 = vrot.slane %v4129, 4
        %v4131 = vadd.f32 %v4129, %v4130
        %v4132 = vrot.slane %v4131, 2
        %v4133 = vadd.f32 %v4131, %v4132
        %v4134 = vrot.slane %v4133, 1
        %v4135 = vadd.f32 %v4133, %v4134
        %v4136 = vadd.f32 %v4120, %v4122
        %v4137 = vadd.f32 %v4136, %v4124
        %v4138 = vadd.f32 %v4137, %v4126
        %v4139 = vrot.slane %v4138, 4
        %v4140 = vadd.f32 %v4138, %v4139
        %v4141 = vrot.slane %v4140, 2
        %v4142 = vadd.f32 %v4140, %v4141
        %v4143 = vrot.slane %v4142, 1
        %v4144 = vadd.f32 %v4142, %v4143
        %v4145 = vsel %vm831, %v4109, %v4135
        %v4146 = vsel %vm831, %v4118, %v4144
        %4147 = vmatpush.msra.mxu0 %v4084
        %4148 = vmatpush.msra.mxu0 %v4083
        %4149 = vmatpush.msra.mxu0 %v4082
        %4150 = vmatpush.msra.mxu0 %v4081
        %4151 = vmatpush.msra.mxu0 %v4080
        %4152 = vmatpush.msra.mxu0 %v4079
        %4153 = vmatpush.msra.mxu0 %v4078
        %4154 = vmatpush.msra.mxu0 %v4077
        %4155 = vmatpush.msra.mxu0 %v4076
        %4156 = vmatpush.msra.mxu0 %v4075
        %4157 = vmatpush.msra.mxu0 %v4074
        %4158 = vmatpush.msra.mxu0 %v4073
        %4159 = vmatpush.msra.mxu0 %v4072
        %4160 = vmatpush.msra.mxu0 %v4071
        %4161 = vmatpush.msra.mxu0 %v4070
        %4162 = vmatpush.msra.mxu0 %v4069
        %4163 = vmatmul.f32.gmra.mxu0 %v4145
        %v4164 = vpop.f32.mrf.mxu0
        %v4165 = vadd.f32 0.0, %v4164
        %4166 = vdwg.mxu0
        %4167 = vmatpush.msra.mxu0 %v4100
        %4168 = vmatpush.msra.mxu0 %v4099
        %4169 = vmatpush.msra.mxu0 %v4098
        %4170 = vmatpush.msra.mxu0 %v4097
        %4171 = vmatpush.msra.mxu0 %v4096
        %4172 = vmatpush.msra.mxu0 %v4095
        %4173 = vmatpush.msra.mxu0 %v4094
        %4174 = vmatpush.msra.mxu0 %v4093
        %4175 = vmatpush.msra.mxu0 %v4092
        %4176 = vmatpush.msra.mxu0 %v4091
        %4177 = vmatpush.msra.mxu0 %v4090
        %4178 = vmatpush.msra.mxu0 %v4089
        %4179 = vmatpush.msra.mxu0 %v4088
        %4180 = vmatpush.msra.mxu0 %v4087
        %4181 = vmatpush.msra.mxu0 %v4086
        %4182 = vmatpush.msra.mxu0 %v4085
        %4183 = vmatmul.f32.gmra.mxu0 %v4146
        %v4184 = vpop.f32.mrf.mxu0
        %v4185 = vadd.f32 %v4165, %v4184
        %4186 = vdwg.mxu0
        %v4187 = vmul.f32 %v4185, 0.001953125
        %v4188 = vmul.f32 %v4187, %v4187
        %v4190 = vrot.slane %v4188, 7
        %v4192 = vsub.f32 %v4187, %v4190
        %v4193 = vmax.f32 %v4192, 0.0
        %v4194 = vadd.f32 %v4193, 1e-05
        %v4195 = vrsqrt.pop %v4194
        %v4196 = vmul.f32 %v4195, %v4194
        %v4197 = vmul.f32 %v4196, %v4195
        %v4198 = vmul.f32 0.5, %v4197
        %v4199 = vsub.f32 1.5, %v4198
        %v4200 = vmul.f32 %v4195, %v4199
        %vm4201 = vweird.f32 %v4194
        %vm4202 = vweird.f32 %v4195
        %vm4203 = vmor %vm4201, %vm4202
        %v4204 = vsel %vm4203, %v4195, %v4200
        %4206 = vst [vmem:[#allocation1] sm:$0xff] %v4204
        %s4207 = scalar_lea.vmem [#allocation1], 1
        %v4208 = vld [vmem:[%s4207] ss:$9 sm:$0xff]
        %v4210 = vmul.f32 %v4068, %v4208
        %v4211 = vmul.f32 %v4187, %v4210
        %v4213 = vrot.slane %v4211, 7
        %v4215 = vsel %vm831, %v4210, %v4213
        %4217 = vrot.lane.b32.xlu0 %v4215, 16
        %v4218 = vpop.permute.xlu0 %4217
        %4220 = vrot.lane.b32.xlu0 %v4215, 32
        %v4221 = vpop.permute.xlu0 %4220
        %4223 = vrot.lane.b32.xlu0 %v4215, 48
        %v4224 = vpop.permute.xlu0 %4223
        %4226 = vrot.lane.b32.xlu0 %v4215, 64
        %v4227 = vpop.permute.xlu0 %4226
        %4229 = vrot.lane.b32.xlu0 %v4215, 80
        %v4230 = vpop.permute.xlu0 %4229
        %4232 = vrot.lane.b32.xlu0 %v4215, 96
        %v4233 = vpop.permute.xlu0 %4232
        %4235 = vrot.lane.b32.xlu0 %v4215, 112
        %v4236 = vpop.permute.xlu0 %4235
        %v4238 = vsel %vm1707, %v4215, %v4218
        %v4239 = vsel %vm1711, %v4238, %v4221
        %v4240 = vsel %vm1715, %v4239, %v4224
        %v4241 = vsel %vm1719, %v4240, %v4227
        %v4242 = vsel %vm1723, %v4241, %v4230
        %v4243 = vsel %vm1727, %v4242, %v4233
        %v4244 = vsel %vm1731, %v4243, %v4236
        %v4245 = vperm.slane %v4244, 0
        %v4246 = vmul.f32 %v4060, %v4245
        %v4247 = vmul.f32 %v4061, %v4245
        %v4248 = vmul.f32 %v4062, %v4245
        %v4249 = vmul.f32 %v4063, %v4245
        %v4250 = vmul.f32 %v4064, %v4245
        %v4251 = vmul.f32 %v4065, %v4245
        %v4252 = vmul.f32 %v4066, %v4245
        %v4253 = vmul.f32 %v4067, %v4245
        %v4254 = vperm.slane %v4244, 1
        %v4255 = vsub.f32 %v4246, %v4254
        %v4256 = vsub.f32 %v4247, %v4254
        %v4257 = vsub.f32 %v4248, %v4254
        %v4258 = vsub.f32 %v4249, %v4254
        %v4259 = vsub.f32 %v4250, %v4254
        %v4260 = vsub.f32 %v4251, %v4254
        %v4261 = vsub.f32 %v4252, %v4254
        %v4262 = vsub.f32 %v4253, %v4254
        %v4263 = vadd.f32 %v4255, %v719
        %v4264 = vadd.f32 %v4256, %v720
        %v4265 = vadd.f32 %v4257, %v721
        %v4266 = vadd.f32 %v4258, %v722
        %v4267 = vadd.f32 %v4259, %v723
        %v4268 = vadd.f32 %v4260, %v724
        %v4269 = vadd.f32 %v4261, %v725
        %v4270 = vadd.f32 %v4262, %v726
        %4271 = vst [vmem:[%s668] sm:$0xff] %v4263
        %4272 = vst [vmem:[%s668 + $0x8] sm:$0xff] %v4264
        %4273 = vst [vmem:[%s668 + $0x10] sm:$0xff] %v4265
        %4274 = vst [vmem:[%s668 + $0x18] sm:$0xff] %v4266
        %4275 = vst [vmem:[%s668 + $0x20] sm:$0xff] %v4267
        %4276 = vst [vmem:[%s668 + $0x28] sm:$0xff] %v4268
        %4277 = vst [vmem:[%s668 + $0x30] sm:$0xff] %v4269
        %4278 = vst [vmem:[%s668 + $0x38] sm:$0xff] %v4270
        %s4279 = sand.u32 %s418, 1
        %s4280 = scalar_lea.sflag [#allocation9], %s4279
        %s4281 = sand.u32 %s418, 1
        %s4282 = smul.addr %s4281, 64
        %s4283 = scalar_lea.vmem [#allocation18], %s4282
        // Predicated region
        $region117: #{tpu_custom_call.1} parent=87 // pred_check
          %p4284 = pneg %p428
        $region118: #{tpu_custom_call.1} parent=87 // pred_check_branch
          %4286 = sbr.rel (%p4284) target = $region120
        $region119: #{tpu_custom_call.1} parent=87 // pred_region
          %4288 = vsyncadd %s4280, 0
          %s4289 = smul.addr %s38, 8
          %s4290 = smul.addr %s4289, 8
          %s4291 = scalar_lea.hbm %s17, %s4290
          %s4292 = sshll.u32 %s4283, 4
          %s4293 = int_to_ptr.vmem [resolvable:$true] %s4292
          %s4294 = sshll.u32 %s4291, 4
          %s4295 = int_to_ptr.hbm [resolvable:$true] %s4294
          %4300 = dma.vmem_to_hbm [thread:$0]  %s4293, 1024, %s4295, %s4280, 256, 256, 16
        $region120: #{tpu_custom_call.1} parent=87 // pred_fallthru
          _
      $region88: #{tpu_custom_call.1} parent=5 // pred_fallthru
        _
      %p4301 = scmp.le.s32.totalorder 2, %s33
      // Predicated region
      $region121: #{tpu_custom_call.1} parent=5 // pred_check
        %p4302 = pneg %p4301
      $region122: #{tpu_custom_call.1} parent=5 // pred_check_branch
        %4304 = sbr.rel (%p4302) target = $region124
      $region123: #{tpu_custom_call.1} parent=5 // pred_region
        %s4305 = ssub.s32 %s33, 2
        // Predicated region
        $region125: #{tpu_custom_call.1} parent=123 // pred_check
          %p4306 = pneg %p434
        $region126: #{tpu_custom_call.1} parent=123 // pred_check_branch
          %4308 = sbr.rel (%p4306) target = $region128
        $region127: #{tpu_custom_call.1} parent=123 // pred_region
          %s4309 = sand.u32 %s419, 1
          %s4310 = scalar_lea.sflag [#allocation9], %s4309
          %s4311 = sand.u32 %s419, 1
          %s4312 = smul.addr %s4311, 64
          %s4313 = scalar_lea.vmem [#allocation18], %s4312
          %4315 = dma.done %s4310, 1024
        $region128: #{tpu_custom_call.1} parent=123 // pred_fallthru
          _
      $region124: #{tpu_custom_call.1} parent=5 // pred_fallthru
        _
    $region6: #{tpu_custom_call.1} parent=1 // loop_footer
      %s37 = sadd.s32 1, %s33
    $region7: #{tpu_custom_call.1} parent=1 // loop_footer_branch
      %32 = sbr.rel target = $region3
    $region8: #{tpu_custom_call.1} parent=1 // loop_exit
      _
    %4316 = vsyncpa [#allocation8], 1
    %s4317 = scalar_lea.sflag [#allocation8], 1
    %4318 = vsyncpa %s4317, 1
    %4319 = vsyncpa [#allocation11], 1
    %4320 = vsyncpa [#allocation14], 1
    %4321 = vsyncpa [#allocation17], 1
    %4322 = vsyncpa [#allocation9], 1
    %s4323 = scalar_lea.sflag [#allocation9], 1
    %4324 = vsyncpa %s4323, 1

</llo_original>
